<compile_context>
chip_gen: v7x
topology: tpu7x:2x2x1
jax: 0.10.0
libtpu: 0.0.40
codegen_flags: <defaults>
</compile_context>

<pallas_src>
import math
import jax
import jax.numpy as jnp
from jax.experimental import pallas as pl
from jax.experimental.pallas import tpu as pltpu

# ----------------------------- small ViT config ------------------------------
IMAGE = 16          # image height / width (module uses 224; scaled down)
PATCH = 8           # patch size (vit_b_16 analogue)
CHANNELS = 3        # input channels
HIDDEN = 32         # hidden dim
HEADS = 4           # attention heads
HEAD_DIM = HIDDEN // HEADS
MLP = 64            # MLP hidden dim
LAYERS = 2          # encoder layers
NUM_CLASSES = 16    # classifier head output
EPS = 1e-6          # torchvision ViT LayerNorm eps
SEQ = (IMAGE // PATCH) ** 2 + 1   # patches + class token (= 5)
CPP = CHANNELS * PATCH * PATCH    # unfolded patch length (= 192)

QKVP = 128          # fused q|k|v output columns: 3*HIDDEN=96 padded to one lane group
CP = 128            # classifier logits padded to a lane-dense 128-wide store


# --------------------------------- kernel ------------------------------------
def vit_kernel(patches_ref, add_ref, convw_ref,
               ln1w_ref, ln1b_ref, wqkv_ref, bqkv_ref, wo_ref, bo_ref,
               ln2w_ref, ln2b_ref, fc1w_ref, fc1b_ref, fc2w_ref, fc2b_ref,
               lnfw_ref, lnfb_ref, headw_ref, headb_ref,
               out_ref):
    bf16 = jnp.bfloat16
    f32 = jnp.float32

    def layer_norm(z, w, b):
        # centered two-pass variance over the true HIDDEN-wide extent
        mu = jnp.mean(z, axis=-1, keepdims=True)
        zc = z - mu
        var = jnp.mean(zc * zc, axis=-1, keepdims=True)
        return zc * jax.lax.rsqrt(var + EPS) * w + b

    # --- fused patch-embed + class token + positional embedding ---
    # row 0 of `patches` is zero (class-token slot); add_ref carries
    # class_token/conv_bias + pos_embedding per row.
    x = jnp.dot(patches_ref[...], convw_ref[...],
                preferred_element_type=f32) + add_ref[...]          # (SEQ, HIDDEN) f32

    for l in range(LAYERS):
        # ----- LayerNorm 1 + fused QKV projection (one lane-dense matmul) -----
        h = layer_norm(x, ln1w_ref[l], ln1b_ref[l]).astype(bf16)    # (SEQ, HIDDEN)
        qkv = (jnp.dot(h, wqkv_ref[l], preferred_element_type=f32)
               + bqkv_ref[l]).astype(bf16)                          # (SEQ, QKVP)

        def heads_of(base, _qkv=qkv):
            # slice one head's 8 lanes at a time and stack heads on a leading axis
            return jnp.stack(
                [_qkv[:, base + i * HEAD_DIM: base + (i + 1) * HEAD_DIM]
                 for i in range(HEADS)], axis=0)                    # (HEADS, SEQ, HEAD_DIM)

        q = heads_of(0)               # 1/sqrt(head_dim) folded into wqkv / bqkv
        k = heads_of(HIDDEN)
        v = heads_of(2 * HIDDEN)

        # per-head attention (no cross-batch mask needed: one image per program)
        s = jnp.einsum('hqe,hke->hqk', q, k, preferred_element_type=f32)
        s = s - jnp.max(s, axis=-1, keepdims=True)
        p = jnp.exp(s)
        p = p * pl.reciprocal(jnp.sum(p, axis=-1, keepdims=True), approx=True)

        ctx = jnp.einsum('hqk,hke->hqe', p.astype(bf16), v,
                         preferred_element_type=f32)                # (HEADS, SEQ, HEAD_DIM)
        # concatenate heads along lanes -> single (32,32) output projection
        ctx = jnp.concatenate([ctx[i] for i in range(HEADS)],
                              axis=-1).astype(bf16)                 # (SEQ, HIDDEN)
        x = x + jnp.dot(ctx, wo_ref[l], preferred_element_type=f32) + bo_ref[l]

        # ----- LayerNorm 2 + MLP (Linear -> GELU -> Linear) -----
        h2 = layer_norm(x, ln2w_ref[l], ln2b_ref[l]).astype(bf16)
        h2 = jnp.dot(h2, fc1w_ref[l], preferred_element_type=f32) + fc1b_ref[l]
        # TODO(synk): tanh-GELU (review-suggested, EUP path); torchvision's
        # nn.GELU is the exact erf form — deviation is ~1e-3 absolute.
        h2 = jax.nn.gelu(h2, approximate=True).astype(bf16)
        h2 = jnp.dot(h2, fc2w_ref[l], preferred_element_type=f32) + fc2b_ref[l]
        x = x + h2

    # ----- final LayerNorm + classifier head on the class token (row 0) -----
    cls = x[0:1, :]                                                 # contiguous slice
    hc = layer_norm(cls, lnfw_ref[...], lnfb_ref[...]).astype(bf16)
    out_ref[...] = (jnp.dot(hc, headw_ref[...], preferred_element_type=f32)
                    + headb_ref[...])                               # (1, CP)


# ------------------------------ pallas wrapper --------------------------------
def _spec_full(shape):
    """Whole array resident in VMEM, same block at every grid step."""
    return pl.BlockSpec(tuple(shape), lambda b, _n=len(shape): (0,) * _n)


def vit_forward(kp, x):
    B, C, H, W = x.shape
    p = PATCH
    nh, nw = H // p, W // p

    # conv_proj (kernel==stride==p) == unfold patches; row 0 = class-token slot
    patches = (x.reshape(B, C, nh, p, nw, p)
                 .transpose(0, 2, 4, 1, 3, 5)
                 .reshape(B, nh * nw, CPP))
    patches = jnp.concatenate(
        [jnp.zeros((B, 1, CPP), patches.dtype), patches], axis=1)   # (B, SEQ, CPP)
    patches = patches.astype(jnp.bfloat16)

    weight_args = (kp['add_seq'], kp['conv_w'],
                   kp['ln1_w'], kp['ln1_b'], kp['wqkv'], kp['bqkv'],
                   kp['wo'], kp['bo'],
                   kp['ln2_w'], kp['ln2_b'], kp['fc1_w'], kp['fc1_b'],
                   kp['fc2_w'], kp['fc2_b'],
                   kp['lnf_w'], kp['lnf_b'], kp['head_w'], kp['head_b'])

    in_specs = ([pl.BlockSpec((None, SEQ, CPP), lambda b: (b, 0, 0))]
                + [_spec_full(a.shape) for a in weight_args])

    out = pl.pallas_call(
        vit_kernel,
        grid=(B,),
        out_shape=jax.ShapeDtypeStruct((B, 1, CP), jnp.float32),
        in_specs=in_specs,
        out_specs=pl.BlockSpec((None, 1, CP), lambda b: (b, 0, 0)),
        compiler_params=pltpu.CompilerParams(
            dimension_semantics=("parallel",),
            vmem_limit_bytes=32 * 1024 * 1024),
    )(patches, *weight_args)
    return out.reshape(B, CP)[:, :NUM_CLASSES]


# -------------------------------- parameters ----------------------------------
def make_params(key):
    """Torch-layout parameters (same structure as the PyTorch module)."""
    keys = iter(jax.random.split(key, 64))

    def nrm(shape, scale=0.02):
        return scale * jax.random.normal(next(keys), shape, jnp.float32)

    params = {
        "conv_w": nrm((HIDDEN, CHANNELS, PATCH, PATCH)),   # torch conv layout
        "conv_b": nrm((HIDDEN,)),
        "class_token": nrm((1, 1, HIDDEN)),
        "pos_embedding": nrm((1, SEQ, HIDDEN)),
        "blocks": [],
        "ln_w": jnp.ones((HIDDEN,), jnp.float32),
        "ln_b": jnp.zeros((HIDDEN,), jnp.float32),
        "head_w": nrm((NUM_CLASSES, HIDDEN)),              # torch Linear layout
        "head_b": jnp.zeros((NUM_CLASSES,), jnp.float32),
    }
    for _ in range(LAYERS):
        params["blocks"].append(dict(
            ln1_w=jnp.ones((HIDDEN,), jnp.float32),
            ln1_b=jnp.zeros((HIDDEN,), jnp.float32),
            qkv_w=nrm((3 * HIDDEN, HIDDEN)),
            qkv_b=nrm((3 * HIDDEN,)),
            out_w=nrm((HIDDEN, HIDDEN)),
            out_b=nrm((HIDDEN,)),
            ln2_w=jnp.ones((HIDDEN,), jnp.float32),
            ln2_b=jnp.zeros((HIDDEN,), jnp.float32),
            fc1_w=nrm((MLP, HIDDEN)),
            fc1_b=nrm((MLP,)),
            fc2_w=nrm((HIDDEN, MLP)),
            fc2_b=nrm((HIDDEN,)),
        ))
    return params


def _prep_block(blk):
    """One-time conversion of a torch-layout encoder block to kernel layouts."""
    D = HIDDEN
    scale = 1.0 / math.sqrt(HEAD_DIM)
    bf16 = jnp.bfloat16

    qkv_w, qkv_b = blk["qkv_w"], blk["qkv_b"]               # (3D, D), (3D,)
    # fused in-projection: columns [ q(head-major) | k | v ], 1/sqrt(E) folded into q
    w = jnp.concatenate([qkv_w[:D].T * scale,
                         qkv_w[D:2 * D].T,
                         qkv_w[2 * D:].T], axis=1)           # (D, 3D)
    wqkv = jnp.zeros((D, QKVP), jnp.float32).at[:, :3 * D].set(w).astype(bf16)
    b = jnp.concatenate([qkv_b[:D] * scale, qkv_b[D:2 * D], qkv_b[2 * D:]])
    bqkv = jnp.zeros((1, QKVP), jnp.float32).at[0, :3 * D].set(b)

    return dict(
        ln1_w=blk["ln1_w"].reshape(1, D),
        ln1_b=blk["ln1_b"].reshape(1, D),
        wqkv=wqkv, bqkv=bqkv,
        wo=blk["out_w"].T.astype(bf16),                      # (D, D): ctx_cat @ out_w.T
        bo=blk["out_b"].reshape(1, D),
        ln2_w=blk["ln2_w"].reshape(1, D),
        ln2_b=blk["ln2_b"].reshape(1, D),
        fc1_w=blk["fc1_w"].T.astype(bf16),                   # (D, MLP)
        fc1_b=blk["fc1_b"].reshape(1, MLP),
        fc2_w=blk["fc2_w"].T.astype(bf16),                   # (MLP, D)
        fc2_b=blk["fc2_b"].reshape(1, D),
    )


def prepare_params(params):
    """Hoisted one-time conversion of all weights to kernel-friendly layouts:
    true-extent contraction dims, bf16 matmul weights, f32 biases/LN params."""
    bf16 = jnp.bfloat16
    kp = {}

    kp["conv_w"] = params["conv_w"].reshape(HIDDEN, CPP).T.astype(bf16)   # (CPP, D)

    # per-sequence additive slab: row 0 = class_token + pos[0];
    # rows 1.. = conv bias + pos[1:]   (class-token slot in `patches` is zero)
    pos = params["pos_embedding"][0]                          # (SEQ, D)
    base = jnp.concatenate(
        [params["class_token"][0],
         jnp.broadcast_to(params["conv_b"], (SEQ - 1, HIDDEN))], axis=0)
    kp["add_seq"] = (pos + base).astype(jnp.float32)          # (SEQ, D)

    blocks = [_prep_block(b) for b in params["blocks"]]
    for name in blocks[0]:
        kp[name] = jnp.stack([blk[name] for blk in blocks])   # leading LAYERS axis

    kp["lnf_w"] = params["ln_w"].reshape(1, HIDDEN)
    kp["lnf_b"] = params["ln_b"].reshape(1, HIDDEN)
    kp["head_w"] = (jnp.zeros((HIDDEN, CP), jnp.float32)
                    .at[:, :NUM_CLASSES].set(params["head_w"].T).astype(bf16))
    kp["head_b"] = (jnp.zeros((1, CP), jnp.float32)
                    .at[0, :NUM_CLASSES].set(params["head_b"]))
    return kp


# ----------------------------------- main --------------------------------------
if __name__ == "__main__":
    key = jax.random.PRNGKey(0)
    pkey, xkey = jax.random.split(key)
    params = make_params(pkey)
    kparams = prepare_params(params)          # one-time kernel-layout weights
    x = jax.random.normal(xkey, (2, CHANNELS, IMAGE, IMAGE), jnp.float32)

    fwd = jax.jit(vit_forward)
    out = jax.block_until_ready(fwd(kparams, x))
    assert out.shape == (2, NUM_CLASSES), out.shape
    assert bool(jnp.all(jnp.isfinite(out)))
    print("KERNEL_OK")
</pallas_src>

<mosaic_0001>
module attributes {stable_mosaic.version = 11 : i64} {
  func.func @vit_kernel(%arg0: i32, %arg1: memref<1x5x192xbf16, #tpu.memory_space<vmem>>, %arg2: memref<5x32xf32, #tpu.memory_space<vmem>>, %arg3: memref<192x32xbf16, #tpu.memory_space<vmem>>, %arg4: memref<2x1x32xf32, #tpu.memory_space<vmem>>, %arg5: memref<2x1x32xf32, #tpu.memory_space<vmem>>, %arg6: memref<2x32x128xbf16, #tpu.memory_space<vmem>>, %arg7: memref<2x1x128xf32, #tpu.memory_space<vmem>>, %arg8: memref<2x32x32xbf16, #tpu.memory_space<vmem>>, %arg9: memref<2x1x32xf32, #tpu.memory_space<vmem>>, %arg10: memref<2x1x32xf32, #tpu.memory_space<vmem>>, %arg11: memref<2x1x32xf32, #tpu.memory_space<vmem>>, %arg12: memref<2x32x64xbf16, #tpu.memory_space<vmem>>, %arg13: memref<2x1x64xf32, #tpu.memory_space<vmem>>, %arg14: memref<2x64x32xbf16, #tpu.memory_space<vmem>>, %arg15: memref<2x1x32xf32, #tpu.memory_space<vmem>>, %arg16: memref<1x32xf32, #tpu.memory_space<vmem>>, %arg17: memref<1x32xf32, #tpu.memory_space<vmem>>, %arg18: memref<32x128xbf16, #tpu.memory_space<vmem>>, %arg19: memref<1x128xf32, #tpu.memory_space<vmem>>, %arg20: memref<1x1x128xf32, #tpu.memory_space<vmem>>) attributes {dimension_semantics = [#tpu.dimension_semantics<parallel>], iteration_bounds = array<i64: 2>, scalar_prefetch = 0 : i64, scratch_operands = 0 : i64, tpu.core_type = #tpu.core_type<tc>, window_params = [{transform_indices = @transform_0, window_bounds = array<i64: 1, 5, 192>}, {pipeline_mode = #tpu.pipeline_mode<synchronous>, transform_indices = @transform_1, window_bounds = array<i64: 5, 32>}, {pipeline_mode = #tpu.pipeline_mode<synchronous>, transform_indices = @transform_2, window_bounds = array<i64: 192, 32>}, {pipeline_mode = #tpu.pipeline_mode<synchronous>, transform_indices = @transform_3, window_bounds = array<i64: 2, 1, 32>}, {pipeline_mode = #tpu.pipeline_mode<synchronous>, transform_indices = @transform_4, window_bounds = array<i64: 2, 1, 32>}, {pipeline_mode = #tpu.pipeline_mode<synchronous>, transform_indices = @transform_5, window_bounds = array<i64: 2, 32, 128>}, {pipeline_mode = #tpu.pipeline_mode<synchronous>, transform_indices = @transform_6, window_bounds = array<i64: 2, 1, 128>}, {pipeline_mode = #tpu.pipeline_mode<synchronous>, transform_indices = @transform_7, window_bounds = array<i64: 2, 32, 32>}, {pipeline_mode = #tpu.pipeline_mode<synchronous>, transform_indices = @transform_8, window_bounds = array<i64: 2, 1, 32>}, {pipeline_mode = #tpu.pipeline_mode<synchronous>, transform_indices = @transform_9, window_bounds = array<i64: 2, 1, 32>}, {pipeline_mode = #tpu.pipeline_mode<synchronous>, transform_indices = @transform_10, window_bounds = array<i64: 2, 1, 32>}, {pipeline_mode = #tpu.pipeline_mode<synchronous>, transform_indices = @transform_11, window_bounds = array<i64: 2, 32, 64>}, {pipeline_mode = #tpu.pipeline_mode<synchronous>, transform_indices = @transform_12, window_bounds = array<i64: 2, 1, 64>}, {pipeline_mode = #tpu.pipeline_mode<synchronous>, transform_indices = @transform_13, window_bounds = array<i64: 2, 64, 32>}, {pipeline_mode = #tpu.pipeline_mode<synchronous>, transform_indices = @transform_14, window_bounds = array<i64: 2, 1, 32>}, {pipeline_mode = #tpu.pipeline_mode<synchronous>, transform_indices = @transform_15, window_bounds = array<i64: 1, 32>}, {pipeline_mode = #tpu.pipeline_mode<synchronous>, transform_indices = @transform_16, window_bounds = array<i64: 1, 32>}, {pipeline_mode = #tpu.pipeline_mode<synchronous>, transform_indices = @transform_17, window_bounds = array<i64: 32, 128>}, {pipeline_mode = #tpu.pipeline_mode<synchronous>, transform_indices = @transform_18, window_bounds = array<i64: 1, 128>}, {transform_indices = @transform_19, window_bounds = array<i64: 1, 1, 128>}]} {
    %c0 = arith.constant 0 : index
    %c0_0 = arith.constant 0 : index
    %c0_1 = arith.constant 0 : index
    %0 = vector.load %arg1[%c0, %c0_0, %c0_1] : memref<1x5x192xbf16, #tpu.memory_space<vmem>>, vector<1x5x192xbf16>
    %1 = vector.shape_cast %0 : vector<1x5x192xbf16> to vector<5x192xbf16>
    %c0_2 = arith.constant 0 : index
    %c0_3 = arith.constant 0 : index
    %2 = vector.load %arg3[%c0_2, %c0_3] : memref<192x32xbf16, #tpu.memory_space<vmem>>, vector<192x32xbf16>
    %cst = arith.constant dense<0.000000e+00> : vector<5x32xf32>
    %3 = tpu.matmul %1, %2, %cst {dimension_numbers = #tpu.dot_dimension_numbers<[1], [0], [0], [1], [0, 0, 1, 1], [], []>} : vector<5x192xbf16>, vector<192x32xbf16>, vector<5x32xf32> -> vector<5x32xf32>
    %c0_4 = arith.constant 0 : index
    %c0_5 = arith.constant 0 : index
    %4 = vector.load %arg2[%c0_4, %c0_5] : memref<5x32xf32, #tpu.memory_space<vmem>>, vector<5x32xf32>
    %5 = arith.addf %3, %4 : vector<5x32xf32>
    %c0_6 = arith.constant 0 : index
    %c0_7 = arith.constant 0 : index
    %c0_8 = arith.constant 0 : index
    %6 = vector.load %arg4[%c0_6, %c0_7, %c0_8] : memref<2x1x32xf32, #tpu.memory_space<vmem>>, vector<1x1x32xf32>
    %7 = vector.shape_cast %6 : vector<1x1x32xf32> to vector<1x32xf32>
    %c0_9 = arith.constant 0 : index
    %c0_10 = arith.constant 0 : index
    %c0_11 = arith.constant 0 : index
    %8 = vector.load %arg5[%c0_9, %c0_10, %c0_11] : memref<2x1x32xf32, #tpu.memory_space<vmem>>, vector<1x1x32xf32>
    %9 = vector.shape_cast %8 : vector<1x1x32xf32> to vector<1x32xf32>
    %cst_12 = arith.constant dense<0.000000e+00> : vector<5xf32>
    %10 = vector.multi_reduction <add>, %5, %cst_12 [1] : vector<5x32xf32> to vector<5xf32>
    %11 = vector.shape_cast %10 : vector<5xf32> to vector<5x1xf32>
    %cst_13 = arith.constant 3.200000e+01 : f32
    %12 = vector.broadcast %cst_13 : f32 to vector<5x1xf32>
    %13 = arith.divf %11, %12 : vector<5x1xf32>
    %14 = vector.broadcast %13 : vector<5x1xf32> to vector<5x32xf32>
    %15 = arith.subf %5, %14 : vector<5x32xf32>
    %16 = arith.mulf %15, %15 : vector<5x32xf32>
    %cst_14 = arith.constant dense<0.000000e+00> : vector<5xf32>
    %17 = vector.multi_reduction <add>, %16, %cst_14 [1] : vector<5x32xf32> to vector<5xf32>
    %18 = vector.shape_cast %17 : vector<5xf32> to vector<5x1xf32>
    %cst_15 = arith.constant 3.200000e+01 : f32
    %19 = vector.broadcast %cst_15 : f32 to vector<5x1xf32>
    %20 = arith.divf %18, %19 : vector<5x1xf32>
    %cst_16 = arith.constant 9.99999997E-7 : f32
    %21 = vector.broadcast %cst_16 : f32 to vector<5x1xf32>
    %22 = arith.addf %20, %21 : vector<5x1xf32>
    %23 = math.rsqrt %22 : vector<5x1xf32>
    %24 = vector.broadcast %23 : vector<5x1xf32> to vector<5x32xf32>
    %25 = arith.mulf %15, %24 : vector<5x32xf32>
    %26 = vector.broadcast %7 : vector<1x32xf32> to vector<5x32xf32>
    %27 = arith.mulf %25, %26 : vector<5x32xf32>
    %28 = vector.broadcast %9 : vector<1x32xf32> to vector<5x32xf32>
    %29 = arith.addf %27, %28 : vector<5x32xf32>
    %30 = arith.truncf %29 : vector<5x32xf32> to vector<5x32xbf16>
    %c0_17 = arith.constant 0 : index
    %c0_18 = arith.constant 0 : index
    %c0_19 = arith.constant 0 : index
    %31 = vector.load %arg6[%c0_17, %c0_18, %c0_19] : memref<2x32x128xbf16, #tpu.memory_space<vmem>>, vector<1x32x128xbf16>
    %32 = vector.shape_cast %31 : vector<1x32x128xbf16> to vector<32x128xbf16>
    %cst_20 = arith.constant dense<0.000000e+00> : vector<5x128xf32>
    %33 = tpu.matmul %30, %32, %cst_20 {dimension_numbers = #tpu.dot_dimension_numbers<[1], [0], [0], [1], [0, 0, 1, 1], [], []>} : vector<5x32xbf16>, vector<32x128xbf16>, vector<5x128xf32> -> vector<5x128xf32>
    %c0_21 = arith.constant 0 : index
    %c0_22 = arith.constant 0 : index
    %c0_23 = arith.constant 0 : index
    %34 = vector.load %arg7[%c0_21, %c0_22, %c0_23] : memref<2x1x128xf32, #tpu.memory_space<vmem>>, vector<1x1x128xf32>
    %35 = vector.shape_cast %34 : vector<1x1x128xf32> to vector<1x128xf32>
    %36 = vector.broadcast %35 : vector<1x128xf32> to vector<5x128xf32>
    %37 = arith.addf %33, %36 : vector<5x128xf32>
    %38 = arith.truncf %37 : vector<5x128xf32> to vector<5x128xbf16>
    %39 = vector.extract_strided_slice %38 {offsets = [0, 0], sizes = [5, 8], strides = [1, 1]} : vector<5x128xbf16> to vector<5x8xbf16>
    %40 = vector.extract_strided_slice %38 {offsets = [0, 8], sizes = [5, 8], strides = [1, 1]} : vector<5x128xbf16> to vector<5x8xbf16>
    %41 = vector.extract_strided_slice %38 {offsets = [0, 16], sizes = [5, 8], strides = [1, 1]} : vector<5x128xbf16> to vector<5x8xbf16>
    %42 = vector.extract_strided_slice %38 {offsets = [0, 24], sizes = [5, 8], strides = [1, 1]} : vector<5x128xbf16> to vector<5x8xbf16>
    %43 = vector.shape_cast %39 : vector<5x8xbf16> to vector<1x5x8xbf16>
    %44 = vector.shape_cast %40 : vector<5x8xbf16> to vector<1x5x8xbf16>
    %45 = vector.shape_cast %41 : vector<5x8xbf16> to vector<1x5x8xbf16>
    %46 = vector.shape_cast %42 : vector<5x8xbf16> to vector<1x5x8xbf16>
    %47 = tpu.concatenate %43, %44, %45, %46 in 0 : vector<1x5x8xbf16>, vector<1x5x8xbf16>, vector<1x5x8xbf16>, vector<1x5x8xbf16> -> vector<4x5x8xbf16>
    %48 = vector.extract_strided_slice %38 {offsets = [0, 32], sizes = [5, 8], strides = [1, 1]} : vector<5x128xbf16> to vector<5x8xbf16>
    %49 = vector.extract_strided_slice %38 {offsets = [0, 40], sizes = [5, 8], strides = [1, 1]} : vector<5x128xbf16> to vector<5x8xbf16>
    %50 = vector.extract_strided_slice %38 {offsets = [0, 48], sizes = [5, 8], strides = [1, 1]} : vector<5x128xbf16> to vector<5x8xbf16>
    %51 = vector.extract_strided_slice %38 {offsets = [0, 56], sizes = [5, 8], strides = [1, 1]} : vector<5x128xbf16> to vector<5x8xbf16>
    %52 = vector.shape_cast %48 : vector<5x8xbf16> to vector<1x5x8xbf16>
    %53 = vector.shape_cast %49 : vector<5x8xbf16> to vector<1x5x8xbf16>
    %54 = vector.shape_cast %50 : vector<5x8xbf16> to vector<1x5x8xbf16>
    %55 = vector.shape_cast %51 : vector<5x8xbf16> to vector<1x5x8xbf16>
    %56 = tpu.concatenate %52, %53, %54, %55 in 0 : vector<1x5x8xbf16>, vector<1x5x8xbf16>, vector<1x5x8xbf16>, vector<1x5x8xbf16> -> vector<4x5x8xbf16>
    %57 = vector.extract_strided_slice %38 {offsets = [0, 64], sizes = [5, 8], strides = [1, 1]} : vector<5x128xbf16> to vector<5x8xbf16>
    %58 = vector.extract_strided_slice %38 {offsets = [0, 72], sizes = [5, 8], strides = [1, 1]} : vector<5x128xbf16> to vector<5x8xbf16>
    %59 = vector.extract_strided_slice %38 {offsets = [0, 80], sizes = [5, 8], strides = [1, 1]} : vector<5x128xbf16> to vector<5x8xbf16>
    %60 = vector.extract_strided_slice %38 {offsets = [0, 88], sizes = [5, 8], strides = [1, 1]} : vector<5x128xbf16> to vector<5x8xbf16>
    %61 = vector.shape_cast %57 : vector<5x8xbf16> to vector<1x5x8xbf16>
    %62 = vector.shape_cast %58 : vector<5x8xbf16> to vector<1x5x8xbf16>
    %63 = vector.shape_cast %59 : vector<5x8xbf16> to vector<1x5x8xbf16>
    %64 = vector.shape_cast %60 : vector<5x8xbf16> to vector<1x5x8xbf16>
    %65 = tpu.concatenate %61, %62, %63, %64 in 0 : vector<1x5x8xbf16>, vector<1x5x8xbf16>, vector<1x5x8xbf16>, vector<1x5x8xbf16> -> vector<4x5x8xbf16>
    "tpu.trace_start"() <{level = 10 : i32, message = "hqe,hke->hqk"}> : () -> ()
    %cst_24 = arith.constant dense<0.000000e+00> : vector<4x5x5xf32>
    %66 = tpu.matmul %47, %56, %cst_24 {dimension_numbers = #tpu.dot_dimension_numbers<[2], [2], [1], [1], [0, 0, 0, 1, 1, 1], [0], [0]>} : vector<4x5x8xbf16>, vector<4x5x8xbf16>, vector<4x5x5xf32> -> vector<4x5x5xf32>
    "tpu.trace_stop"() : () -> ()
    %cst_25 = arith.constant dense<0xFF800000> : vector<4x5xf32>
    %67 = vector.multi_reduction <maximumf>, %66, %cst_25 [2] : vector<4x5x5xf32> to vector<4x5xf32>
    %68 = vector.shape_cast %67 : vector<4x5xf32> to vector<4x5x1xf32>
    %69 = vector.broadcast %68 : vector<4x5x1xf32> to vector<4x5x5xf32>
    %70 = arith.subf %66, %69 : vector<4x5x5xf32>
    %71 = math.exp %70 : vector<4x5x5xf32>
    %cst_26 = arith.constant dense<0.000000e+00> : vector<4x5xf32>
    %72 = vector.multi_reduction <add>, %71, %cst_26 [2] : vector<4x5x5xf32> to vector<4x5xf32>
    %73 = vector.shape_cast %72 : vector<4x5xf32> to vector<4x5x1xf32>
    %74 = tpu.reciprocal %73 {approx = true} : vector<4x5x1xf32> -> vector<4x5x1xf32>
    %75 = vector.broadcast %74 : vector<4x5x1xf32> to vector<4x5x5xf32>
    %76 = arith.mulf %71, %75 : vector<4x5x5xf32>
    %77 = arith.truncf %76 : vector<4x5x5xf32> to vector<4x5x5xbf16>
    "tpu.trace_start"() <{level = 10 : i32, message = "hqk,hke->hqe"}> : () -> ()
    %cst_27 = arith.constant dense<0.000000e+00> : vector<4x5x8xf32>
    %78 = tpu.matmul %77, %65, %cst_27 {dimension_numbers = #tpu.dot_dimension_numbers<[2], [1], [1], [2], [0, 0, 0, 1, 1, 2], [0], [0]>} : vector<4x5x5xbf16>, vector<4x5x8xbf16>, vector<4x5x8xf32> -> vector<4x5x8xf32>
    "tpu.trace_stop"() : () -> ()
    %79 = vector.extract_strided_slice %78 {offsets = [0, 0, 0], sizes = [1, 5, 8], strides = [1, 1, 1]} : vector<4x5x8xf32> to vector<1x5x8xf32>
    %80 = vector.shape_cast %79 : vector<1x5x8xf32> to vector<5x8xf32>
    %81 = vector.extract_strided_slice %78 {offsets = [1, 0, 0], sizes = [1, 5, 8], strides = [1, 1, 1]} : vector<4x5x8xf32> to vector<1x5x8xf32>
    %82 = vector.shape_cast %81 : vector<1x5x8xf32> to vector<5x8xf32>
    %83 = vector.extract_strided_slice %78 {offsets = [2, 0, 0], sizes = [1, 5, 8], strides = [1, 1, 1]} : vector<4x5x8xf32> to vector<1x5x8xf32>
    %84 = vector.shape_cast %83 : vector<1x5x8xf32> to vector<5x8xf32>
    %85 = vector.extract_strided_slice %78 {offsets = [3, 0, 0], sizes = [1, 5, 8], strides = [1, 1, 1]} : vector<4x5x8xf32> to vector<1x5x8xf32>
    %86 = vector.shape_cast %85 : vector<1x5x8xf32> to vector<5x8xf32>
    %87 = tpu.concatenate %80, %82, %84, %86 in 1 : vector<5x8xf32>, vector<5x8xf32>, vector<5x8xf32>, vector<5x8xf32> -> vector<5x32xf32>
    %88 = arith.truncf %87 : vector<5x32xf32> to vector<5x32xbf16>
    %c0_28 = arith.constant 0 : index
    %c0_29 = arith.constant 0 : index
    %c0_30 = arith.constant 0 : index
    %89 = vector.load %arg8[%c0_28, %c0_29, %c0_30] : memref<2x32x32xbf16, #tpu.memory_space<vmem>>, vector<1x32x32xbf16>
    %90 = vector.shape_cast %89 : vector<1x32x32xbf16> to vector<32x32xbf16>
    %cst_31 = arith.constant dense<0.000000e+00> : vector<5x32xf32>
    %91 = tpu.matmul %88, %90, %cst_31 {dimension_numbers = #tpu.dot_dimension_numbers<[1], [0], [0], [1], [0, 0, 1, 1], [], []>} : vector<5x32xbf16>, vector<32x32xbf16>, vector<5x32xf32> -> vector<5x32xf32>
    %92 = arith.addf %5, %91 : vector<5x32xf32>
    %c0_32 = arith.constant 0 : index
    %c0_33 = arith.constant 0 : index
    %c0_34 = arith.constant 0 : index
    %93 = vector.load %arg9[%c0_32, %c0_33, %c0_34] : memref<2x1x32xf32, #tpu.memory_space<vmem>>, vector<1x1x32xf32>
    %94 = vector.shape_cast %93 : vector<1x1x32xf32> to vector<1x32xf32>
    %95 = vector.broadcast %94 : vector<1x32xf32> to vector<5x32xf32>
    %96 = arith.addf %92, %95 : vector<5x32xf32>
    %c0_35 = arith.constant 0 : index
    %c0_36 = arith.constant 0 : index
    %c0_37 = arith.constant 0 : index
    %97 = vector.load %arg10[%c0_35, %c0_36, %c0_37] : memref<2x1x32xf32, #tpu.memory_space<vmem>>, vector<1x1x32xf32>
    %98 = vector.shape_cast %97 : vector<1x1x32xf32> to vector<1x32xf32>
    %c0_38 = arith.constant 0 : index
    %c0_39 = arith.constant 0 : index
    %c0_40 = arith.constant 0 : index
    %99 = vector.load %arg11[%c0_38, %c0_39, %c0_40] : memref<2x1x32xf32, #tpu.memory_space<vmem>>, vector<1x1x32xf32>
    %100 = vector.shape_cast %99 : vector<1x1x32xf32> to vector<1x32xf32>
    %cst_41 = arith.constant dense<0.000000e+00> : vector<5xf32>
    %101 = vector.multi_reduction <add>, %96, %cst_41 [1] : vector<5x32xf32> to vector<5xf32>
    %102 = vector.shape_cast %101 : vector<5xf32> to vector<5x1xf32>
    %cst_42 = arith.constant 3.200000e+01 : f32
    %103 = vector.broadcast %cst_42 : f32 to vector<5x1xf32>
    %104 = arith.divf %102, %103 : vector<5x1xf32>
    %105 = vector.broadcast %104 : vector<5x1xf32> to vector<5x32xf32>
    %106 = arith.subf %96, %105 : vector<5x32xf32>
    %107 = arith.mulf %106, %106 : vector<5x32xf32>
    %cst_43 = arith.constant dense<0.000000e+00> : vector<5xf32>
    %108 = vector.multi_reduction <add>, %107, %cst_43 [1] : vector<5x32xf32> to vector<5xf32>
    %109 = vector.shape_cast %108 : vector<5xf32> to vector<5x1xf32>
    %cst_44 = arith.constant 3.200000e+01 : f32
    %110 = vector.broadcast %cst_44 : f32 to vector<5x1xf32>
    %111 = arith.divf %109, %110 : vector<5x1xf32>
    %cst_45 = arith.constant 9.99999997E-7 : f32
    %112 = vector.broadcast %cst_45 : f32 to vector<5x1xf32>
    %113 = arith.addf %111, %112 : vector<5x1xf32>
    %114 = math.rsqrt %113 : vector<5x1xf32>
    %115 = vector.broadcast %114 : vector<5x1xf32> to vector<5x32xf32>
    %116 = arith.mulf %106, %115 : vector<5x32xf32>
    %117 = vector.broadcast %98 : vector<1x32xf32> to vector<5x32xf32>
    %118 = arith.mulf %116, %117 : vector<5x32xf32>
    %119 = vector.broadcast %100 : vector<1x32xf32> to vector<5x32xf32>
    %120 = arith.addf %118, %119 : vector<5x32xf32>
    %121 = arith.truncf %120 : vector<5x32xf32> to vector<5x32xbf16>
    %c0_46 = arith.constant 0 : index
    %c0_47 = arith.constant 0 : index
    %c0_48 = arith.constant 0 : index
    %122 = vector.load %arg12[%c0_46, %c0_47, %c0_48] : memref<2x32x64xbf16, #tpu.memory_space<vmem>>, vector<1x32x64xbf16>
    %123 = vector.shape_cast %122 : vector<1x32x64xbf16> to vector<32x64xbf16>
    %cst_49 = arith.constant dense<0.000000e+00> : vector<5x64xf32>
    %124 = tpu.matmul %121, %123, %cst_49 {dimension_numbers = #tpu.dot_dimension_numbers<[1], [0], [0], [1], [0, 0, 1, 1], [], []>} : vector<5x32xbf16>, vector<32x64xbf16>, vector<5x64xf32> -> vector<5x64xf32>
    %c0_50 = arith.constant 0 : index
    %c0_51 = arith.constant 0 : index
    %c0_52 = arith.constant 0 : index
    %125 = vector.load %arg13[%c0_50, %c0_51, %c0_52] : memref<2x1x64xf32, #tpu.memory_space<vmem>>, vector<1x1x64xf32>
    %126 = vector.shape_cast %125 : vector<1x1x64xf32> to vector<1x64xf32>
    %127 = vector.broadcast %126 : vector<1x64xf32> to vector<5x64xf32>
    %128 = arith.addf %124, %127 : vector<5x64xf32>
    %129 = arith.mulf %128, %128 : vector<5x64xf32>
    %130 = arith.mulf %128, %129 : vector<5x64xf32>
    %cst_53 = arith.constant 4.471500e-02 : f32
    %131 = vector.broadcast %cst_53 : f32 to vector<5x64xf32>
    %132 = arith.mulf %131, %130 : vector<5x64xf32>
    %133 = arith.addf %128, %132 : vector<5x64xf32>
    %cst_54 = arith.constant 0.797884583 : f32
    %134 = vector.broadcast %cst_54 : f32 to vector<5x64xf32>
    %135 = arith.mulf %134, %133 : vector<5x64xf32>
    %136 = math.tanh %135 : vector<5x64xf32>
    %cst_55 = arith.constant 1.000000e+00 : f32
    %137 = vector.broadcast %cst_55 : f32 to vector<5x64xf32>
    %138 = arith.addf %137, %136 : vector<5x64xf32>
    %cst_56 = arith.constant 5.000000e-01 : f32
    %139 = vector.broadcast %cst_56 : f32 to vector<5x64xf32>
    %140 = arith.mulf %139, %138 : vector<5x64xf32>
    %141 = arith.mulf %128, %140 : vector<5x64xf32>
    %142 = arith.truncf %141 : vector<5x64xf32> to vector<5x64xbf16>
    %c0_57 = arith.constant 0 : index
    %c0_58 = arith.constant 0 : index
    %c0_59 = arith.constant 0 : index
    %143 = vector.load %arg14[%c0_57, %c0_58, %c0_59] : memref<2x64x32xbf16, #tpu.memory_space<vmem>>, vector<1x64x32xbf16>
    %144 = vector.shape_cast %143 : vector<1x64x32xbf16> to vector<64x32xbf16>
    %cst_60 = arith.constant dense<0.000000e+00> : vector<5x32xf32>
    %145 = tpu.matmul %142, %144, %cst_60 {dimension_numbers = #tpu.dot_dimension_numbers<[1], [0], [0], [1], [0, 0, 1, 1], [], []>} : vector<5x64xbf16>, vector<64x32xbf16>, vector<5x32xf32> -> vector<5x32xf32>
    %c0_61 = arith.constant 0 : index
    %c0_62 = arith.constant 0 : index
    %c0_63 = arith.constant 0 : index
    %146 = vector.load %arg15[%c0_61, %c0_62, %c0_63] : memref<2x1x32xf32, #tpu.memory_space<vmem>>, vector<1x1x32xf32>
    %147 = vector.shape_cast %146 : vector<1x1x32xf32> to vector<1x32xf32>
    %148 = vector.broadcast %147 : vector<1x32xf32> to vector<5x32xf32>
    %149 = arith.addf %145, %148 : vector<5x32xf32>
    %150 = arith.addf %96, %149 : vector<5x32xf32>
    %c1 = arith.constant 1 : index
    %c0_64 = arith.constant 0 : index
    %c0_65 = arith.constant 0 : index
    %151 = vector.load %arg4[%c1, %c0_64, %c0_65] : memref<2x1x32xf32, #tpu.memory_space<vmem>>, vector<1x1x32xf32>
    %152 = vector.shape_cast %151 : vector<1x1x32xf32> to vector<1x32xf32>
    %c1_66 = arith.constant 1 : index
    %c0_67 = arith.constant 0 : index
    %c0_68 = arith.constant 0 : index
    %153 = vector.load %arg5[%c1_66, %c0_67, %c0_68] : memref<2x1x32xf32, #tpu.memory_space<vmem>>, vector<1x1x32xf32>
    %154 = vector.shape_cast %153 : vector<1x1x32xf32> to vector<1x32xf32>
    %cst_69 = arith.constant dense<0.000000e+00> : vector<5xf32>
    %155 = vector.multi_reduction <add>, %150, %cst_69 [1] : vector<5x32xf32> to vector<5xf32>
    %156 = vector.shape_cast %155 : vector<5xf32> to vector<5x1xf32>
    %cst_70 = arith.constant 3.200000e+01 : f32
    %157 = vector.broadcast %cst_70 : f32 to vector<5x1xf32>
    %158 = arith.divf %156, %157 : vector<5x1xf32>
    %159 = vector.broadcast %158 : vector<5x1xf32> to vector<5x32xf32>
    %160 = arith.subf %150, %159 : vector<5x32xf32>
    %161 = arith.mulf %160, %160 : vector<5x32xf32>
    %cst_71 = arith.constant dense<0.000000e+00> : vector<5xf32>
    %162 = vector.multi_reduction <add>, %161, %cst_71 [1] : vector<5x32xf32> to vector<5xf32>
    %163 = vector.shape_cast %162 : vector<5xf32> to vector<5x1xf32>
    %cst_72 = arith.constant 3.200000e+01 : f32
    %164 = vector.broadcast %cst_72 : f32 to vector<5x1xf32>
    %165 = arith.divf %163, %164 : vector<5x1xf32>
    %cst_73 = arith.constant 9.99999997E-7 : f32
    %166 = vector.broadcast %cst_73 : f32 to vector<5x1xf32>
    %167 = arith.addf %165, %166 : vector<5x1xf32>
    %168 = math.rsqrt %167 : vector<5x1xf32>
    %169 = vector.broadcast %168 : vector<5x1xf32> to vector<5x32xf32>
    %170 = arith.mulf %160, %169 : vector<5x32xf32>
    %171 = vector.broadcast %152 : vector<1x32xf32> to vector<5x32xf32>
    %172 = arith.mulf %170, %171 : vector<5x32xf32>
    %173 = vector.broadcast %154 : vector<1x32xf32> to vector<5x32xf32>
    %174 = arith.addf %172, %173 : vector<5x32xf32>
    %175 = arith.truncf %174 : vector<5x32xf32> to vector<5x32xbf16>
    %c1_74 = arith.constant 1 : index
    %c0_75 = arith.constant 0 : index
    %c0_76 = arith.constant 0 : index
    %176 = vector.load %arg6[%c1_74, %c0_75, %c0_76] : memref<2x32x128xbf16, #tpu.memory_space<vmem>>, vector<1x32x128xbf16>
    %177 = vector.shape_cast %176 : vector<1x32x128xbf16> to vector<32x128xbf16>
    %cst_77 = arith.constant dense<0.000000e+00> : vector<5x128xf32>
    %178 = tpu.matmul %175, %177, %cst_77 {dimension_numbers = #tpu.dot_dimension_numbers<[1], [0], [0], [1], [0, 0, 1, 1], [], []>} : vector<5x32xbf16>, vector<32x128xbf16>, vector<5x128xf32> -> vector<5x128xf32>
    %c1_78 = arith.constant 1 : index
    %c0_79 = arith.constant 0 : index
    %c0_80 = arith.constant 0 : index
    %179 = vector.load %arg7[%c1_78, %c0_79, %c0_80] : memref<2x1x128xf32, #tpu.memory_space<vmem>>, vector<1x1x128xf32>
    %180 = vector.shape_cast %179 : vector<1x1x128xf32> to vector<1x128xf32>
    %181 = vector.broadcast %180 : vector<1x128xf32> to vector<5x128xf32>
    %182 = arith.addf %178, %181 : vector<5x128xf32>
    %183 = arith.truncf %182 : vector<5x128xf32> to vector<5x128xbf16>
    %184 = vector.extract_strided_slice %183 {offsets = [0, 0], sizes = [5, 8], strides = [1, 1]} : vector<5x128xbf16> to vector<5x8xbf16>
    %185 = vector.extract_strided_slice %183 {offsets = [0, 8], sizes = [5, 8], strides = [1, 1]} : vector<5x128xbf16> to vector<5x8xbf16>
    %186 = vector.extract_strided_slice %183 {offsets = [0, 16], sizes = [5, 8], strides = [1, 1]} : vector<5x128xbf16> to vector<5x8xbf16>
    %187 = vector.extract_strided_slice %183 {offsets = [0, 24], sizes = [5, 8], strides = [1, 1]} : vector<5x128xbf16> to vector<5x8xbf16>
    %188 = vector.shape_cast %184 : vector<5x8xbf16> to vector<1x5x8xbf16>
    %189 = vector.shape_cast %185 : vector<5x8xbf16> to vector<1x5x8xbf16>
    %190 = vector.shape_cast %186 : vector<5x8xbf16> to vector<1x5x8xbf16>
    %191 = vector.shape_cast %187 : vector<5x8xbf16> to vector<1x5x8xbf16>
    %192 = tpu.concatenate %188, %189, %190, %191 in 0 : vector<1x5x8xbf16>, vector<1x5x8xbf16>, vector<1x5x8xbf16>, vector<1x5x8xbf16> -> vector<4x5x8xbf16>
    %193 = vector.extract_strided_slice %183 {offsets = [0, 32], sizes = [5, 8], strides = [1, 1]} : vector<5x128xbf16> to vector<5x8xbf16>
    %194 = vector.extract_strided_slice %183 {offsets = [0, 40], sizes = [5, 8], strides = [1, 1]} : vector<5x128xbf16> to vector<5x8xbf16>
    %195 = vector.extract_strided_slice %183 {offsets = [0, 48], sizes = [5, 8], strides = [1, 1]} : vector<5x128xbf16> to vector<5x8xbf16>
    %196 = vector.extract_strided_slice %183 {offsets = [0, 56], sizes = [5, 8], strides = [1, 1]} : vector<5x128xbf16> to vector<5x8xbf16>
    %197 = vector.shape_cast %193 : vector<5x8xbf16> to vector<1x5x8xbf16>
    %198 = vector.shape_cast %194 : vector<5x8xbf16> to vector<1x5x8xbf16>
    %199 = vector.shape_cast %195 : vector<5x8xbf16> to vector<1x5x8xbf16>
    %200 = vector.shape_cast %196 : vector<5x8xbf16> to vector<1x5x8xbf16>
    %201 = tpu.concatenate %197, %198, %199, %200 in 0 : vector<1x5x8xbf16>, vector<1x5x8xbf16>, vector<1x5x8xbf16>, vector<1x5x8xbf16> -> vector<4x5x8xbf16>
    %202 = vector.extract_strided_slice %183 {offsets = [0, 64], sizes = [5, 8], strides = [1, 1]} : vector<5x128xbf16> to vector<5x8xbf16>
    %203 = vector.extract_strided_slice %183 {offsets = [0, 72], sizes = [5, 8], strides = [1, 1]} : vector<5x128xbf16> to vector<5x8xbf16>
    %204 = vector.extract_strided_slice %183 {offsets = [0, 80], sizes = [5, 8], strides = [1, 1]} : vector<5x128xbf16> to vector<5x8xbf16>
    %205 = vector.extract_strided_slice %183 {offsets = [0, 88], sizes = [5, 8], strides = [1, 1]} : vector<5x128xbf16> to vector<5x8xbf16>
    %206 = vector.shape_cast %202 : vector<5x8xbf16> to vector<1x5x8xbf16>
    %207 = vector.shape_cast %203 : vector<5x8xbf16> to vector<1x5x8xbf16>
    %208 = vector.shape_cast %204 : vector<5x8xbf16> to vector<1x5x8xbf16>
    %209 = vector.shape_cast %205 : vector<5x8xbf16> to vector<1x5x8xbf16>
    %210 = tpu.concatenate %206, %207, %208, %209 in 0 : vector<1x5x8xbf16>, vector<1x5x8xbf16>, vector<1x5x8xbf16>, vector<1x5x8xbf16> -> vector<4x5x8xbf16>
    "tpu.trace_start"() <{level = 10 : i32, message = "hqe,hke->hqk"}> : () -> ()
    %cst_81 = arith.constant dense<0.000000e+00> : vector<4x5x5xf32>
    %211 = tpu.matmul %192, %201, %cst_81 {dimension_numbers = #tpu.dot_dimension_numbers<[2], [2], [1], [1], [0, 0, 0, 1, 1, 1], [0], [0]>} : vector<4x5x8xbf16>, vector<4x5x8xbf16>, vector<4x5x5xf32> -> vector<4x5x5xf32>
    "tpu.trace_stop"() : () -> ()
    %cst_82 = arith.constant dense<0xFF800000> : vector<4x5xf32>
    %212 = vector.multi_reduction <maximumf>, %211, %cst_82 [2] : vector<4x5x5xf32> to vector<4x5xf32>
    %213 = vector.shape_cast %212 : vector<4x5xf32> to vector<4x5x1xf32>
    %214 = vector.broadcast %213 : vector<4x5x1xf32> to vector<4x5x5xf32>
    %215 = arith.subf %211, %214 : vector<4x5x5xf32>
    %216 = math.exp %215 : vector<4x5x5xf32>
    %cst_83 = arith.constant dense<0.000000e+00> : vector<4x5xf32>
    %217 = vector.multi_reduction <add>, %216, %cst_83 [2] : vector<4x5x5xf32> to vector<4x5xf32>
    %218 = vector.shape_cast %217 : vector<4x5xf32> to vector<4x5x1xf32>
    %219 = tpu.reciprocal %218 {approx = true} : vector<4x5x1xf32> -> vector<4x5x1xf32>
    %220 = vector.broadcast %219 : vector<4x5x1xf32> to vector<4x5x5xf32>
    %221 = arith.mulf %216, %220 : vector<4x5x5xf32>
    %222 = arith.truncf %221 : vector<4x5x5xf32> to vector<4x5x5xbf16>
    "tpu.trace_start"() <{level = 10 : i32, message = "hqk,hke->hqe"}> : () -> ()
    %cst_84 = arith.constant dense<0.000000e+00> : vector<4x5x8xf32>
    %223 = tpu.matmul %222, %210, %cst_84 {dimension_numbers = #tpu.dot_dimension_numbers<[2], [1], [1], [2], [0, 0, 0, 1, 1, 2], [0], [0]>} : vector<4x5x5xbf16>, vector<4x5x8xbf16>, vector<4x5x8xf32> -> vector<4x5x8xf32>
    "tpu.trace_stop"() : () -> ()
    %224 = vector.extract_strided_slice %223 {offsets = [0, 0, 0], sizes = [1, 5, 8], strides = [1, 1, 1]} : vector<4x5x8xf32> to vector<1x5x8xf32>
    %225 = vector.shape_cast %224 : vector<1x5x8xf32> to vector<5x8xf32>
    %226 = vector.extract_strided_slice %223 {offsets = [1, 0, 0], sizes = [1, 5, 8], strides = [1, 1, 1]} : vector<4x5x8xf32> to vector<1x5x8xf32>
    %227 = vector.shape_cast %226 : vector<1x5x8xf32> to vector<5x8xf32>
    %228 = vector.extract_strided_slice %223 {offsets = [2, 0, 0], sizes = [1, 5, 8], strides = [1, 1, 1]} : vector<4x5x8xf32> to vector<1x5x8xf32>
    %229 = vector.shape_cast %228 : vector<1x5x8xf32> to vector<5x8xf32>
    %230 = vector.extract_strided_slice %223 {offsets = [3, 0, 0], sizes = [1, 5, 8], strides = [1, 1, 1]} : vector<4x5x8xf32> to vector<1x5x8xf32>
    %231 = vector.shape_cast %230 : vector<1x5x8xf32> to vector<5x8xf32>
    %232 = tpu.concatenate %225, %227, %229, %231 in 1 : vector<5x8xf32>, vector<5x8xf32>, vector<5x8xf32>, vector<5x8xf32> -> vector<5x32xf32>
    %233 = arith.truncf %232 : vector<5x32xf32> to vector<5x32xbf16>
    %c1_85 = arith.constant 1 : index
    %c0_86 = arith.constant 0 : index
    %c0_87 = arith.constant 0 : index
    %234 = vector.load %arg8[%c1_85, %c0_86, %c0_87] : memref<2x32x32xbf16, #tpu.memory_space<vmem>>, vector<1x32x32xbf16>
    %235 = vector.shape_cast %234 : vector<1x32x32xbf16> to vector<32x32xbf16>
    %cst_88 = arith.constant dense<0.000000e+00> : vector<5x32xf32>
    %236 = tpu.matmul %233, %235, %cst_88 {dimension_numbers = #tpu.dot_dimension_numbers<[1], [0], [0], [1], [0, 0, 1, 1], [], []>} : vector<5x32xbf16>, vector<32x32xbf16>, vector<5x32xf32> -> vector<5x32xf32>
    %237 = arith.addf %150, %236 : vector<5x32xf32>
    %c1_89 = arith.constant 1 : index
    %c0_90 = arith.constant 0 : index
    %c0_91 = arith.constant 0 : index
    %238 = vector.load %arg9[%c1_89, %c0_90, %c0_91] : memref<2x1x32xf32, #tpu.memory_space<vmem>>, vector<1x1x32xf32>
    %239 = vector.shape_cast %238 : vector<1x1x32xf32> to vector<1x32xf32>
    %240 = vector.broadcast %239 : vector<1x32xf32> to vector<5x32xf32>
    %241 = arith.addf %237, %240 : vector<5x32xf32>
    %c1_92 = arith.constant 1 : index
    %c0_93 = arith.constant 0 : index
    %c0_94 = arith.constant 0 : index
    %242 = vector.load %arg10[%c1_92, %c0_93, %c0_94] : memref<2x1x32xf32, #tpu.memory_space<vmem>>, vector<1x1x32xf32>
    %243 = vector.shape_cast %242 : vector<1x1x32xf32> to vector<1x32xf32>
    %c1_95 = arith.constant 1 : index
    %c0_96 = arith.constant 0 : index
    %c0_97 = arith.constant 0 : index
    %244 = vector.load %arg11[%c1_95, %c0_96, %c0_97] : memref<2x1x32xf32, #tpu.memory_space<vmem>>, vector<1x1x32xf32>
    %245 = vector.shape_cast %244 : vector<1x1x32xf32> to vector<1x32xf32>
    %cst_98 = arith.constant dense<0.000000e+00> : vector<5xf32>
    %246 = vector.multi_reduction <add>, %241, %cst_98 [1] : vector<5x32xf32> to vector<5xf32>
    %247 = vector.shape_cast %246 : vector<5xf32> to vector<5x1xf32>
    %cst_99 = arith.constant 3.200000e+01 : f32
    %248 = vector.broadcast %cst_99 : f32 to vector<5x1xf32>
    %249 = arith.divf %247, %248 : vector<5x1xf32>
    %250 = vector.broadcast %249 : vector<5x1xf32> to vector<5x32xf32>
    %251 = arith.subf %241, %250 : vector<5x32xf32>
    %252 = arith.mulf %251, %251 : vector<5x32xf32>
    %cst_100 = arith.constant dense<0.000000e+00> : vector<5xf32>
    %253 = vector.multi_reduction <add>, %252, %cst_100 [1] : vector<5x32xf32> to vector<5xf32>
    %254 = vector.shape_cast %253 : vector<5xf32> to vector<5x1xf32>
    %cst_101 = arith.constant 3.200000e+01 : f32
    %255 = vector.broadcast %cst_101 : f32 to vector<5x1xf32>
    %256 = arith.divf %254, %255 : vector<5x1xf32>
    %cst_102 = arith.constant 9.99999997E-7 : f32
    %257 = vector.broadcast %cst_102 : f32 to vector<5x1xf32>
    %258 = arith.addf %256, %257 : vector<5x1xf32>
    %259 = math.rsqrt %258 : vector<5x1xf32>
    %260 = vector.broadcast %259 : vector<5x1xf32> to vector<5x32xf32>
    %261 = arith.mulf %251, %260 : vector<5x32xf32>
    %262 = vector.broadcast %243 : vector<1x32xf32> to vector<5x32xf32>
    %263 = arith.mulf %261, %262 : vector<5x32xf32>
    %264 = vector.broadcast %245 : vector<1x32xf32> to vector<5x32xf32>
    %265 = arith.addf %263, %264 : vector<5x32xf32>
    %266 = arith.truncf %265 : vector<5x32xf32> to vector<5x32xbf16>
    %c1_103 = arith.constant 1 : index
    %c0_104 = arith.constant 0 : index
    %c0_105 = arith.constant 0 : index
    %267 = vector.load %arg12[%c1_103, %c0_104, %c0_105] : memref<2x32x64xbf16, #tpu.memory_space<vmem>>, vector<1x32x64xbf16>
    %268 = vector.shape_cast %267 : vector<1x32x64xbf16> to vector<32x64xbf16>
    %cst_106 = arith.constant dense<0.000000e+00> : vector<5x64xf32>
    %269 = tpu.matmul %266, %268, %cst_106 {dimension_numbers = #tpu.dot_dimension_numbers<[1], [0], [0], [1], [0, 0, 1, 1], [], []>} : vector<5x32xbf16>, vector<32x64xbf16>, vector<5x64xf32> -> vector<5x64xf32>
    %c1_107 = arith.constant 1 : index
    %c0_108 = arith.constant 0 : index
    %c0_109 = arith.constant 0 : index
    %270 = vector.load %arg13[%c1_107, %c0_108, %c0_109] : memref<2x1x64xf32, #tpu.memory_space<vmem>>, vector<1x1x64xf32>
    %271 = vector.shape_cast %270 : vector<1x1x64xf32> to vector<1x64xf32>
    %272 = vector.broadcast %271 : vector<1x64xf32> to vector<5x64xf32>
    %273 = arith.addf %269, %272 : vector<5x64xf32>
    %274 = arith.mulf %273, %273 : vector<5x64xf32>
    %275 = arith.mulf %273, %274 : vector<5x64xf32>
    %cst_110 = arith.constant 4.471500e-02 : f32
    %276 = vector.broadcast %cst_110 : f32 to vector<5x64xf32>
    %277 = arith.mulf %276, %275 : vector<5x64xf32>
    %278 = arith.addf %273, %277 : vector<5x64xf32>
    %cst_111 = arith.constant 0.797884583 : f32
    %279 = vector.broadcast %cst_111 : f32 to vector<5x64xf32>
    %280 = arith.mulf %279, %278 : vector<5x64xf32>
    %281 = math.tanh %280 : vector<5x64xf32>
    %cst_112 = arith.constant 1.000000e+00 : f32
    %282 = vector.broadcast %cst_112 : f32 to vector<5x64xf32>
    %283 = arith.addf %282, %281 : vector<5x64xf32>
    %cst_113 = arith.constant 5.000000e-01 : f32
    %284 = vector.broadcast %cst_113 : f32 to vector<5x64xf32>
    %285 = arith.mulf %284, %283 : vector<5x64xf32>
    %286 = arith.mulf %273, %285 : vector<5x64xf32>
    %287 = arith.truncf %286 : vector<5x64xf32> to vector<5x64xbf16>
    %c1_114 = arith.constant 1 : index
    %c0_115 = arith.constant 0 : index
    %c0_116 = arith.constant 0 : index
    %288 = vector.load %arg14[%c1_114, %c0_115, %c0_116] : memref<2x64x32xbf16, #tpu.memory_space<vmem>>, vector<1x64x32xbf16>
    %289 = vector.shape_cast %288 : vector<1x64x32xbf16> to vector<64x32xbf16>
    %cst_117 = arith.constant dense<0.000000e+00> : vector<5x32xf32>
    %290 = tpu.matmul %287, %289, %cst_117 {dimension_numbers = #tpu.dot_dimension_numbers<[1], [0], [0], [1], [0, 0, 1, 1], [], []>} : vector<5x64xbf16>, vector<64x32xbf16>, vector<5x32xf32> -> vector<5x32xf32>
    %c1_118 = arith.constant 1 : index
    %c0_119 = arith.constant 0 : index
    %c0_120 = arith.constant 0 : index
    %291 = vector.load %arg15[%c1_118, %c0_119, %c0_120] : memref<2x1x32xf32, #tpu.memory_space<vmem>>, vector<1x1x32xf32>
    %292 = vector.shape_cast %291 : vector<1x1x32xf32> to vector<1x32xf32>
    %293 = vector.broadcast %292 : vector<1x32xf32> to vector<5x32xf32>
    %294 = arith.addf %290, %293 : vector<5x32xf32>
    %295 = arith.addf %241, %294 : vector<5x32xf32>
    %296 = vector.extract_strided_slice %295 {offsets = [0, 0], sizes = [1, 32], strides = [1, 1]} : vector<5x32xf32> to vector<1x32xf32>
    %c0_121 = arith.constant 0 : index
    %c0_122 = arith.constant 0 : index
    %297 = vector.load %arg16[%c0_121, %c0_122] : memref<1x32xf32, #tpu.memory_space<vmem>>, vector<1x32xf32>
    %c0_123 = arith.constant 0 : index
    %c0_124 = arith.constant 0 : index
    %298 = vector.load %arg17[%c0_123, %c0_124] : memref<1x32xf32, #tpu.memory_space<vmem>>, vector<1x32xf32>
    %cst_125 = arith.constant dense<0.000000e+00> : vector<1xf32>
    %299 = vector.multi_reduction <add>, %296, %cst_125 [1] : vector<1x32xf32> to vector<1xf32>
    %300 = vector.shape_cast %299 : vector<1xf32> to vector<1x1xf32>
    %cst_126 = arith.constant 3.200000e+01 : f32
    %301 = vector.broadcast %cst_126 : f32 to vector<1x1xf32>
    %302 = arith.divf %300, %301 : vector<1x1xf32>
    %303 = vector.broadcast %302 : vector<1x1xf32> to vector<1x32xf32>
    %304 = arith.subf %296, %303 : vector<1x32xf32>
    %305 = arith.mulf %304, %304 : vector<1x32xf32>
    %cst_127 = arith.constant dense<0.000000e+00> : vector<1xf32>
    %306 = vector.multi_reduction <add>, %305, %cst_127 [1] : vector<1x32xf32> to vector<1xf32>
    %307 = vector.shape_cast %306 : vector<1xf32> to vector<1x1xf32>
    %cst_128 = arith.constant 3.200000e+01 : f32
    %308 = vector.broadcast %cst_128 : f32 to vector<1x1xf32>
    %309 = arith.divf %307, %308 : vector<1x1xf32>
    %cst_129 = arith.constant 9.99999997E-7 : f32
    %310 = vector.broadcast %cst_129 : f32 to vector<1x1xf32>
    %311 = arith.addf %309, %310 : vector<1x1xf32>
    %312 = math.rsqrt %311 : vector<1x1xf32>
    %313 = vector.broadcast %312 : vector<1x1xf32> to vector<1x32xf32>
    %314 = arith.mulf %304, %313 : vector<1x32xf32>
    %315 = arith.mulf %314, %297 : vector<1x32xf32>
    %316 = arith.addf %315, %298 : vector<1x32xf32>
    %317 = arith.truncf %316 : vector<1x32xf32> to vector<1x32xbf16>
    %c0_130 = arith.constant 0 : index
    %c0_131 = arith.constant 0 : index
    %318 = vector.load %arg18[%c0_130, %c0_131] : memref<32x128xbf16, #tpu.memory_space<vmem>>, vector<32x128xbf16>
    %cst_132 = arith.constant dense<0.000000e+00> : vector<1x128xf32>
    %319 = tpu.matmul %317, %318, %cst_132 {dimension_numbers = #tpu.dot_dimension_numbers<[1], [0], [0], [1], [0, 0, 1, 1], [], []>} : vector<1x32xbf16>, vector<32x128xbf16>, vector<1x128xf32> -> vector<1x128xf32>
    %c0_133 = arith.constant 0 : index
    %c0_134 = arith.constant 0 : index
    %320 = vector.load %arg19[%c0_133, %c0_134] : memref<1x128xf32, #tpu.memory_space<vmem>>, vector<1x128xf32>
    %321 = arith.addf %319, %320 : vector<1x128xf32>
    %c0_135 = arith.constant 0 : index
    %c0_136 = arith.constant 0 : index
    %c0_137 = arith.constant 0 : index
    %322 = vector.load %arg20[%c0_135, %c0_136, %c0_137] : memref<1x1x128xf32, #tpu.memory_space<vmem>>, vector<1x1x128xf32>
    %323 = vector.shape_cast %322 : vector<1x1x128xf32> to vector<1x128xf32>
    %324 = vector.shape_cast %321 : vector<1x128xf32> to vector<1x1x128xf32>
    tpu.vector_store %arg20[%c0_135, %c0_136, %c0_137], %324 {strides = array<i32>} : memref<1x1x128xf32, #tpu.memory_space<vmem>>, vector<1x1x128xf32>,
    return
  }
  func.func @transform_0(%arg0: i32) -> (i32, i32, i32) {
    %c0_i32 = arith.constant 0 : i32
    %c0_i32_0 = arith.constant 0 : i32
    %c0_i32_1 = arith.constant 0 : i32
    return %arg0, %c0_i32, %c0_i32_0 : i32, i32, i32
  }
  func.func @transform_1(%arg0: i32) -> (i32, i32) {
    %c0_i32 = arith.constant 0 : i32
    %c0_i32_0 = arith.constant 0 : i32
    %c0_i32_1 = arith.constant 0 : i32
    return %c0_i32, %c0_i32_0 : i32, i32
  }
  func.func @transform_2(%arg0: i32) -> (i32, i32) {
    %c0_i32 = arith.constant 0 : i32
    %c0_i32_0 = arith.constant 0 : i32
    %c0_i32_1 = arith.constant 0 : i32
    return %c0_i32, %c0_i32_0 : i32, i32
  }
  func.func @transform_3(%arg0: i32) -> (i32, i32, i32) {
    %c0_i32 = arith.constant 0 : i32
    %c0_i32_0 = arith.constant 0 : i32
    %c0_i32_1 = arith.constant 0 : i32
    %c0_i32_2 = arith.constant 0 : i32
    return %c0_i32, %c0_i32_0, %c0_i32_1 : i32, i32, i32
  }
  func.func @transform_4(%arg0: i32) -> (i32, i32, i32) {
    %c0_i32 = arith.constant 0 : i32
    %c0_i32_0 = arith.constant 0 : i32
    %c0_i32_1 = arith.constant 0 : i32
    %c0_i32_2 = arith.constant 0 : i32
    return %c0_i32, %c0_i32_0, %c0_i32_1 : i32, i32, i32
  }
  func.func @transform_5(%arg0: i32) -> (i32, i32, i32) {
    %c0_i32 = arith.constant 0 : i32
    %c0_i32_0 = arith.constant 0 : i32
    %c0_i32_1 = arith.constant 0 : i32
    %c0_i32_2 = arith.constant 0 : i32
    return %c0_i32, %c0_i32_0, %c0_i32_1 : i32, i32, i32
  }
  func.func @transform_6(%arg0: i32) -> (i32, i32, i32) {
    %c0_i32 = arith.constant 0 : i32
    %c0_i32_0 = arith.constant 0 : i32
    %c0_i32_1 = arith.constant 0 : i32
    %c0_i32_2 = arith.constant 0 : i32
    return %c0_i32, %c0_i32_0, %c0_i32_1 : i32, i32, i32
  }
  func.func @transform_7(%arg0: i32) -> (i32, i32, i32) {
    %c0_i32 = arith.constant 0 : i32
    %c0_i32_0 = arith.constant 0 : i32
    %c0_i32_1 = arith.constant 0 : i32
    %c0_i32_2 = arith.constant 0 : i32
    return %c0_i32, %c0_i32_0, %c0_i32_1 : i32, i32, i32
  }
  func.func @transform_8(%arg0: i32) -> (i32, i32, i32) {
    %c0_i32 = arith.constant 0 : i32
    %c0_i32_0 = arith.constant 0 : i32
    %c0_i32_1 = arith.constant 0 : i32
    %c0_i32_2 = arith.constant 0 : i32
    return %c0_i32, %c0_i32_0, %c0_i32_1 : i32, i32, i32
  }
  func.func @transform_9(%arg0: i32) -> (i32, i32, i32) {
    %c0_i32 = arith.constant 0 : i32
    %c0_i32_0 = arith.constant 0 : i32
    %c0_i32_1 = arith.constant 0 : i32
    %c0_i32_2 = arith.constant 0 : i32
    return %c0_i32, %c0_i32_0, %c0_i32_1 : i32, i32, i32
  }
  func.func @transform_10(%arg0: i32) -> (i32, i32, i32) {
    %c0_i32 = arith.constant 0 : i32
    %c0_i32_0 = arith.constant 0 : i32
    %c0_i32_1 = arith.constant 0 : i32
    %c0_i32_2 = arith.constant 0 : i32
    return %c0_i32, %c0_i32_0, %c0_i32_1 : i32, i32, i32
  }
  func.func @transform_11(%arg0: i32) -> (i32, i32, i32) {
    %c0_i32 = arith.constant 0 : i32
    %c0_i32_0 = arith.constant 0 : i32
    %c0_i32_1 = arith.constant 0 : i32
    %c0_i32_2 = arith.constant 0 : i32
    return %c0_i32, %c0_i32_0, %c0_i32_1 : i32, i32, i32
  }
  func.func @transform_12(%arg0: i32) -> (i32, i32, i32) {
    %c0_i32 = arith.constant 0 : i32
    %c0_i32_0 = arith.constant 0 : i32
    %c0_i32_1 = arith.constant 0 : i32
    %c0_i32_2 = arith.constant 0 : i32
    return %c0_i32, %c0_i32_0, %c0_i32_1 : i32, i32, i32
  }
  func.func @transform_13(%arg0: i32) -> (i32, i32, i32) {
    %c0_i32 = arith.constant 0 : i32
    %c0_i32_0 = arith.constant 0 : i32
    %c0_i32_1 = arith.constant 0 : i32
    %c0_i32_2 = arith.constant 0 : i32
    return %c0_i32, %c0_i32_0, %c0_i32_1 : i32, i32, i32
  }
  func.func @transform_14(%arg0: i32) -> (i32, i32, i32) {
    %c0_i32 = arith.constant 0 : i32
    %c0_i32_0 = arith.constant 0 : i32
    %c0_i32_1 = arith.constant 0 : i32
    %c0_i32_2 = arith.constant 0 : i32
    return %c0_i32, %c0_i32_0, %c0_i32_1 : i32, i32, i32
  }
  func.func @transform_15(%arg0: i32) -> (i32, i32) {
    %c0_i32 = arith.constant 0 : i32
    %c0_i32_0 = arith.constant 0 : i32
    %c0_i32_1 = arith.constant 0 : i32
    return %c0_i32, %c0_i32_0 : i32, i32
  }
  func.func @transform_16(%arg0: i32) -> (i32, i32) {
    %c0_i32 = arith.constant 0 : i32
    %c0_i32_0 = arith.constant 0 : i32
    %c0_i32_1 = arith.constant 0 : i32
    return %c0_i32, %c0_i32_0 : i32, i32
  }
  func.func @transform_17(%arg0: i32) -> (i32, i32) {
    %c0_i32 = arith.constant 0 : i32
    %c0_i32_0 = arith.constant 0 : i32
    %c0_i32_1 = arith.constant 0 : i32
    return %c0_i32, %c0_i32_0 : i32, i32
  }
  func.func @transform_18(%arg0: i32) -> (i32, i32) {
    %c0_i32 = arith.constant 0 : i32
    %c0_i32_0 = arith.constant 0 : i32
    %c0_i32_1 = arith.constant 0 : i32
    return %c0_i32, %c0_i32_0 : i32, i32
  }
  func.func @transform_19(%arg0: i32) -> (i32, i32, i32) {
    %c0_i32 = arith.constant 0 : i32
    %c0_i32_0 = arith.constant 0 : i32
    %c0_i32_1 = arith.constant 0 : i32
    return %arg0, %c0_i32, %c0_i32_0 : i32, i32, i32
  }
}

</mosaic_0001>

<llo_original>
// kernel: vit_forward.1
$region0: #{vit_forward.1}
  #allocation0 [shape = 'u32[]', space=smem, size = 0x4, offset = 0x4, fixed_abs, tag = 'smem constant byte address 0x4 - core index']
  #allocation1 [shape = 'u32[144,128]{1,0:T(1,128)}', space=vmem, size = 0x12000, scoped, tag = 'internal scratch']
  %s0 = inlined_call_operand.vmem [shape: bf16[2,5,192], index: 0, kind: input, shape index: {}]
  %s1 = inlined_call_operand.vmem [shape: f32[5,32], index: 1, kind: input, shape index: {}]
  %s2 = inlined_call_operand.vmem [shape: bf16[192,32], index: 2, kind: input, shape index: {}]
  %s3 = inlined_call_operand.vmem [shape: f32[2,1,32], index: 3, kind: input, shape index: {}]
  %s4 = inlined_call_operand.vmem [shape: f32[2,1,32], index: 4, kind: input, shape index: {}]
  %s5 = inlined_call_operand.vmem [shape: bf16[2,32,128], index: 5, kind: input, shape index: {}]
  %s6 = inlined_call_operand.vmem [shape: f32[2,1,128], index: 6, kind: input, shape index: {}]
  %s7 = inlined_call_operand.vmem [shape: bf16[2,32,32], index: 7, kind: input, shape index: {}]
  %s8 = inlined_call_operand.vmem [shape: f32[2,1,32], index: 8, kind: input, shape index: {}]
  %s9 = inlined_call_operand.vmem [shape: f32[2,1,32], index: 9, kind: input, shape index: {}]
  %s10 = inlined_call_operand.vmem [shape: f32[2,1,32], index: 10, kind: input, shape index: {}]
  %s11 = inlined_call_operand.vmem [shape: bf16[2,32,64], index: 11, kind: input, shape index: {}]
  %s12 = inlined_call_operand.vmem [shape: f32[2,1,64], index: 12, kind: input, shape index: {}]
  %s13 = inlined_call_operand.vmem [shape: bf16[2,64,32], index: 13, kind: input, shape index: {}]
  %s14 = inlined_call_operand.vmem [shape: f32[2,1,32], index: 14, kind: input, shape index: {}]
  %s15 = inlined_call_operand.vmem [shape: f32[1,32], index: 15, kind: input, shape index: {}]
  %s16 = inlined_call_operand.vmem [shape: f32[1,32], index: 16, kind: input, shape index: {}]
  %s17 = inlined_call_operand.vmem [shape: bf16[32,128], index: 17, kind: input, shape index: {}]
  %s18 = inlined_call_operand.vmem [shape: f32[1,128], index: 18, kind: input, shape index: {}]
  %s19 = inlined_call_operand.hbm [shape: f32[2,1,128], index: 19, kind: output, shape index: {}]
  %s20 = sld [smem:[#allocation0]]
  $region109: #{vit_forward.1} parent=0
    _
  %s22 = ssub.s32 1, %s20
  %s23 = scalar_select 0, %s22, %s20
  $region1: #{vit_forward.1} parent=0
    #allocation2 [shape = 'u8[1024]{0}', space=vmem, size = 0x400, scoped, tag = 'output window, operand 0']
    #allocation3 [shape = 's32[2]{0}', space=sflag, size = 0x8, scoped, tag = 'scoped memory for vit_forward.1']
    %24 = vsyncpa [#allocation3], 0
    %s25 = scalar_lea.sflag [#allocation3], 1
    %26 = vsyncpa %s25, 0
    loop: start=0, step=1, limit=4
    $region2: #{vit_forward.1} parent=1 // loop_pre_header
      _
    $region3: #{vit_forward.1} parent=1 // loop_header
      %s28 = sphi 0, %s32
      %p29 = scmp.ge.s32.totalorder %s28, 4
      %s38 = sphi 0, %s40
      %s41 = sphi 0, %s38
      %s42 = sphi 0, %s41
      %s58 = sphi 0, %s42
      %s62 = sphi 0, %s62
      %s64 = sphi 0, %s62
      %s65 = sphi 0, %s64
      %s79 = sphi 0, %s65
      %s83 = sphi 0, %s83
      %s85 = sphi 0, %s83
      %s86 = sphi 0, %s85
      %s100 = sphi 0, %s86
      %s104 = sphi 0, %s104
      %s106 = sphi 0, %s104
      %s107 = sphi 0, %s106
      %s121 = sphi 0, %s107
      %s125 = sphi 0, %s125
      %s127 = sphi 0, %s125
      %s128 = sphi 0, %s127
      %s142 = sphi 0, %s128
      %s146 = sphi 0, %s146
      %s148 = sphi 0, %s146
      %s149 = sphi 0, %s148
      %s163 = sphi 0, %s149
      %s167 = sphi 0, %s167
      %s169 = sphi 0, %s167
      %s170 = sphi 0, %s169
      %s184 = sphi 0, %s170
      %s188 = sphi 0, %s188
      %s190 = sphi 0, %s188
      %s191 = sphi 0, %s190
      %s205 = sphi 0, %s191
      %s209 = sphi 0, %s209
      %s211 = sphi 0, %s209
      %s212 = sphi 0, %s211
      %s226 = sphi 0, %s212
      %s230 = sphi 0, %s230
      %s232 = sphi 0, %s230
      %s233 = sphi 0, %s232
      %s247 = sphi 0, %s233
      %s251 = sphi 0, %s251
      %s253 = sphi 0, %s251
      %s254 = sphi 0, %s253
      %s268 = sphi 0, %s254
      %s272 = sphi 0, %s272
      %s274 = sphi 0, %s272
      %s275 = sphi 0, %s274
      %s289 = sphi 0, %s275
      %s293 = sphi 0, %s293
      %s295 = sphi 0, %s293
      %s296 = sphi 0, %s295
      %s310 = sphi 0, %s296
      %s314 = sphi 0, %s314
      %s316 = sphi 0, %s314
      %s317 = sphi 0, %s316
      %s331 = sphi 0, %s317
      %s335 = sphi 0, %s335
      %s337 = sphi 0, %s335
      %s338 = sphi 0, %s337
      %s352 = sphi 0, %s338
      %s356 = sphi 0, %s356
      %s358 = sphi 0, %s356
      %s359 = sphi 0, %s358
      %s373 = sphi 0, %s359
      %s377 = sphi 0, %s377
      %s379 = sphi 0, %s377
      %s380 = sphi 0, %s379
      %s394 = sphi 0, %s380
      %s398 = sphi 0, %s398
      %s400 = sphi 0, %s398
      %s401 = sphi 0, %s400
      %s415 = sphi 0, %s401
      %s419 = sphi 0, %s419
      %s421 = sphi 0, %s419
      %s422 = sphi 0, %s421
      %s436 = sphi 0, %s422
      %s442 = sphi 0, %s444
      %s445 = sphi 0, %s442
      %s446 = sphi 0, %s445
      %s462 = sphi 0, %s446
    $region4: #{vit_forward.1} parent=1 // loop_header_branch
      %31 = sbr.rel (%p29) target = $region8
    $region5: #{vit_forward.1} parent=1 // loop_body
      %s33 = ssub.s32 %s28, 1
      %s34 = ssub.s32 %s28, 2
      %s35 = sadd.s32 %s28, 1
      %s36 = ssub.s32 %s28, %s35
      %p37 = scmp.eq.s32.totalorder %s36, 0
      %s39 = sadd.s32 %s38, 1
      %s40 = scalar_select %p37, %s38, %s39
      %p43 = pneg %p37
      %p44 = scmp.eq.s32.totalorder %s28, 1
      %p45 = por %p43, %p44
      %p46 = scmp.ne.s32.totalorder %s38, %s41
      %p47 = scmp.eq.s32.totalorder %s28, 0
      %p48 = por %p46, %p47
      %p49 = scmp.ne.s32.totalorder %s38, %s41
      %p50 = scmp.eq.s32.totalorder %s33, 1
      %p51 = por %p49, %p50
      %p52 = scmp.ne.s32.totalorder %s41, %s42
      %p53 = scmp.eq.s32.totalorder %s33, 0
      %p54 = por %p52, %p53
      %p55 = scmp.ne.s32.totalorder %s41, %s42
      %p56 = scmp.eq.s32.totalorder %s34, 1
      %p57 = por %p55, %p56
      %p59 = scmp.ne.s32.totalorder %s42, %s58
      %p60 = scmp.eq.s32.totalorder %s34, 0
      %p61 = por %p59, %p60
      %s63 = sadd.s32 %s62, 1
      %p66 = scmp.eq.s32.totalorder %s28, 1
      %p67 = scmp.ne.s32.totalorder %s62, %s64
      %p68 = scmp.eq.s32.totalorder %s28, 0
      %p69 = por %p67, %p68
      %p70 = scmp.ne.s32.totalorder %s62, %s64
      %p71 = scmp.eq.s32.totalorder %s33, 1
      %p72 = por %p70, %p71
      %p73 = scmp.ne.s32.totalorder %s64, %s65
      %p74 = scmp.eq.s32.totalorder %s33, 0
      %p75 = por %p73, %p74
      %p76 = scmp.ne.s32.totalorder %s64, %s65
      %p77 = scmp.eq.s32.totalorder %s34, 1
      %p78 = por %p76, %p77
      %p80 = scmp.ne.s32.totalorder %s65, %s79
      %p81 = scmp.eq.s32.totalorder %s34, 0
      %p82 = por %p80, %p81
      %s84 = sadd.s32 %s83, 1
      %p87 = scmp.eq.s32.totalorder %s28, 1
      %p88 = scmp.ne.s32.totalorder %s83, %s85
      %p89 = scmp.eq.s32.totalorder %s28, 0
      %p90 = por %p88, %p89
      %p91 = scmp.ne.s32.totalorder %s83, %s85
      %p92 = scmp.eq.s32.totalorder %s33, 1
      %p93 = por %p91, %p92
      %p94 = scmp.ne.s32.totalorder %s85, %s86
      %p95 = scmp.eq.s32.totalorder %s33, 0
      %p96 = por %p94, %p95
      %p97 = scmp.ne.s32.totalorder %s85, %s86
      %p98 = scmp.eq.s32.totalorder %s34, 1
      %p99 = por %p97, %p98
      %p101 = scmp.ne.s32.totalorder %s86, %s100
      %p102 = scmp.eq.s32.totalorder %s34, 0
      %p103 = por %p101, %p102
      %s105 = sadd.s32 %s104, 1
      %p108 = scmp.eq.s32.totalorder %s28, 1
      %p109 = scmp.ne.s32.totalorder %s104, %s106
      %p110 = scmp.eq.s32.totalorder %s28, 0
      %p111 = por %p109, %p110
      %p112 = scmp.ne.s32.totalorder %s104, %s106
      %p113 = scmp.eq.s32.totalorder %s33, 1
      %p114 = por %p112, %p113
      %p115 = scmp.ne.s32.totalorder %s106, %s107
      %p116 = scmp.eq.s32.totalorder %s33, 0
      %p117 = por %p115, %p116
      %p118 = scmp.ne.s32.totalorder %s106, %s107
      %p119 = scmp.eq.s32.totalorder %s34, 1
      %p120 = por %p118, %p119
      %p122 = scmp.ne.s32.totalorder %s107, %s121
      %p123 = scmp.eq.s32.totalorder %s34, 0
      %p124 = por %p122, %p123
      %s126 = sadd.s32 %s125, 1
      %p129 = scmp.eq.s32.totalorder %s28, 1
      %p130 = scmp.ne.s32.totalorder %s125, %s127
      %p131 = scmp.eq.s32.totalorder %s28, 0
      %p132 = por %p130, %p131
      %p133 = scmp.ne.s32.totalorder %s125, %s127
      %p134 = scmp.eq.s32.totalorder %s33, 1
      %p135 = por %p133, %p134
      %p136 = scmp.ne.s32.totalorder %s127, %s128
      %p137 = scmp.eq.s32.totalorder %s33, 0
      %p138 = por %p136, %p137
      %p139 = scmp.ne.s32.totalorder %s127, %s128
      %p140 = scmp.eq.s32.totalorder %s34, 1
      %p141 = por %p139, %p140
      %p143 = scmp.ne.s32.totalorder %s128, %s142
      %p144 = scmp.eq.s32.totalorder %s34, 0
      %p145 = por %p143, %p144
      %s147 = sadd.s32 %s146, 1
      %p150 = scmp.eq.s32.totalorder %s28, 1
      %p151 = scmp.ne.s32.totalorder %s146, %s148
      %p152 = scmp.eq.s32.totalorder %s28, 0
      %p153 = por %p151, %p152
      %p154 = scmp.ne.s32.totalorder %s146, %s148
      %p155 = scmp.eq.s32.totalorder %s33, 1
      %p156 = por %p154, %p155
      %p157 = scmp.ne.s32.totalorder %s148, %s149
      %p158 = scmp.eq.s32.totalorder %s33, 0
      %p159 = por %p157, %p158
      %p160 = scmp.ne.s32.totalorder %s148, %s149
      %p161 = scmp.eq.s32.totalorder %s34, 1
      %p162 = por %p160, %p161
      %p164 = scmp.ne.s32.totalorder %s149, %s163
      %p165 = scmp.eq.s32.totalorder %s34, 0
      %p166 = por %p164, %p165
      %s168 = sadd.s32 %s167, 1
      %p171 = scmp.eq.s32.totalorder %s28, 1
      %p172 = scmp.ne.s32.totalorder %s167, %s169
      %p173 = scmp.eq.s32.totalorder %s28, 0
      %p174 = por %p172, %p173
      %p175 = scmp.ne.s32.totalorder %s167, %s169
      %p176 = scmp.eq.s32.totalorder %s33, 1
      %p177 = por %p175, %p176
      %p178 = scmp.ne.s32.totalorder %s169, %s170
      %p179 = scmp.eq.s32.totalorder %s33, 0
      %p180 = por %p178, %p179
      %p181 = scmp.ne.s32.totalorder %s169, %s170
      %p182 = scmp.eq.s32.totalorder %s34, 1
      %p183 = por %p181, %p182
      %p185 = scmp.ne.s32.totalorder %s170, %s184
      %p186 = scmp.eq.s32.totalorder %s34, 0
      %p187 = por %p185, %p186
      %s189 = sadd.s32 %s188, 1
      %p192 = scmp.eq.s32.totalorder %s28, 1
      %p193 = scmp.ne.s32.totalorder %s188, %s190
      %p194 = scmp.eq.s32.totalorder %s28, 0
      %p195 = por %p193, %p194
      %p196 = scmp.ne.s32.totalorder %s188, %s190
      %p197 = scmp.eq.s32.totalorder %s33, 1
      %p198 = por %p196, %p197
      %p199 = scmp.ne.s32.totalorder %s190, %s191
      %p200 = scmp.eq.s32.totalorder %s33, 0
      %p201 = por %p199, %p200
      %p202 = scmp.ne.s32.totalorder %s190, %s191
      %p203 = scmp.eq.s32.totalorder %s34, 1
      %p204 = por %p202, %p203
      %p206 = scmp.ne.s32.totalorder %s191, %s205
      %p207 = scmp.eq.s32.totalorder %s34, 0
      %p208 = por %p206, %p207
      %s210 = sadd.s32 %s209, 1
      %p213 = scmp.eq.s32.totalorder %s28, 1
      %p214 = scmp.ne.s32.totalorder %s209, %s211
      %p215 = scmp.eq.s32.totalorder %s28, 0
      %p216 = por %p214, %p215
      %p217 = scmp.ne.s32.totalorder %s209, %s211
      %p218 = scmp.eq.s32.totalorder %s33, 1
      %p219 = por %p217, %p218
      %p220 = scmp.ne.s32.totalorder %s211, %s212
      %p221 = scmp.eq.s32.totalorder %s33, 0
      %p222 = por %p220, %p221
      %p223 = scmp.ne.s32.totalorder %s211, %s212
      %p224 = scmp.eq.s32.totalorder %s34, 1
      %p225 = por %p223, %p224
      %p227 = scmp.ne.s32.totalorder %s212, %s226
      %p228 = scmp.eq.s32.totalorder %s34, 0
      %p229 = por %p227, %p228
      %s231 = sadd.s32 %s230, 1
      %p234 = scmp.eq.s32.totalorder %s28, 1
      %p235 = scmp.ne.s32.totalorder %s230, %s232
      %p236 = scmp.eq.s32.totalorder %s28, 0
      %p237 = por %p235, %p236
      %p238 = scmp.ne.s32.totalorder %s230, %s232
      %p239 = scmp.eq.s32.totalorder %s33, 1
      %p240 = por %p238, %p239
      %p241 = scmp.ne.s32.totalorder %s232, %s233
      %p242 = scmp.eq.s32.totalorder %s33, 0
      %p243 = por %p241, %p242
      %p244 = scmp.ne.s32.totalorder %s232, %s233
      %p245 = scmp.eq.s32.totalorder %s34, 1
      %p246 = por %p244, %p245
      %p248 = scmp.ne.s32.totalorder %s233, %s247
      %p249 = scmp.eq.s32.totalorder %s34, 0
      %p250 = por %p248, %p249
      %s252 = sadd.s32 %s251, 1
      %p255 = scmp.eq.s32.totalorder %s28, 1
      %p256 = scmp.ne.s32.totalorder %s251, %s253
      %p257 = scmp.eq.s32.totalorder %s28, 0
      %p258 = por %p256, %p257
      %p259 = scmp.ne.s32.totalorder %s251, %s253
      %p260 = scmp.eq.s32.totalorder %s33, 1
      %p261 = por %p259, %p260
      %p262 = scmp.ne.s32.totalorder %s253, %s254
      %p263 = scmp.eq.s32.totalorder %s33, 0
      %p264 = por %p262, %p263
      %p265 = scmp.ne.s32.totalorder %s253, %s254
      %p266 = scmp.eq.s32.totalorder %s34, 1
      %p267 = por %p265, %p266
      %p269 = scmp.ne.s32.totalorder %s254, %s268
      %p270 = scmp.eq.s32.totalorder %s34, 0
      %p271 = por %p269, %p270
      %s273 = sadd.s32 %s272, 1
      %p276 = scmp.eq.s32.totalorder %s28, 1
      %p277 = scmp.ne.s32.totalorder %s272, %s274
      %p278 = scmp.eq.s32.totalorder %s28, 0
      %p279 = por %p277, %p278
      %p280 = scmp.ne.s32.totalorder %s272, %s274
      %p281 = scmp.eq.s32.totalorder %s33, 1
      %p282 = por %p280, %p281
      %p283 = scmp.ne.s32.totalorder %s274, %s275
      %p284 = scmp.eq.s32.totalorder %s33, 0
      %p285 = por %p283, %p284
      %p286 = scmp.ne.s32.totalorder %s274, %s275
      %p287 = scmp.eq.s32.totalorder %s34, 1
      %p288 = por %p286, %p287
      %p290 = scmp.ne.s32.totalorder %s275, %s289
      %p291 = scmp.eq.s32.totalorder %s34, 0
      %p292 = por %p290, %p291
      %s294 = sadd.s32 %s293, 1
      %p297 = scmp.eq.s32.totalorder %s28, 1
      %p298 = scmp.ne.s32.totalorder %s293, %s295
      %p299 = scmp.eq.s32.totalorder %s28, 0
      %p300 = por %p298, %p299
      %p301 = scmp.ne.s32.totalorder %s293, %s295
      %p302 = scmp.eq.s32.totalorder %s33, 1
      %p303 = por %p301, %p302
      %p304 = scmp.ne.s32.totalorder %s295, %s296
      %p305 = scmp.eq.s32.totalorder %s33, 0
      %p306 = por %p304, %p305
      %p307 = scmp.ne.s32.totalorder %s295, %s296
      %p308 = scmp.eq.s32.totalorder %s34, 1
      %p309 = por %p307, %p308
      %p311 = scmp.ne.s32.totalorder %s296, %s310
      %p312 = scmp.eq.s32.totalorder %s34, 0
      %p313 = por %p311, %p312
      %s315 = sadd.s32 %s314, 1
      %p318 = scmp.eq.s32.totalorder %s28, 1
      %p319 = scmp.ne.s32.totalorder %s314, %s316
      %p320 = scmp.eq.s32.totalorder %s28, 0
      %p321 = por %p319, %p320
      %p322 = scmp.ne.s32.totalorder %s314, %s316
      %p323 = scmp.eq.s32.totalorder %s33, 1
      %p324 = por %p322, %p323
      %p325 = scmp.ne.s32.totalorder %s316, %s317
      %p326 = scmp.eq.s32.totalorder %s33, 0
      %p327 = por %p325, %p326
      %p328 = scmp.ne.s32.totalorder %s316, %s317
      %p329 = scmp.eq.s32.totalorder %s34, 1
      %p330 = por %p328, %p329
      %p332 = scmp.ne.s32.totalorder %s317, %s331
      %p333 = scmp.eq.s32.totalorder %s34, 0
      %p334 = por %p332, %p333
      %s336 = sadd.s32 %s335, 1
      %p339 = scmp.eq.s32.totalorder %s28, 1
      %p340 = scmp.ne.s32.totalorder %s335, %s337
      %p341 = scmp.eq.s32.totalorder %s28, 0
      %p342 = por %p340, %p341
      %p343 = scmp.ne.s32.totalorder %s335, %s337
      %p344 = scmp.eq.s32.totalorder %s33, 1
      %p345 = por %p343, %p344
      %p346 = scmp.ne.s32.totalorder %s337, %s338
      %p347 = scmp.eq.s32.totalorder %s33, 0
      %p348 = por %p346, %p347
      %p349 = scmp.ne.s32.totalorder %s337, %s338
      %p350 = scmp.eq.s32.totalorder %s34, 1
      %p351 = por %p349, %p350
      %p353 = scmp.ne.s32.totalorder %s338, %s352
      %p354 = scmp.eq.s32.totalorder %s34, 0
      %p355 = por %p353, %p354
      %s357 = sadd.s32 %s356, 1
      %p360 = scmp.eq.s32.totalorder %s28, 1
      %p361 = scmp.ne.s32.totalorder %s356, %s358
      %p362 = scmp.eq.s32.totalorder %s28, 0
      %p363 = por %p361, %p362
      %p364 = scmp.ne.s32.totalorder %s356, %s358
      %p365 = scmp.eq.s32.totalorder %s33, 1
      %p366 = por %p364, %p365
      %p367 = scmp.ne.s32.totalorder %s358, %s359
      %p368 = scmp.eq.s32.totalorder %s33, 0
      %p369 = por %p367, %p368
      %p370 = scmp.ne.s32.totalorder %s358, %s359
      %p371 = scmp.eq.s32.totalorder %s34, 1
      %p372 = por %p370, %p371
      %p374 = scmp.ne.s32.totalorder %s359, %s373
      %p375 = scmp.eq.s32.totalorder %s34, 0
      %p376 = por %p374, %p375
      %s378 = sadd.s32 %s377, 1
      %p381 = scmp.eq.s32.totalorder %s28, 1
      %p382 = scmp.ne.s32.totalorder %s377, %s379
      %p383 = scmp.eq.s32.totalorder %s28, 0
      %p384 = por %p382, %p383
      %p385 = scmp.ne.s32.totalorder %s377, %s379
      %p386 = scmp.eq.s32.totalorder %s33, 1
      %p387 = por %p385, %p386
      %p388 = scmp.ne.s32.totalorder %s379, %s380
      %p389 = scmp.eq.s32.totalorder %s33, 0
      %p390 = por %p388, %p389
      %p391 = scmp.ne.s32.totalorder %s379, %s380
      %p392 = scmp.eq.s32.totalorder %s34, 1
      %p393 = por %p391, %p392
      %p395 = scmp.ne.s32.totalorder %s380, %s394
      %p396 = scmp.eq.s32.totalorder %s34, 0
      %p397 = por %p395, %p396
      %s399 = sadd.s32 %s398, 1
      %p402 = scmp.eq.s32.totalorder %s28, 1
      %p403 = scmp.ne.s32.totalorder %s398, %s400
      %p404 = scmp.eq.s32.totalorder %s28, 0
      %p405 = por %p403, %p404
      %p406 = scmp.ne.s32.totalorder %s398, %s400
      %p407 = scmp.eq.s32.totalorder %s33, 1
      %p408 = por %p406, %p407
      %p409 = scmp.ne.s32.totalorder %s400, %s401
      %p410 = scmp.eq.s32.totalorder %s33, 0
      %p411 = por %p409, %p410
      %p412 = scmp.ne.s32.totalorder %s400, %s401
      %p413 = scmp.eq.s32.totalorder %s34, 1
      %p414 = por %p412, %p413
      %p416 = scmp.ne.s32.totalorder %s401, %s415
      %p417 = scmp.eq.s32.totalorder %s34, 0
      %p418 = por %p416, %p417
      %s420 = sadd.s32 %s419, 1
      %p423 = scmp.eq.s32.totalorder %s28, 1
      %p424 = scmp.ne.s32.totalorder %s419, %s421
      %p425 = scmp.eq.s32.totalorder %s28, 0
      %p426 = por %p424, %p425
      %p427 = scmp.ne.s32.totalorder %s419, %s421
      %p428 = scmp.eq.s32.totalorder %s33, 1
      %p429 = por %p427, %p428
      %p430 = scmp.ne.s32.totalorder %s421, %s422
      %p431 = scmp.eq.s32.totalorder %s33, 0
      %p432 = por %p430, %p431
      %p433 = scmp.ne.s32.totalorder %s421, %s422
      %p434 = scmp.eq.s32.totalorder %s34, 1
      %p435 = por %p433, %p434
      %p437 = scmp.ne.s32.totalorder %s422, %s436
      %p438 = scmp.eq.s32.totalorder %s34, 0
      %p439 = por %p437, %p438
      %s440 = ssub.s32 %s28, %s35
      %p441 = scmp.eq.s32.totalorder %s440, 0
      %s443 = sadd.s32 %s442, 1
      %s444 = scalar_select %p441, %s442, %s443
      %p447 = pneg %p441
      %p448 = scmp.eq.s32.totalorder %s28, 1
      %p449 = por %p447, %p448
      %p450 = scmp.ne.s32.totalorder %s442, %s445
      %p451 = scmp.eq.s32.totalorder %s28, 0
      %p452 = por %p450, %p451
      %p453 = scmp.ne.s32.totalorder %s442, %s445
      %p454 = scmp.eq.s32.totalorder %s33, 1
      %p455 = por %p453, %p454
      %p456 = scmp.ne.s32.totalorder %s445, %s446
      %p457 = scmp.eq.s32.totalorder %s33, 0
      %p458 = por %p456, %p457
      %p459 = scmp.ne.s32.totalorder %s445, %s446
      %p460 = scmp.eq.s32.totalorder %s34, 1
      %p461 = por %p459, %p460
      %p463 = scmp.ne.s32.totalorder %s446, %s462
      %p464 = scmp.eq.s32.totalorder %s34, 0
      %p465 = por %p463, %p464
      %p466 = scmp.le.s32.totalorder 1, %s28
      %p467 = scmp.lt.s32.totalorder %s28, 3
      %p468 = pnand %p466, %p467
      %p469 = pneg %p468
      // Predicated region
      $region9: #{vit_forward.1} parent=5 // pred_check
        _
      $region10: #{vit_forward.1} parent=5 // pred_check_branch
        %471 = sbr.rel (%p468) target = $region12
      $region11: #{vit_forward.1} parent=5 // pred_region
        %s472 = ssub.s32 %s28, 1
        // Predicated region
        $region13: #{vit_forward.1} parent=11 // pred_check
          %p473 = pneg %p75
        $region14: #{vit_forward.1} parent=11 // pred_check_branch
          %475 = sbr.rel (%p473) target = $region16
        $region15: #{vit_forward.1} parent=11 // pred_region
          _
        $region16: #{vit_forward.1} parent=11 // pred_fallthru
          _
        // Predicated region
        $region17: #{vit_forward.1} parent=11 // pred_check
          %p476 = pneg %p96
        $region18: #{vit_forward.1} parent=11 // pred_check_branch
          %478 = sbr.rel (%p476) target = $region20
        $region19: #{vit_forward.1} parent=11 // pred_region
          _
        $region20: #{vit_forward.1} parent=11 // pred_fallthru
          _
        // Predicated region
        $region21: #{vit_forward.1} parent=11 // pred_check
          %p479 = pneg %p117
        $region22: #{vit_forward.1} parent=11 // pred_check_branch
          %481 = sbr.rel (%p479) target = $region24
        $region23: #{vit_forward.1} parent=11 // pred_region
          _
        $region24: #{vit_forward.1} parent=11 // pred_fallthru
          _
        // Predicated region
        $region25: #{vit_forward.1} parent=11 // pred_check
          %p482 = pneg %p138
        $region26: #{vit_forward.1} parent=11 // pred_check_branch
          %484 = sbr.rel (%p482) target = $region28
        $region27: #{vit_forward.1} parent=11 // pred_region
          _
        $region28: #{vit_forward.1} parent=11 // pred_fallthru
          _
        // Predicated region
        $region29: #{vit_forward.1} parent=11 // pred_check
          %p485 = pneg %p159
        $region30: #{vit_forward.1} parent=11 // pred_check_branch
          %487 = sbr.rel (%p485) target = $region32
        $region31: #{vit_forward.1} parent=11 // pred_region
          _
        $region32: #{vit_forward.1} parent=11 // pred_fallthru
          _
        // Predicated region
        $region33: #{vit_forward.1} parent=11 // pred_check
          %p488 = pneg %p180
        $region34: #{vit_forward.1} parent=11 // pred_check_branch
          %490 = sbr.rel (%p488) target = $region36
        $region35: #{vit_forward.1} parent=11 // pred_region
          _
        $region36: #{vit_forward.1} parent=11 // pred_fallthru
          _
        // Predicated region
        $region37: #{vit_forward.1} parent=11 // pred_check
          %p491 = pneg %p201
        $region38: #{vit_forward.1} parent=11 // pred_check_branch
          %493 = sbr.rel (%p491) target = $region40
        $region39: #{vit_forward.1} parent=11 // pred_region
          _
        $region40: #{vit_forward.1} parent=11 // pred_fallthru
          _
        // Predicated region
        $region41: #{vit_forward.1} parent=11 // pred_check
          %p494 = pneg %p222
        $region42: #{vit_forward.1} parent=11 // pred_check_branch
          %496 = sbr.rel (%p494) target = $region44
        $region43: #{vit_forward.1} parent=11 // pred_region
          _
        $region44: #{vit_forward.1} parent=11 // pred_fallthru
          _
        // Predicated region
        $region45: #{vit_forward.1} parent=11 // pred_check
          %p497 = pneg %p243
        $region46: #{vit_forward.1} parent=11 // pred_check_branch
          %499 = sbr.rel (%p497) target = $region48
        $region47: #{vit_forward.1} parent=11 // pred_region
          _
        $region48: #{vit_forward.1} parent=11 // pred_fallthru
          _
        // Predicated region
        $region49: #{vit_forward.1} parent=11 // pred_check
          %p500 = pneg %p264
        $region50: #{vit_forward.1} parent=11 // pred_check_branch
          %502 = sbr.rel (%p500) target = $region52
        $region51: #{vit_forward.1} parent=11 // pred_region
          _
        $region52: #{vit_forward.1} parent=11 // pred_fallthru
          _
        // Predicated region
        $region53: #{vit_forward.1} parent=11 // pred_check
          %p503 = pneg %p285
        $region54: #{vit_forward.1} parent=11 // pred_check_branch
          %505 = sbr.rel (%p503) target = $region56
        $region55: #{vit_forward.1} parent=11 // pred_region
          _
        $region56: #{vit_forward.1} parent=11 // pred_fallthru
          _
        // Predicated region
        $region57: #{vit_forward.1} parent=11 // pred_check
          %p506 = pneg %p306
        $region58: #{vit_forward.1} parent=11 // pred_check_branch
          %508 = sbr.rel (%p506) target = $region60
        $region59: #{vit_forward.1} parent=11 // pred_region
          _
        $region60: #{vit_forward.1} parent=11 // pred_fallthru
          _
        // Predicated region
        $region61: #{vit_forward.1} parent=11 // pred_check
          %p509 = pneg %p327
        $region62: #{vit_forward.1} parent=11 // pred_check_branch
          %511 = sbr.rel (%p509) target = $region64
        $region63: #{vit_forward.1} parent=11 // pred_region
          _
        $region64: #{vit_forward.1} parent=11 // pred_fallthru
          _
        // Predicated region
        $region65: #{vit_forward.1} parent=11 // pred_check
          %p512 = pneg %p348
        $region66: #{vit_forward.1} parent=11 // pred_check_branch
          %514 = sbr.rel (%p512) target = $region68
        $region67: #{vit_forward.1} parent=11 // pred_region
          _
        $region68: #{vit_forward.1} parent=11 // pred_fallthru
          _
        // Predicated region
        $region69: #{vit_forward.1} parent=11 // pred_check
          %p515 = pneg %p369
        $region70: #{vit_forward.1} parent=11 // pred_check_branch
          %517 = sbr.rel (%p515) target = $region72
        $region71: #{vit_forward.1} parent=11 // pred_region
          _
        $region72: #{vit_forward.1} parent=11 // pred_fallthru
          _
        // Predicated region
        $region73: #{vit_forward.1} parent=11 // pred_check
          %p518 = pneg %p390
        $region74: #{vit_forward.1} parent=11 // pred_check_branch
          %520 = sbr.rel (%p518) target = $region76
        $region75: #{vit_forward.1} parent=11 // pred_region
          _
        $region76: #{vit_forward.1} parent=11 // pred_fallthru
          _
        // Predicated region
        $region77: #{vit_forward.1} parent=11 // pred_check
          %p521 = pneg %p411
        $region78: #{vit_forward.1} parent=11 // pred_check_branch
          %523 = sbr.rel (%p521) target = $region80
        $region79: #{vit_forward.1} parent=11 // pred_region
          _
        $region80: #{vit_forward.1} parent=11 // pred_fallthru
          _
        // Predicated region
        $region81: #{vit_forward.1} parent=11 // pred_check
          %p524 = pneg %p432
        $region82: #{vit_forward.1} parent=11 // pred_check_branch
          %526 = sbr.rel (%p524) target = $region84
        $region83: #{vit_forward.1} parent=11 // pred_region
          _
        $region84: #{vit_forward.1} parent=11 // pred_fallthru
          _
      $region12: #{vit_forward.1} parent=5 // pred_fallthru
        _
      %p527 = scmp.lt.s32.totalorder %s28, 2
      // Predicated region
      $region85: #{vit_forward.1} parent=5 // pred_check
        %p528 = pneg %p527
      $region86: #{vit_forward.1} parent=5 // pred_check_branch
        %530 = sbr.rel (%p528) target = $region88
      $region87: #{vit_forward.1} parent=5 // pred_region
        // Predicated region
        $region89: #{vit_forward.1} parent=87 // pred_check
          %p531 = pneg %p48
        $region90: #{vit_forward.1} parent=87 // pred_check_branch
          %533 = sbr.rel (%p531) target = $region92
        $region91: #{vit_forward.1} parent=87 // pred_region
          %p534 = scmp.lt.s32.totalorder %s28, 1
          %s535 = scalar_select %p534, %s28, 1
          %s536 = smul.addr %s535, 2
          %s537 = smul.addr %s536, 4
          %s538 = scalar_lea.vmem %s0, %s537
        $region92: #{vit_forward.1} parent=87 // pred_fallthru
          _
      $region88: #{vit_forward.1} parent=5 // pred_fallthru
        _
      %p539 = scmp.le.s32.totalorder 1, %s28
      %p540 = scmp.lt.s32.totalorder %s28, 3
      %p541 = pnand %p539, %p540
      %p542 = pneg %p541
      // Predicated region
      $region93: #{vit_forward.1} parent=5 // pred_check
        _
      $region94: #{vit_forward.1} parent=5 // pred_check_branch
        %544 = sbr.rel (%p541) target = $region96
      $region95: #{vit_forward.1} parent=5 // pred_region
        %s545 = ssub.s32 %s28, 1
        %p546 = scmp.lt.s32.totalorder %s33, 1
        %s547 = scalar_select %p546, %s33, 1
        %s548 = smul.addr %s547, 2
        %s549 = smul.addr %s548, 4
        %s550 = scalar_lea.vmem %s0, %s549
        %p551 = pneg %p54
        %p552 = pneg %p51
        %p553 = pneg %p75
        %p554 = pneg %p72
        %p555 = pneg %p96
        %p556 = pneg %p93
        %p557 = pneg %p117
        %p558 = pneg %p114
        %p559 = pneg %p138
        %p560 = pneg %p135
        %p561 = pneg %p159
        %p562 = pneg %p156
        %p563 = pneg %p180
        %p564 = pneg %p177
        %p565 = pneg %p201
        %p566 = pneg %p198
        %p567 = pneg %p222
        %p568 = pneg %p219
        %p569 = pneg %p243
        %p570 = pneg %p240
        %p571 = pneg %p264
        %p572 = pneg %p261
        %p573 = pneg %p285
        %p574 = pneg %p282
        %p575 = pneg %p306
        %p576 = pneg %p303
        %p577 = pneg %p327
        %p578 = pneg %p324
        %p579 = pneg %p348
        %p580 = pneg %p345
        %p581 = pneg %p369
        %p582 = pneg %p366
        %p583 = pneg %p390
        %p584 = pneg %p387
        %p585 = pneg %p411
        %p586 = pneg %p408
        %p587 = pneg %p432
        %p588 = pneg %p429
        %p589 = pneg %p458
        %p590 = pneg %p455
        %s591 = sand.u32 %s445, 1
        %s592 = scalar_lea.sflag [#allocation3], %s591
        %s593 = sand.u32 %s445, 1
        %s594 = scalar_lea.vmem [#allocation2], %s593
        %p595 = scmp.lt.s32.totalorder %s33, 1
        %s596 = scalar_select %p595, %s33, 1
        %s597 = smul.addr %s596, 2
        %s598 = smul.addr %s597, 4
        %s599 = scalar_lea.vmem %s0, %s598
        %v601 = vld [vmem:[%s599] sm:$0x77]
        %v602 = vld [vmem:[%s2] sm:$0xf]
        %v603 = vld [vmem:[%s2 + $0x4] sm:$0xf]
        %v604 = vld [vmem:[%s2 + $0x8] sm:$0xf]
        %v605 = vld [vmem:[%s2 + $0xc] sm:$0xf]
        %v606 = vld [vmem:[%s2 + $0x10] sm:$0xf]
        %v607 = vld [vmem:[%s2 + $0x14] sm:$0xf]
        %v608 = vld [vmem:[%s2 + $0x18] sm:$0xf]
        %v609 = vld [vmem:[%s2 + $0x1c] sm:$0xf]
        %v610 = vld [vmem:[%s2 + $0x20] sm:$0xf]
        %v611 = vld [vmem:[%s2 + $0x24] sm:$0xf]
        %v612 = vld [vmem:[%s2 + $0x28] sm:$0xf]
        %v613 = vld [vmem:[%s2 + $0x2c] sm:$0xf]
        %v614 = vld [vmem:[%s2 + $0x30] sm:$0xf]
        %v615 = vld [vmem:[%s2 + $0x34] sm:$0xf]
        %v616 = vld [vmem:[%s2 + $0x38] sm:$0xf]
        %v617 = vld [vmem:[%s2 + $0x3c] sm:$0xf]
        %v618 = vld [vmem:[%s2 + $0x40] sm:$0xf]
        %v619 = vld [vmem:[%s2 + $0x44] sm:$0xf]
        %v620 = vld [vmem:[%s2 + $0x48] sm:$0xf]
        %v621 = vld [vmem:[%s2 + $0x4c] sm:$0xf]
        %v622 = vld [vmem:[%s2 + $0x50] sm:$0xf]
        %v623 = vld [vmem:[%s2 + $0x54] sm:$0xf]
        %v624 = vld [vmem:[%s2 + $0x58] sm:$0xf]
        %v625 = vld [vmem:[%s2 + $0x5c] sm:$0xf]
        %v626 = vld [vmem:[%s1] sm:$0x1f]
        %v628 = vunpack.c.l.b16 %v601
        %v629 = vunpack.c.h.b16 %v601
        %v630 = vpack.c.b16 %v628, %v628
        %v631 = vpack.c.b16 %v629, %v629
        %v657 = vunpack.c.l.b16 %v602
        %v658 = vunpack.c.l.b16 %v603
        %v659 = vunpack.c.l.b16 %v604
        %v660 = vunpack.c.l.b16 %v605
        %v661 = vunpack.c.l.b16 %v606
        %v662 = vunpack.c.l.b16 %v607
        %v663 = vunpack.c.l.b16 %v608
        %v664 = vunpack.c.l.b16 %v609
        %v665 = vunpack.c.l.b16 %v610
        %v666 = vunpack.c.l.b16 %v611
        %v667 = vunpack.c.l.b16 %v612
        %v668 = vunpack.c.l.b16 %v613
        %v669 = vunpack.c.l.b16 %v614
        %v670 = vunpack.c.l.b16 %v615
        %v671 = vunpack.c.l.b16 %v616
        %v672 = vunpack.c.l.b16 %v617
        %v673 = vunpack.c.l.b16 %v618
        %v674 = vunpack.c.l.b16 %v619
        %v675 = vunpack.c.l.b16 %v620
        %v676 = vunpack.c.l.b16 %v621
        %v677 = vunpack.c.l.b16 %v622
        %v678 = vunpack.c.l.b16 %v623
        %v679 = vunpack.c.l.b16 %v624
        %v680 = vunpack.c.l.b16 %v625
        %v681 = vpack.c.b16 %v658, %v657
        %v682 = vpack.c.b16 %v660, %v659
        %v683 = vpack.c.b16 %v662, %v661
        %v684 = vpack.c.b16 %v664, %v663
        %v685 = vpack.c.b16 %v666, %v665
        %v686 = vpack.c.b16 %v668, %v667
        %v687 = vpack.c.b16 %v670, %v669
        %v688 = vpack.c.b16 %v672, %v671
        %v689 = vpack.c.b16 %v674, %v673
        %v690 = vpack.c.b16 %v676, %v675
        %v691 = vpack.c.b16 %v678, %v677
        %v692 = vpack.c.b16 %v680, %v679
        %vm705 = vcmask 523264
        %v707 = vsel %vm705, %v631, 0
        %709 = vmatprep.subr.bf16.mxu0 0
        %710 = vmatpush1.bf16.msra.mxu0 %v681
        %711 = vmatprep.subr.bf16.mxu0 0
        %712 = vmatpush1.bf16.msra.mxu0 %v682
        %713 = vmatprep.subr.bf16.mxu0 0
        %714 = vmatpush1.bf16.msra.mxu0 %v683
        %715 = vmatprep.subr.bf16.mxu0 0
        %716 = vmatpush1.bf16.msra.mxu0 %v684
        %717 = vmatprep.subr.bf16.mxu0 0
        %718 = vmatpush1.bf16.msra.mxu0 %v685
        %719 = vmatprep.subr.bf16.mxu0 0
        %720 = vmatpush1.bf16.msra.mxu0 %v686
        %721 = vmatprep.subr.bf16.mxu0 0
        %722 = vmatpush1.bf16.msra.mxu0 %v687
        %723 = vmatprep.subr.bf16.mxu0 0
        %724 = vmatpush1.bf16.msra.mxu0 %v688
        %725 = vmatprep.subr.bf16.mxu0 0
        %726 = vmatpush1.bf16.msra.mxu0 %v689
        %727 = vmatprep.subr.bf16.mxu0 0
        %728 = vmatpush1.bf16.msra.mxu0 %v690
        %729 = vmatprep.subr.bf16.mxu0 0
        %730 = vmatpush1.bf16.msra.mxu0 %v691
        %731 = vmatprep.subr.bf16.mxu0 0
        %732 = vmatpush1.bf16.msra.mxu0 %v692
        %733 = vmatprep.subr.bf16.mxu0 0
        %734 = vmatpush1.bf16.msra.mxu0 0
        %735 = vmatprep.subr.bf16.mxu0 0
        %736 = vmatpush1.bf16.msra.mxu0 0
        %737 = vmatprep.subr.bf16.mxu0 0
        %738 = vmatpush1.bf16.msra.mxu0 0
        %739 = vmatprep.subr.bf16.mxu0 0
        %740 = vmatpush1.bf16.msra.mxu0 0
        %741 = vmatprep.mubr.bf16.mxu0 %v707
        %742 = vmatmul.mubr.bf16.gmra.mrb[0].mxu0 %v630
        %v743 = vpop.f32.mrb[0].mxu0
        %v744 = vadd.f32 %v626, %v743
        %v745 = vpop.f32.mrb[0].mxu0
        %v746 = vpop.f32.mrb[0].mxu0
        %v747 = vpop.f32.mrb[0].mxu0
        %748 = vdwg.mxu0
        %v749 = vld [vmem:[%s3] sm:$0x1]
        %v750 = vld [vmem:[%s4] sm:$0x1]
        %vm751 = vcmask 258048
        %v752 = vsel %vm751, %v744, 0.0
        %753 = vadd.xlane.f32.xlu0 %v752
        %v754 = vpop.xlane.xlu0 %753
        %v755 = vrcp.pop 32.0
        %v756 = vmul.f32 %v754, %v755
        %v757 = vsub.f32 %v744, %v756
        %v758 = vmul.f32 %v757, %v757
        %v759 = vsel %vm751, %v758, 0.0
        %760 = vadd.xlane.f32.xlu0 %v759
        %v761 = vpop.xlane.xlu0 %760
        %v762 = vmul.f32 %v761, %v755
        %v763 = vadd.f32 %v762, 1e-06
        %v764 = vrsqrt.pop %v763
        %v765 = vmul.f32 %v757, %v764
        %v767 = vlaneseq
        %v768 = vshrl.u32 %v767, 7
        %v769 = vsub.s32 0, %v768
        %v770 = vrot.slane %v749, %v769
        %v772 = vmul.f32 %v765, %v770
        %v774 = vlaneseq
        %v775 = vshrl.u32 %v774, 7
        %v776 = vsub.s32 0, %v775
        %v777 = vrot.slane %v750, %v776
        %v779 = vadd.f32 %v772, %v777
        %v780 = vpack.c.bf16 %v779, %v779
        %v781 = vld [vmem:[%s5] sm:$0xf]
        %v782 = vld [vmem:[%s5 + $0x4] sm:$0xf]
        %v783 = vld [vmem:[%s5 + $0x8] sm:$0xf]
        %v784 = vld [vmem:[%s5 + $0xc] sm:$0xf]
        %v785 = vld [vmem:[%s6] sm:$0x1]
        %v787 = vlaneseq
        %v788 = vshrl.u32 %v787, 7
        %v789 = vsub.s32 0, %v788
        %v790 = vrot.slane %v785, %v789
        %v796 = vunpack.c.l.b16 %v781
        %v797 = vunpack.c.l.b16 %v782
        %v798 = vunpack.c.l.b16 %v783
        %v799 = vunpack.c.l.b16 %v784
        %v800 = vpack.c.b16 %v797, %v796
        %v801 = vpack.c.b16 %v799, %v798
        %vm804 = vcmask 261120
        %v806 = vsel %vm804, %v780, 0
        %808 = vmatprep.subr.bf16.mxu0 0
        %809 = vmatpush1.bf16.msra.mxu0 %v800
        %810 = vmatprep.subr.bf16.mxu0 0
        %811 = vmatpush1.bf16.msra.mxu0 %v801
        %812 = vmatprep.subr.bf16.mxu0 0
        %813 = vmatpush1.bf16.msra.mxu0 0
        %814 = vmatprep.subr.bf16.mxu0 0
        %815 = vmatpush1.bf16.msra.mxu0 0
        %816 = vmatprep.subr.bf16.mxu0 0
        %817 = vmatpush1.bf16.msra.mxu0 0
        %818 = vmatprep.subr.bf16.mxu0 0
        %819 = vmatpush1.bf16.msra.mxu0 0
        %820 = vmatprep.subr.bf16.mxu0 0
        %821 = vmatpush1.bf16.msra.mxu0 0
        %822 = vmatprep.subr.bf16.mxu0 0
        %823 = vmatpush1.bf16.msra.mxu0 0
        %824 = vmatprep.subr.bf16.mxu0 0
        %825 = vmatpush1.bf16.msra.mxu0 0
        %826 = vmatprep.subr.bf16.mxu0 0
        %827 = vmatpush1.bf16.msra.mxu0 0
        %828 = vmatprep.subr.bf16.mxu0 0
        %829 = vmatpush1.bf16.msra.mxu0 0
        %830 = vmatprep.subr.bf16.mxu0 0
        %831 = vmatpush1.bf16.msra.mxu0 0
        %832 = vmatprep.subr.bf16.mxu0 0
        %833 = vmatpush1.bf16.msra.mxu0 0
        %834 = vmatprep.subr.bf16.mxu0 0
        %835 = vmatpush1.bf16.msra.mxu0 0
        %836 = vmatprep.subr.bf16.mxu0 0
        %837 = vmatpush1.bf16.msra.mxu0 0
        %838 = vmatprep.subr.bf16.mxu0 0
        %839 = vmatpush1.bf16.msra.mxu0 0
        %840 = vmatprep.mubr.bf16.mxu0 0
        %841 = vmatmul.mubr.bf16.gmra.mrb[0].mxu0 %v806
        %v842 = vpop.f32.mrb[0].mxu0
        %v843 = vadd.f32 %v790, %v842
        %v844 = vpop.f32.mrb[0].mxu0
        %v845 = vpop.f32.mrb[0].mxu0
        %v846 = vpop.f32.mrb[0].mxu0
        %847 = vdwg.mxu0
        %v848 = vpack.c.bf16 %v843, %v843
        %850 = vrot.lane.b32.xlu0 %v848, 120
        %v851 = vpop.permute.xlu0 %850
        %852 = vrot.lane.b32.xlu0 %v848, 112
        %v853 = vpop.permute.xlu0 %852
        %854 = vrot.lane.b32.xlu0 %v848, 104
        %v855 = vpop.permute.xlu0 %854
        %856 = vrot.lane.b32.xlu0 %v848, 96
        %v857 = vpop.permute.xlu0 %856
        %vm858 = vcmask 64512
        %v860 = vsel %vm858, %v848, 0
        %v863 = vsel %vm858, %v857, 0
        %865 = vmatprep.subr.bf16.mxu0 0
        %866 = vmatpush1.bf16.xpose.msra.mxu0 %v863
        %867 = vmatprep.subr.bf16.mxu0 0
        %868 = vmatpush1.bf16.xpose.msra.mxu0 0
        %869 = vmatprep.subr.bf16.mxu0 0
        %870 = vmatpush1.bf16.xpose.msra.mxu0 0
        %871 = vmatprep.subr.bf16.mxu0 0
        %872 = vmatpush1.bf16.xpose.msra.mxu0 0
        %873 = vmatprep.subr.bf16.mxu0 0
        %874 = vmatpush1.bf16.xpose.msra.mxu0 0
        %875 = vmatprep.subr.bf16.mxu0 0
        %876 = vmatpush1.bf16.xpose.msra.mxu0 0
        %877 = vmatprep.subr.bf16.mxu0 0
        %878 = vmatpush1.bf16.xpose.msra.mxu0 0
        %879 = vmatprep.subr.bf16.mxu0 0
        %880 = vmatpush1.bf16.xpose.msra.mxu0 0
        %881 = vmatprep.subr.bf16.mxu0 0
        %882 = vmatpush1.bf16.xpose.msra.mxu0 0
        %883 = vmatprep.subr.bf16.mxu0 0
        %884 = vmatpush1.bf16.xpose.msra.mxu0 0
        %885 = vmatprep.subr.bf16.mxu0 0
        %886 = vmatpush1.bf16.xpose.msra.mxu0 0
        %887 = vmatprep.subr.bf16.mxu0 0
        %888 = vmatpush1.bf16.xpose.msra.mxu0 0
        %889 = vmatprep.subr.bf16.mxu0 0
        %890 = vmatpush1.bf16.xpose.msra.mxu0 0
        %891 = vmatprep.subr.bf16.mxu0 0
        %892 = vmatpush1.bf16.xpose.msra.mxu0 0
        %893 = vmatprep.subr.bf16.mxu0 0
        %894 = vmatpush1.bf16.xpose.msra.mxu0 0
        %895 = vmatprep.subr.bf16.mxu0 0
        %896 = vmatpush1.bf16.xpose.msra.mxu0 0
        %897 = vmatprep.mubr.bf16.mxu0 0
        %898 = vmatmul.mubr.bf16.gmra.mrb[0].mxu0 %v860
        %v899 = vpop.f32.mrb[0].mxu0
        %v900 = vadd.f32 0.0, %v899
        %v901 = vpop.f32.mrb[0].mxu0
        %v902 = vpop.f32.mrb[0].mxu0
        %v903 = vpop.f32.mrb[0].mxu0
        %904 = vdwg.mxu0
        %905 = vrot.lane.b32.xlu0 %v851, 96
        %v906 = vpop.permute.xlu0 %905
        %v908 = vsel %vm858, %v851, 0
        %v911 = vsel %vm858, %v906, 0
        %913 = vmatprep.subr.bf16.mxu0 0
        %914 = vmatpush1.bf16.xpose.msra.mxu0 %v911
        %915 = vmatprep.subr.bf16.mxu0 0
        %916 = vmatpush1.bf16.xpose.msra.mxu0 0
        %917 = vmatprep.subr.bf16.mxu0 0
        %918 = vmatpush1.bf16.xpose.msra.mxu0 0
        %919 = vmatprep.subr.bf16.mxu0 0
        %920 = vmatpush1.bf16.xpose.msra.mxu0 0
        %921 = vmatprep.subr.bf16.mxu0 0
        %922 = vmatpush1.bf16.xpose.msra.mxu0 0
        %923 = vmatprep.subr.bf16.mxu0 0
        %924 = vmatpush1.bf16.xpose.msra.mxu0 0
        %925 = vmatprep.subr.bf16.mxu0 0
        %926 = vmatpush1.bf16.xpose.msra.mxu0 0
        %927 = vmatprep.subr.bf16.mxu0 0
        %928 = vmatpush1.bf16.xpose.msra.mxu0 0
        %929 = vmatprep.subr.bf16.mxu0 0
        %930 = vmatpush1.bf16.xpose.msra.mxu0 0
        %931 = vmatprep.subr.bf16.mxu0 0
        %932 = vmatpush1.bf16.xpose.msra.mxu0 0
        %933 = vmatprep.subr.bf16.mxu0 0
        %934 = vmatpush1.bf16.xpose.msra.mxu0 0
        %935 = vmatprep.subr.bf16.mxu0 0
        %936 = vmatpush1.bf16.xpose.msra.mxu0 0
        %937 = vmatprep.subr.bf16.mxu0 0
        %938 = vmatpush1.bf16.xpose.msra.mxu0 0
        %939 = vmatprep.subr.bf16.mxu0 0
        %940 = vmatpush1.bf16.xpose.msra.mxu0 0
        %941 = vmatprep.subr.bf16.mxu0 0
        %942 = vmatpush1.bf16.xpose.msra.mxu0 0
        %943 = vmatprep.subr.bf16.mxu0 0
        %944 = vmatpush1.bf16.xpose.msra.mxu0 0
        %945 = vmatprep.mubr.bf16.mxu0 0
        %946 = vmatmul.mubr.bf16.gmra.mrb[0].mxu0 %v908
        %v947 = vpop.f32.mrb[0].mxu0
        %v948 = vadd.f32 0.0, %v947
        %v949 = vpop.f32.mrb[0].mxu0
        %v950 = vpop.f32.mrb[0].mxu0
        %v951 = vpop.f32.mrb[0].mxu0
        %952 = vdwg.mxu0
        %953 = vrot.lane.b32.xlu0 %v853, 96
        %v954 = vpop.permute.xlu0 %953
        %v956 = vsel %vm858, %v853, 0
        %v959 = vsel %vm858, %v954, 0
        %961 = vmatprep.subr.bf16.mxu0 0
        %962 = vmatpush1.bf16.xpose.msra.mxu0 %v959
        %963 = vmatprep.subr.bf16.mxu0 0
        %964 = vmatpush1.bf16.xpose.msra.mxu0 0
        %965 = vmatprep.subr.bf16.mxu0 0
        %966 = vmatpush1.bf16.xpose.msra.mxu0 0
        %967 = vmatprep.subr.bf16.mxu0 0
        %968 = vmatpush1.bf16.xpose.msra.mxu0 0
        %969 = vmatprep.subr.bf16.mxu0 0
        %970 = vmatpush1.bf16.xpose.msra.mxu0 0
        %971 = vmatprep.subr.bf16.mxu0 0
        %972 = vmatpush1.bf16.xpose.msra.mxu0 0
        %973 = vmatprep.subr.bf16.mxu0 0
        %974 = vmatpush1.bf16.xpose.msra.mxu0 0
        %975 = vmatprep.subr.bf16.mxu0 0
        %976 = vmatpush1.bf16.xpose.msra.mxu0 0
        %977 = vmatprep.subr.bf16.mxu0 0
        %978 = vmatpush1.bf16.xpose.msra.mxu0 0
        %979 = vmatprep.subr.bf16.mxu0 0
        %980 = vmatpush1.bf16.xpose.msra.mxu0 0
        %981 = vmatprep.subr.bf16.mxu0 0
        %982 = vmatpush1.bf16.xpose.msra.mxu0 0
        %983 = vmatprep.subr.bf16.mxu0 0
        %984 = vmatpush1.bf16.xpose.msra.mxu0 0
        %985 = vmatprep.subr.bf16.mxu0 0
        %986 = vmatpush1.bf16.xpose.msra.mxu0 0
        %987 = vmatprep.subr.bf16.mxu0 0
        %988 = vmatpush1.bf16.xpose.msra.mxu0 0
        %989 = vmatprep.subr.bf16.mxu0 0
        %990 = vmatpush1.bf16.xpose.msra.mxu0 0
        %991 = vmatprep.subr.bf16.mxu0 0
        %992 = vmatpush1.bf16.xpose.msra.mxu0 0
        %993 = vmatprep.mubr.bf16.mxu0 0
        %994 = vmatmul.mubr.bf16.gmra.mrb[0].mxu0 %v956
        %v995 = vpop.f32.mrb[0].mxu0
        %v996 = vadd.f32 0.0, %v995
        %v997 = vpop.f32.mrb[0].mxu0
        %v998 = vpop.f32.mrb[0].mxu0
        %v999 = vpop.f32.mrb[0].mxu0
        %1000 = vdwg.mxu0
        %1001 = vrot.lane.b32.xlu0 %v855, 96
        %v1002 = vpop.permute.xlu0 %1001
        %v1004 = vsel %vm858, %v855, 0
        %v1007 = vsel %vm858, %v1002, 0
        %1009 = vmatprep.subr.bf16.mxu0 0
        %1010 = vmatpush1.bf16.xpose.msra.mxu0 %v1007
        %1011 = vmatprep.subr.bf16.mxu0 0
        %1012 = vmatpush1.bf16.xpose.msra.mxu0 0
        %1013 = vmatprep.subr.bf16.mxu0 0
        %1014 = vmatpush1.bf16.xpose.msra.mxu0 0
        %1015 = vmatprep.subr.bf16.mxu0 0
        %1016 = vmatpush1.bf16.xpose.msra.mxu0 0
        %1017 = vmatprep.subr.bf16.mxu0 0
        %1018 = vmatpush1.bf16.xpose.msra.mxu0 0
        %1019 = vmatprep.subr.bf16.mxu0 0
        %1020 = vmatpush1.bf16.xpose.msra.mxu0 0
        %1021 = vmatprep.subr.bf16.mxu0 0
        %1022 = vmatpush1.bf16.xpose.msra.mxu0 0
        %1023 = vmatprep.subr.bf16.mxu0 0
        %1024 = vmatpush1.bf16.xpose.msra.mxu0 0
        %1025 = vmatprep.subr.bf16.mxu0 0
        %1026 = vmatpush1.bf16.xpose.msra.mxu0 0
        %1027 = vmatprep.subr.bf16.mxu0 0
        %1028 = vmatpush1.bf16.xpose.msra.mxu0 0
        %1029 = vmatprep.subr.bf16.mxu0 0
        %1030 = vmatpush1.bf16.xpose.msra.mxu0 0
        %1031 = vmatprep.subr.bf16.mxu0 0
        %1032 = vmatpush1.bf16.xpose.msra.mxu0 0
        %1033 = vmatprep.subr.bf16.mxu0 0
        %1034 = vmatpush1.bf16.xpose.msra.mxu0 0
        %1035 = vmatprep.subr.bf16.mxu0 0
        %1036 = vmatpush1.bf16.xpose.msra.mxu0 0
        %1037 = vmatprep.subr.bf16.mxu0 0
        %1038 = vmatpush1.bf16.xpose.msra.mxu0 0
        %1039 = vmatprep.subr.bf16.mxu0 0
        %1040 = vmatpush1.bf16.xpose.msra.mxu0 0
        %1041 = vmatprep.mubr.bf16.mxu0 0
        %1042 = vmatmul.mubr.bf16.gmra.mrb[0].mxu0 %v1004
        %v1043 = vpop.f32.mrb[0].mxu0
        %v1044 = vadd.f32 0.0, %v1043
        %v1045 = vpop.f32.mrb[0].mxu0
        %v1046 = vpop.f32.mrb[0].mxu0
        %v1047 = vpop.f32.mrb[0].mxu0
        %1048 = vdwg.mxu0
        %vm1049 = vcmask 36864
        %v1050 = vsel %vm1049, %v900, -inf
        %1051 = vmax.xlane.f32.xlu0 %v1050
        %v1052 = vpop.xlane.xlu0 %1051
        %v1053 = vsel %vm1049, %v948, -inf
        %1054 = vmax.xlane.f32.xlu0 %v1053
        %v1055 = vpop.xlane.xlu0 %1054
        %v1056 = vsel %vm1049, %v996, -inf
        %1057 = vmax.xlane.f32.xlu0 %v1056
        %v1058 = vpop.xlane.xlu0 %1057
        %v1059 = vsel %vm1049, %v1044, -inf
        %1060 = vmax.xlane.f32.xlu0 %v1059
        %v1061 = vpop.xlane.xlu0 %1060
        %v1062 = vsub.f32 %v900, %v1052
        %v1063 = vsub.f32 %v948, %v1055
        %v1064 = vsub.f32 %v996, %v1058
        %v1065 = vsub.f32 %v1044, %v1061
        %v1066 = vmul.f32 %v1062, 1.442695
        %v1067 = vpow.pop %v1066
        %v1068 = vmul.f32 %v1063, 1.442695
        %v1069 = vpow.pop %v1068
        %v1070 = vmul.f32 %v1064, 1.442695
        %v1071 = vpow.pop %v1070
        %v1072 = vmul.f32 %v1065, 1.442695
        %v1073 = vpow.pop %v1072
        %v1074 = vsel %vm1049, %v1067, 0.0
        %1075 = vadd.xlane.f32.xlu0 %v1074
        %v1076 = vpop.xlane.xlu0 %1075
        %v1077 = vsel %vm1049, %v1069, 0.0
        %1078 = vadd.xlane.f32.xlu0 %v1077
        %v1079 = vpop.xlane.xlu0 %1078
        %v1080 = vsel %vm1049, %v1071, 0.0
        %1081 = vadd.xlane.f32.xlu0 %v1080
        %v1082 = vpop.xlane.xlu0 %1081
        %v1083 = vsel %vm1049, %v1073, 0.0
        %1084 = vadd.xlane.f32.xlu0 %v1083
        %v1085 = vpop.xlane.xlu0 %1084
        %v1086 = vrcp.pop %v1076
        %v1087 = vrcp.pop %v1079
        %v1088 = vrcp.pop %v1082
        %v1089 = vrcp.pop %v1085
        %v1090 = vmul.f32 %v1067, %v1086
        %v1091 = vmul.f32 %v1069, %v1087
        %v1092 = vmul.f32 %v1071, %v1088
        %v1093 = vmul.f32 %v1073, %v1089
        %v1094 = vpack.c.bf16 %v1090, %v1090
        %v1095 = vpack.c.bf16 %v1091, %v1091
        %v1096 = vpack.c.bf16 %v1092, %v1092
        %v1097 = vpack.c.bf16 %v1093, %v1093
        %1098 = vrot.lane.b32.xlu0 %v848, 64
        %v1099 = vpop.permute.xlu0 %1098
        %vm1100 = vcmask 39936
        %v1102 = vsel %vm1100, %v1094, 0
        %vm1104 = vcmask 1041408
        %vm1105 = vcmask 1042432
        %v1106 = vsel %vm1104, 4294967295, 65535
        %v1107 = vsel %vm1105, %v1106, 0
        %v1109 = vand.u32 %v1099, %v1107
        %1111 = vmatprep.subr.bf16.mxu0 0
        %1112 = vmatpush1.bf16.msra.mxu0 %v1109
        %1113 = vmatprep.subr.bf16.mxu0 0
        %1114 = vmatpush1.bf16.msra.mxu0 0
        %1115 = vmatprep.subr.bf16.mxu0 0
        %1116 = vmatpush1.bf16.msra.mxu0 0
        %1117 = vmatprep.subr.bf16.mxu0 0
        %1118 = vmatpush1.bf16.msra.mxu0 0
        %1119 = vmatprep.subr.bf16.mxu0 0
        %1120 = vmatpush1.bf16.msra.mxu0 0
        %1121 = vmatprep.subr.bf16.mxu0 0
        %1122 = vmatpush1.bf16.msra.mxu0 0
        %1123 = vmatprep.subr.bf16.mxu0 0
        %1124 = vmatpush1.bf16.msra.mxu0 0
        %1125 = vmatprep.subr.bf16.mxu0 0
        %1126 = vmatpush1.bf16.msra.mxu0 0
        %1127 = vmatprep.subr.bf16.mxu0 0
        %1128 = vmatpush1.bf16.msra.mxu0 0
        %1129 = vmatprep.subr.bf16.mxu0 0
        %1130 = vmatpush1.bf16.msra.mxu0 0
        %1131 = vmatprep.subr.bf16.mxu0 0
        %1132 = vmatpush1.bf16.msra.mxu0 0
        %1133 = vmatprep.subr.bf16.mxu0 0
        %1134 = vmatpush1.bf16.msra.mxu0 0
        %1135 = vmatprep.subr.bf16.mxu0 0
        %1136 = vmatpush1.bf16.msra.mxu0 0
        %1137 = vmatprep.subr.bf16.mxu0 0
        %1138 = vmatpush1.bf16.msra.mxu0 0
        %1139 = vmatprep.subr.bf16.mxu0 0
        %1140 = vmatpush1.bf16.msra.mxu0 0
        %1141 = vmatprep.subr.bf16.mxu0 0
        %1142 = vmatpush1.bf16.msra.mxu0 0
        %1143 = vmatprep.mubr.bf16.mxu0 0
        %1144 = vmatmul.mubr.bf16.gmra.mrb[0].mxu0 %v1102
        %v1145 = vpop.f32.mrb[0].mxu0
        %v1146 = vadd.f32 0.0, %v1145
        %v1147 = vpop.f32.mrb[0].mxu0
        %v1148 = vpop.f32.mrb[0].mxu0
        %v1149 = vpop.f32.mrb[0].mxu0
        %1150 = vdwg.mxu0
        %1151 = vrot.lane.b32.xlu0 %v851, 64
        %v1152 = vpop.permute.xlu0 %1151
        %v1154 = vsel %vm1100, %v1095, 0
        %v1157 = vand.u32 %v1152, %v1107
        %1159 = vmatprep.subr.bf16.mxu0 0
        %1160 = vmatpush1.bf16.msra.mxu0 %v1157
        %1161 = vmatprep.subr.bf16.mxu0 0
        %1162 = vmatpush1.bf16.msra.mxu0 0
        %1163 = vmatprep.subr.bf16.mxu0 0
        %1164 = vmatpush1.bf16.msra.mxu0 0
        %1165 = vmatprep.subr.bf16.mxu0 0
        %1166 = vmatpush1.bf16.msra.mxu0 0
        %1167 = vmatprep.subr.bf16.mxu0 0
        %1168 = vmatpush1.bf16.msra.mxu0 0
        %1169 = vmatprep.subr.bf16.mxu0 0
        %1170 = vmatpush1.bf16.msra.mxu0 0
        %1171 = vmatprep.subr.bf16.mxu0 0
        %1172 = vmatpush1.bf16.msra.mxu0 0
        %1173 = vmatprep.subr.bf16.mxu0 0
        %1174 = vmatpush1.bf16.msra.mxu0 0
        %1175 = vmatprep.subr.bf16.mxu0 0
        %1176 = vmatpush1.bf16.msra.mxu0 0
        %1177 = vmatprep.subr.bf16.mxu0 0
        %1178 = vmatpush1.bf16.msra.mxu0 0
        %1179 = vmatprep.subr.bf16.mxu0 0
        %1180 = vmatpush1.bf16.msra.mxu0 0
        %1181 = vmatprep.subr.bf16.mxu0 0
        %1182 = vmatpush1.bf16.msra.mxu0 0
        %1183 = vmatprep.subr.bf16.mxu0 0
        %1184 = vmatpush1.bf16.msra.mxu0 0
        %1185 = vmatprep.subr.bf16.mxu0 0
        %1186 = vmatpush1.bf16.msra.mxu0 0
        %1187 = vmatprep.subr.bf16.mxu0 0
        %1188 = vmatpush1.bf16.msra.mxu0 0
        %1189 = vmatprep.subr.bf16.mxu0 0
        %1190 = vmatpush1.bf16.msra.mxu0 0
        %1191 = vmatprep.mubr.bf16.mxu0 0
        %1192 = vmatmul.mubr.bf16.gmra.mrb[0].mxu0 %v1154
        %v1193 = vpop.f32.mrb[0].mxu0
        %v1194 = vadd.f32 0.0, %v1193
        %v1195 = vpop.f32.mrb[0].mxu0
        %v1196 = vpop.f32.mrb[0].mxu0
        %v1197 = vpop.f32.mrb[0].mxu0
        %1198 = vdwg.mxu0
        %1199 = vrot.lane.b32.xlu0 %v853, 64
        %v1200 = vpop.permute.xlu0 %1199
        %v1202 = vsel %vm1100, %v1096, 0
        %v1205 = vand.u32 %v1200, %v1107
        %1207 = vmatprep.subr.bf16.mxu0 0
        %1208 = vmatpush1.bf16.msra.mxu0 %v1205
        %1209 = vmatprep.subr.bf16.mxu0 0
        %1210 = vmatpush1.bf16.msra.mxu0 0
        %1211 = vmatprep.subr.bf16.mxu0 0
        %1212 = vmatpush1.bf16.msra.mxu0 0
        %1213 = vmatprep.subr.bf16.mxu0 0
        %1214 = vmatpush1.bf16.msra.mxu0 0
        %1215 = vmatprep.subr.bf16.mxu0 0
        %1216 = vmatpush1.bf16.msra.mxu0 0
        %1217 = vmatprep.subr.bf16.mxu0 0
        %1218 = vmatpush1.bf16.msra.mxu0 0
        %1219 = vmatprep.subr.bf16.mxu0 0
        %1220 = vmatpush1.bf16.msra.mxu0 0
        %1221 = vmatprep.subr.bf16.mxu0 0
        %1222 = vmatpush1.bf16.msra.mxu0 0
        %1223 = vmatprep.subr.bf16.mxu0 0
        %1224 = vmatpush1.bf16.msra.mxu0 0
        %1225 = vmatprep.subr.bf16.mxu0 0
        %1226 = vmatpush1.bf16.msra.mxu0 0
        %1227 = vmatprep.subr.bf16.mxu0 0
        %1228 = vmatpush1.bf16.msra.mxu0 0
        %1229 = vmatprep.subr.bf16.mxu0 0
        %1230 = vmatpush1.bf16.msra.mxu0 0
        %1231 = vmatprep.subr.bf16.mxu0 0
        %1232 = vmatpush1.bf16.msra.mxu0 0
        %1233 = vmatprep.subr.bf16.mxu0 0
        %1234 = vmatpush1.bf16.msra.mxu0 0
        %1235 = vmatprep.subr.bf16.mxu0 0
        %1236 = vmatpush1.bf16.msra.mxu0 0
        %1237 = vmatprep.subr.bf16.mxu0 0
        %1238 = vmatpush1.bf16.msra.mxu0 0
        %1239 = vmatprep.mubr.bf16.mxu0 0
        %1240 = vmatmul.mubr.bf16.gmra.mrb[0].mxu0 %v1202
        %v1241 = vpop.f32.mrb[0].mxu0
        %v1242 = vadd.f32 0.0, %v1241
        %v1243 = vpop.f32.mrb[0].mxu0
        %v1244 = vpop.f32.mrb[0].mxu0
        %v1245 = vpop.f32.mrb[0].mxu0
        %1246 = vdwg.mxu0
        %1247 = vrot.lane.b32.xlu0 %v855, 64
        %v1248 = vpop.permute.xlu0 %1247
        %v1250 = vsel %vm1100, %v1097, 0
        %v1253 = vand.u32 %v1248, %v1107
        %1255 = vmatprep.subr.bf16.mxu0 0
        %1256 = vmatpush1.bf16.msra.mxu0 %v1253
        %1257 = vmatprep.subr.bf16.mxu0 0
        %1258 = vmatpush1.bf16.msra.mxu0 0
        %1259 = vmatprep.subr.bf16.mxu0 0
        %1260 = vmatpush1.bf16.msra.mxu0 0
        %1261 = vmatprep.subr.bf16.mxu0 0
        %1262 = vmatpush1.bf16.msra.mxu0 0
        %1263 = vmatprep.subr.bf16.mxu0 0
        %1264 = vmatpush1.bf16.msra.mxu0 0
        %1265 = vmatprep.subr.bf16.mxu0 0
        %1266 = vmatpush1.bf16.msra.mxu0 0
        %1267 = vmatprep.subr.bf16.mxu0 0
        %1268 = vmatpush1.bf16.msra.mxu0 0
        %1269 = vmatprep.subr.bf16.mxu0 0
        %1270 = vmatpush1.bf16.msra.mxu0 0
        %1271 = vmatprep.subr.bf16.mxu0 0
        %1272 = vmatpush1.bf16.msra.mxu0 0
        %1273 = vmatprep.subr.bf16.mxu0 0
        %1274 = vmatpush1.bf16.msra.mxu0 0
        %1275 = vmatprep.subr.bf16.mxu0 0
        %1276 = vmatpush1.bf16.msra.mxu0 0
        %1277 = vmatprep.subr.bf16.mxu0 0
        %1278 = vmatpush1.bf16.msra.mxu0 0
        %1279 = vmatprep.subr.bf16.mxu0 0
        %1280 = vmatpush1.bf16.msra.mxu0 0
        %1281 = vmatprep.subr.bf16.mxu0 0
        %1282 = vmatpush1.bf16.msra.mxu0 0
        %1283 = vmatprep.subr.bf16.mxu0 0
        %1284 = vmatpush1.bf16.msra.mxu0 0
        %1285 = vmatprep.subr.bf16.mxu0 0
        %1286 = vmatpush1.bf16.msra.mxu0 0
        %1287 = vmatprep.mubr.bf16.mxu0 0
        %1288 = vmatmul.mubr.bf16.gmra.mrb[0].mxu0 %v1250
        %v1289 = vpop.f32.mrb[0].mxu0
        %v1290 = vadd.f32 0.0, %v1289
        %v1291 = vpop.f32.mrb[0].mxu0
        %v1292 = vpop.f32.mrb[0].mxu0
        %v1293 = vpop.f32.mrb[0].mxu0
        %1294 = vdwg.mxu0
        %1296 = vrot.lane.b32.xlu0 %v1194, 8
        %v1297 = vpop.permute.xlu0 %1296
        %1300 = vrot.lane.b32.xlu0 %v1242, 16
        %v1301 = vpop.permute.xlu0 %1300
        %1304 = vrot.lane.b32.xlu0 %v1290, 24
        %v1305 = vpop.permute.xlu0 %1304
        %v1307 = vsel %vm858, %v1146, %v1297
        %vm1308 = vcmask 130048
        %v1309 = vsel %vm1308, %v1307, %v1301
        %vm1310 = vcmask 195584
        %v1311 = vsel %vm1310, %v1309, %v1305
        %v1312 = vpack.c.bf16 %v1311, %v1311
        %v1313 = vld [vmem:[%s7] sm:$0xf]
        %v1314 = vld [vmem:[%s7 + $0x4] sm:$0xf]
        %v1315 = vld [vmem:[%s7 + $0x8] sm:$0xf]
        %v1316 = vld [vmem:[%s7 + $0xc] sm:$0xf]
        %v1321 = vunpack.c.l.b16 %v1313
        %v1322 = vunpack.c.l.b16 %v1314
        %v1323 = vunpack.c.l.b16 %v1315
        %v1324 = vunpack.c.l.b16 %v1316
        %v1325 = vpack.c.b16 %v1322, %v1321
        %v1326 = vpack.c.b16 %v1324, %v1323
        %v1330 = vsel %vm804, %v1312, 0
        %1332 = vmatprep.subr.bf16.mxu0 0
        %1333 = vmatpush1.bf16.msra.mxu0 %v1325
        %1334 = vmatprep.subr.bf16.mxu0 0
        %1335 = vmatpush1.bf16.msra.mxu0 %v1326
        %1336 = vmatprep.subr.bf16.mxu0 0
        %1337 = vmatpush1.bf16.msra.mxu0 0
        %1338 = vmatprep.subr.bf16.mxu0 0
        %1339 = vmatpush1.bf16.msra.mxu0 0
        %1340 = vmatprep.subr.bf16.mxu0 0
        %1341 = vmatpush1.bf16.msra.mxu0 0
        %1342 = vmatprep.subr.bf16.mxu0 0
        %1343 = vmatpush1.bf16.msra.mxu0 0
        %1344 = vmatprep.subr.bf16.mxu0 0
        %1345 = vmatpush1.bf16.msra.mxu0 0
        %1346 = vmatprep.subr.bf16.mxu0 0
        %1347 = vmatpush1.bf16.msra.mxu0 0
        %1348 = vmatprep.subr.bf16.mxu0 0
        %1349 = vmatpush1.bf16.msra.mxu0 0
        %1350 = vmatprep.subr.bf16.mxu0 0
        %1351 = vmatpush1.bf16.msra.mxu0 0
        %1352 = vmatprep.subr.bf16.mxu0 0
        %1353 = vmatpush1.bf16.msra.mxu0 0
        %1354 = vmatprep.subr.bf16.mxu0 0
        %1355 = vmatpush1.bf16.msra.mxu0 0
        %1356 = vmatprep.subr.bf16.mxu0 0
        %1357 = vmatpush1.bf16.msra.mxu0 0
        %1358 = vmatprep.subr.bf16.mxu0 0
        %1359 = vmatpush1.bf16.msra.mxu0 0
        %1360 = vmatprep.subr.bf16.mxu0 0
        %1361 = vmatpush1.bf16.msra.mxu0 0
        %1362 = vmatprep.subr.bf16.mxu0 0
        %1363 = vmatpush1.bf16.msra.mxu0 0
        %1364 = vmatprep.mubr.bf16.mxu0 0
        %1365 = vmatmul.mubr.bf16.gmra.mrb[0].mxu0 %v1330
        %v1366 = vpop.f32.mrb[0].mxu0
        %v1367 = vadd.f32 0.0, %v1366
        %v1368 = vpop.f32.mrb[0].mxu0
        %v1369 = vpop.f32.mrb[0].mxu0
        %v1370 = vpop.f32.mrb[0].mxu0
        %1371 = vdwg.mxu0
        %v1372 = vadd.f32 %v744, %v1367
        %v1373 = vld [vmem:[%s8] sm:$0x1]
        %v1375 = vlaneseq
        %v1376 = vshrl.u32 %v1375, 7
        %v1377 = vsub.s32 0, %v1376
        %v1378 = vrot.slane %v1373, %v1377
        %v1380 = vadd.f32 %v1372, %v1378
        %v1381 = vld [vmem:[%s9] sm:$0x1]
        %v1382 = vld [vmem:[%s10] sm:$0x1]
        %v1383 = vsel %vm751, %v1380, 0.0
        %1384 = vadd.xlane.f32.xlu0 %v1383
        %v1385 = vpop.xlane.xlu0 %1384
        %v1386 = vmul.f32 %v1385, %v755
        %v1387 = vsub.f32 %v1380, %v1386
        %v1388 = vmul.f32 %v1387, %v1387
        %v1389 = vsel %vm751, %v1388, 0.0
        %1390 = vadd.xlane.f32.xlu0 %v1389
        %v1391 = vpop.xlane.xlu0 %1390
        %v1392 = vmul.f32 %v1391, %v755
        %v1393 = vadd.f32 %v1392, 1e-06
        %v1394 = vrsqrt.pop %v1393
        %v1395 = vmul.f32 %v1387, %v1394
        %v1397 = vlaneseq
        %v1398 = vshrl.u32 %v1397, 7
        %v1399 = vsub.s32 0, %v1398
        %v1400 = vrot.slane %v1381, %v1399
        %v1402 = vmul.f32 %v1395, %v1400
        %v1404 = vlaneseq
        %v1405 = vshrl.u32 %v1404, 7
        %v1406 = vsub.s32 0, %v1405
        %v1407 = vrot.slane %v1382, %v1406
        %v1409 = vadd.f32 %v1402, %v1407
        %v1410 = vpack.c.bf16 %v1409, %v1409
        %v1411 = vld [vmem:[%s11] sm:$0xf]
        %v1412 = vld [vmem:[%s11 + $0x4] sm:$0xf]
        %v1413 = vld [vmem:[%s11 + $0x8] sm:$0xf]
        %v1414 = vld [vmem:[%s11 + $0xc] sm:$0xf]
        %v1415 = vld [vmem:[%s12] sm:$0x1]
        %v1417 = vlaneseq
        %v1418 = vshrl.u32 %v1417, 7
        %v1419 = vsub.s32 0, %v1418
        %v1420 = vrot.slane %v1415, %v1419
        %v1426 = vunpack.c.l.b16 %v1411
        %v1427 = vunpack.c.l.b16 %v1412
        %v1428 = vunpack.c.l.b16 %v1413
        %v1429 = vunpack.c.l.b16 %v1414
        %v1430 = vpack.c.b16 %v1427, %v1426
        %v1431 = vpack.c.b16 %v1429, %v1428
        %v1435 = vsel %vm804, %v1410, 0
        %1437 = vmatprep.subr.bf16.mxu0 0
        %1438 = vmatpush1.bf16.msra.mxu0 %v1430
        %1439 = vmatprep.subr.bf16.mxu0 0
        %1440 = vmatpush1.bf16.msra.mxu0 %v1431
        %1441 = vmatprep.subr.bf16.mxu0 0
        %1442 = vmatpush1.bf16.msra.mxu0 0
        %1443 = vmatprep.subr.bf16.mxu0 0
        %1444 = vmatpush1.bf16.msra.mxu0 0
        %1445 = vmatprep.subr.bf16.mxu0 0
        %1446 = vmatpush1.bf16.msra.mxu0 0
        %1447 = vmatprep.subr.bf16.mxu0 0
        %1448 = vmatpush1.bf16.msra.mxu0 0
        %1449 = vmatprep.subr.bf16.mxu0 0
        %1450 = vmatpush1.bf16.msra.mxu0 0
        %1451 = vmatprep.subr.bf16.mxu0 0
        %1452 = vmatpush1.bf16.msra.mxu0 0
        %1453 = vmatprep.subr.bf16.mxu0 0
        %1454 = vmatpush1.bf16.msra.mxu0 0
        %1455 = vmatprep.subr.bf16.mxu0 0
        %1456 = vmatpush1.bf16.msra.mxu0 0
        %1457 = vmatprep.subr.bf16.mxu0 0
        %1458 = vmatpush1.bf16.msra.mxu0 0
        %1459 = vmatprep.subr.bf16.mxu0 0
        %1460 = vmatpush1.bf16.msra.mxu0 0
        %1461 = vmatprep.subr.bf16.mxu0 0
        %1462 = vmatpush1.bf16.msra.mxu0 0
        %1463 = vmatprep.subr.bf16.mxu0 0
        %1464 = vmatpush1.bf16.msra.mxu0 0
        %1465 = vmatprep.subr.bf16.mxu0 0
        %1466 = vmatpush1.bf16.msra.mxu0 0
        %1467 = vmatprep.subr.bf16.mxu0 0
        %1468 = vmatpush1.bf16.msra.mxu0 0
        %1469 = vmatprep.mubr.bf16.mxu0 0
        %1470 = vmatmul.mubr.bf16.gmra.mrb[0].mxu0 %v1435
        %v1471 = vpop.f32.mrb[0].mxu0
        %v1472 = vadd.f32 %v1420, %v1471
        %v1473 = vpop.f32.mrb[0].mxu0
        %v1474 = vpop.f32.mrb[0].mxu0
        %v1475 = vpop.f32.mrb[0].mxu0
        %1476 = vdwg.mxu0
        %v1477 = vmul.f32 %v1472, %v1472
        %v1478 = vmul.f32 %v1472, %v1477
        %v1479 = vmul.f32 %v1478, 0.044715
        %v1480 = vadd.f32 %v1472, %v1479
        %v1481 = vmul.f32 %v1480, 0.7978846
        %v1482 = vtanh.pop %v1481
        %v1483 = vadd.f32 %v1482, 1.0
        %v1484 = vmul.f32 %v1483, 0.5
        %v1485 = vmul.f32 %v1472, %v1484
        %v1486 = vpack.c.bf16 %v1485, %v1485
        %v1487 = vld [vmem:[%s13] sm:$0xf]
        %v1488 = vld [vmem:[%s13 + $0x4] sm:$0xf]
        %v1489 = vld [vmem:[%s13 + $0x8] sm:$0xf]
        %v1490 = vld [vmem:[%s13 + $0xc] sm:$0xf]
        %v1491 = vld [vmem:[%s13 + $0x10] sm:$0xf]
        %v1492 = vld [vmem:[%s13 + $0x14] sm:$0xf]
        %v1493 = vld [vmem:[%s13 + $0x18] sm:$0xf]
        %v1494 = vld [vmem:[%s13 + $0x1c] sm:$0xf]
        %v1495 = vld [vmem:[%s14] sm:$0x1]
        %v1497 = vlaneseq
        %v1498 = vshrl.u32 %v1497, 7
        %v1499 = vsub.s32 0, %v1498
        %v1500 = vrot.slane %v1495, %v1499
        %v1510 = vunpack.c.l.b16 %v1487
        %v1511 = vunpack.c.l.b16 %v1488
        %v1512 = vunpack.c.l.b16 %v1489
        %v1513 = vunpack.c.l.b16 %v1490
        %v1514 = vunpack.c.l.b16 %v1491
        %v1515 = vunpack.c.l.b16 %v1492
        %v1516 = vunpack.c.l.b16 %v1493
        %v1517 = vunpack.c.l.b16 %v1494
        %v1518 = vpack.c.b16 %v1511, %v1510
        %v1519 = vpack.c.b16 %v1513, %v1512
        %v1520 = vpack.c.b16 %v1515, %v1514
        %v1521 = vpack.c.b16 %v1517, %v1516
        %v1527 = vsel %vm705, %v1486, 0
        %1529 = vmatprep.subr.bf16.mxu0 0
        %1530 = vmatpush1.bf16.msra.mxu0 %v1518
        %1531 = vmatprep.subr.bf16.mxu0 0
        %1532 = vmatpush1.bf16.msra.mxu0 %v1519
        %1533 = vmatprep.subr.bf16.mxu0 0
        %1534 = vmatpush1.bf16.msra.mxu0 %v1520
        %1535 = vmatprep.subr.bf16.mxu0 0
        %1536 = vmatpush1.bf16.msra.mxu0 %v1521
        %1537 = vmatprep.subr.bf16.mxu0 0
        %1538 = vmatpush1.bf16.msra.mxu0 0
        %1539 = vmatprep.subr.bf16.mxu0 0
        %1540 = vmatpush1.bf16.msra.mxu0 0
        %1541 = vmatprep.subr.bf16.mxu0 0
        %1542 = vmatpush1.bf16.msra.mxu0 0
        %1543 = vmatprep.subr.bf16.mxu0 0
        %1544 = vmatpush1.bf16.msra.mxu0 0
        %1545 = vmatprep.subr.bf16.mxu0 0
        %1546 = vmatpush1.bf16.msra.mxu0 0
        %1547 = vmatprep.subr.bf16.mxu0 0
        %1548 = vmatpush1.bf16.msra.mxu0 0
        %1549 = vmatprep.subr.bf16.mxu0 0
        %1550 = vmatpush1.bf16.msra.mxu0 0
        %1551 = vmatprep.subr.bf16.mxu0 0
        %1552 = vmatpush1.bf16.msra.mxu0 0
        %1553 = vmatprep.subr.bf16.mxu0 0
        %1554 = vmatpush1.bf16.msra.mxu0 0
        %1555 = vmatprep.subr.bf16.mxu0 0
        %1556 = vmatpush1.bf16.msra.mxu0 0
        %1557 = vmatprep.subr.bf16.mxu0 0
        %1558 = vmatpush1.bf16.msra.mxu0 0
        %1559 = vmatprep.subr.bf16.mxu0 0
        %1560 = vmatpush1.bf16.msra.mxu0 0
        %1561 = vmatprep.mubr.bf16.mxu0 0
        %1562 = vmatmul.mubr.bf16.gmra.mrb[0].mxu0 %v1527
        %v1563 = vpop.f32.mrb[0].mxu0
        %v1564 = vadd.f32 %v1500, %v1563
        %v1565 = vpop.f32.mrb[0].mxu0
        %v1566 = vpop.f32.mrb[0].mxu0
        %v1567 = vpop.f32.mrb[0].mxu0
        %1568 = vdwg.mxu0
        %v1569 = vadd.f32 %v1380, %v1564
        %s1570 = scalar_lea.vmem %s3, 1
        %v1571 = vld [vmem:[%s1570] sm:$0x1]
        %s1572 = scalar_lea.vmem %s4, 1
        %v1573 = vld [vmem:[%s1572] sm:$0x1]
        %v1574 = vsel %vm751, %v1569, 0.0
        %1575 = vadd.xlane.f32.xlu0 %v1574
        %v1576 = vpop.xlane.xlu0 %1575
        %v1577 = vmul.f32 %v1576, %v755
        %v1578 = vsub.f32 %v1569, %v1577
        %v1579 = vmul.f32 %v1578, %v1578
        %v1580 = vsel %vm751, %v1579, 0.0
        %1581 = vadd.xlane.f32.xlu0 %v1580
        %v1582 = vpop.xlane.xlu0 %1581
        %v1583 = vmul.f32 %v1582, %v755
        %v1584 = vadd.f32 %v1583, 1e-06
        %v1585 = vrsqrt.pop %v1584
        %v1586 = vmul.f32 %v1578, %v1585
        %v1588 = vlaneseq
        %v1589 = vshrl.u32 %v1588, 7
        %v1590 = vsub.s32 0, %v1589
        %v1591 = vrot.slane %v1571, %v1590
        %v1593 = vmul.f32 %v1586, %v1591
        %v1595 = vlaneseq
        %v1596 = vshrl.u32 %v1595, 7
        %v1597 = vsub.s32 0, %v1596
        %v1598 = vrot.slane %v1573, %v1597
        %v1600 = vadd.f32 %v1593, %v1598
        %v1601 = vpack.c.bf16 %v1600, %v1600
        %s1602 = scalar_lea.vmem %s5, 16
        %v1603 = vld [vmem:[%s1602] sm:$0xf]
        %v1604 = vld [vmem:[%s1602 + $0x4] sm:$0xf]
        %v1605 = vld [vmem:[%s1602 + $0x8] sm:$0xf]
        %v1606 = vld [vmem:[%s1602 + $0xc] sm:$0xf]
        %s1607 = scalar_lea.vmem %s6, 1
        %v1608 = vld [vmem:[%s1607] sm:$0x1]
        %v1610 = vlaneseq
        %v1611 = vshrl.u32 %v1610, 7
        %v1612 = vsub.s32 0, %v1611
        %v1613 = vrot.slane %v1608, %v1612
        %v1619 = vunpack.c.l.b16 %v1603
        %v1620 = vunpack.c.l.b16 %v1604
        %v1621 = vunpack.c.l.b16 %v1605
        %v1622 = vunpack.c.l.b16 %v1606
        %v1623 = vpack.c.b16 %v1620, %v1619
        %v1624 = vpack.c.b16 %v1622, %v1621
        %v1628 = vsel %vm804, %v1601, 0
        %1630 = vmatprep.subr.bf16.mxu0 0
        %1631 = vmatpush1.bf16.msra.mxu0 %v1623
        %1632 = vmatprep.subr.bf16.mxu0 0
        %1633 = vmatpush1.bf16.msra.mxu0 %v1624
        %1634 = vmatprep.subr.bf16.mxu0 0
        %1635 = vmatpush1.bf16.msra.mxu0 0
        %1636 = vmatprep.subr.bf16.mxu0 0
        %1637 = vmatpush1.bf16.msra.mxu0 0
        %1638 = vmatprep.subr.bf16.mxu0 0
        %1639 = vmatpush1.bf16.msra.mxu0 0
        %1640 = vmatprep.subr.bf16.mxu0 0
        %1641 = vmatpush1.bf16.msra.mxu0 0
        %1642 = vmatprep.subr.bf16.mxu0 0
        %1643 = vmatpush1.bf16.msra.mxu0 0
        %1644 = vmatprep.subr.bf16.mxu0 0
        %1645 = vmatpush1.bf16.msra.mxu0 0
        %1646 = vmatprep.subr.bf16.mxu0 0
        %1647 = vmatpush1.bf16.msra.mxu0 0
        %1648 = vmatprep.subr.bf16.mxu0 0
        %1649 = vmatpush1.bf16.msra.mxu0 0
        %1650 = vmatprep.subr.bf16.mxu0 0
        %1651 = vmatpush1.bf16.msra.mxu0 0
        %1652 = vmatprep.subr.bf16.mxu0 0
        %1653 = vmatpush1.bf16.msra.mxu0 0
        %1654 = vmatprep.subr.bf16.mxu0 0
        %1655 = vmatpush1.bf16.msra.mxu0 0
        %1656 = vmatprep.subr.bf16.mxu0 0
        %1657 = vmatpush1.bf16.msra.mxu0 0
        %1658 = vmatprep.subr.bf16.mxu0 0
        %1659 = vmatpush1.bf16.msra.mxu0 0
        %1660 = vmatprep.subr.bf16.mxu0 0
        %1661 = vmatpush1.bf16.msra.mxu0 0
        %1662 = vmatprep.mubr.bf16.mxu0 0
        %1663 = vmatmul.mubr.bf16.gmra.mrb[0].mxu0 %v1628
        %v1664 = vpop.f32.mrb[0].mxu0
        %v1665 = vadd.f32 %v1613, %v1664
        %v1666 = vpop.f32.mrb[0].mxu0
        %v1667 = vpop.f32.mrb[0].mxu0
        %v1668 = vpop.f32.mrb[0].mxu0
        %1669 = vdwg.mxu0
        %v1670 = vpack.c.bf16 %v1665, %v1665
        %1672 = vrot.lane.b32.xlu0 %v1670, 120
        %v1673 = vpop.permute.xlu0 %1672
        %1674 = vrot.lane.b32.xlu0 %v1670, 112
        %v1675 = vpop.permute.xlu0 %1674
        %1676 = vrot.lane.b32.xlu0 %v1670, 104
        %v1677 = vpop.permute.xlu0 %1676
        %1678 = vrot.lane.b32.xlu0 %v1670, 96
        %v1679 = vpop.permute.xlu0 %1678
        %v1681 = vsel %vm858, %v1670, 0
        %v1684 = vsel %vm858, %v1679, 0
        %1686 = vmatprep.subr.bf16.mxu0 0
        %1687 = vmatpush1.bf16.xpose.msra.mxu0 %v1684
        %1688 = vmatprep.subr.bf16.mxu0 0
        %1689 = vmatpush1.bf16.xpose.msra.mxu0 0
        %1690 = vmatprep.subr.bf16.mxu0 0
        %1691 = vmatpush1.bf16.xpose.msra.mxu0 0
        %1692 = vmatprep.subr.bf16.mxu0 0
        %1693 = vmatpush1.bf16.xpose.msra.mxu0 0
        %1694 = vmatprep.subr.bf16.mxu0 0
        %1695 = vmatpush1.bf16.xpose.msra.mxu0 0
        %1696 = vmatprep.subr.bf16.mxu0 0
        %1697 = vmatpush1.bf16.xpose.msra.mxu0 0
        %1698 = vmatprep.subr.bf16.mxu0 0
        %1699 = vmatpush1.bf16.xpose.msra.mxu0 0
        %1700 = vmatprep.subr.bf16.mxu0 0
        %1701 = vmatpush1.bf16.xpose.msra.mxu0 0
        %1702 = vmatprep.subr.bf16.mxu0 0
        %1703 = vmatpush1.bf16.xpose.msra.mxu0 0
        %1704 = vmatprep.subr.bf16.mxu0 0
        %1705 = vmatpush1.bf16.xpose.msra.mxu0 0
        %1706 = vmatprep.subr.bf16.mxu0 0
        %1707 = vmatpush1.bf16.xpose.msra.mxu0 0
        %1708 = vmatprep.subr.bf16.mxu0 0
        %1709 = vmatpush1.bf16.xpose.msra.mxu0 0
        %1710 = vmatprep.subr.bf16.mxu0 0
        %1711 = vmatpush1.bf16.xpose.msra.mxu0 0
        %1712 = vmatprep.subr.bf16.mxu0 0
        %1713 = vmatpush1.bf16.xpose.msra.mxu0 0
        %1714 = vmatprep.subr.bf16.mxu0 0
        %1715 = vmatpush1.bf16.xpose.msra.mxu0 0
        %1716 = vmatprep.subr.bf16.mxu0 0
        %1717 = vmatpush1.bf16.xpose.msra.mxu0 0
        %1718 = vmatprep.mubr.bf16.mxu0 0
        %1719 = vmatmul.mubr.bf16.gmra.mrb[0].mxu0 %v1681
        %v1720 = vpop.f32.mrb[0].mxu0
        %v1721 = vadd.f32 0.0, %v1720
        %v1722 = vpop.f32.mrb[0].mxu0
        %v1723 = vpop.f32.mrb[0].mxu0
        %v1724 = vpop.f32.mrb[0].mxu0
        %1725 = vdwg.mxu0
        %1726 = vrot.lane.b32.xlu0 %v1673, 96
        %v1727 = vpop.permute.xlu0 %1726
        %v1729 = vsel %vm858, %v1673, 0
        %v1732 = vsel %vm858, %v1727, 0
        %1734 = vmatprep.subr.bf16.mxu0 0
        %1735 = vmatpush1.bf16.xpose.msra.mxu0 %v1732
        %1736 = vmatprep.subr.bf16.mxu0 0
        %1737 = vmatpush1.bf16.xpose.msra.mxu0 0
        %1738 = vmatprep.subr.bf16.mxu0 0
        %1739 = vmatpush1.bf16.xpose.msra.mxu0 0
        %1740 = vmatprep.subr.bf16.mxu0 0
        %1741 = vmatpush1.bf16.xpose.msra.mxu0 0
        %1742 = vmatprep.subr.bf16.mxu0 0
        %1743 = vmatpush1.bf16.xpose.msra.mxu0 0
        %1744 = vmatprep.subr.bf16.mxu0 0
        %1745 = vmatpush1.bf16.xpose.msra.mxu0 0
        %1746 = vmatprep.subr.bf16.mxu0 0
        %1747 = vmatpush1.bf16.xpose.msra.mxu0 0
        %1748 = vmatprep.subr.bf16.mxu0 0
        %1749 = vmatpush1.bf16.xpose.msra.mxu0 0
        %1750 = vmatprep.subr.bf16.mxu0 0
        %1751 = vmatpush1.bf16.xpose.msra.mxu0 0
        %1752 = vmatprep.subr.bf16.mxu0 0
        %1753 = vmatpush1.bf16.xpose.msra.mxu0 0
        %1754 = vmatprep.subr.bf16.mxu0 0
        %1755 = vmatpush1.bf16.xpose.msra.mxu0 0
        %1756 = vmatprep.subr.bf16.mxu0 0
        %1757 = vmatpush1.bf16.xpose.msra.mxu0 0
        %1758 = vmatprep.subr.bf16.mxu0 0
        %1759 = vmatpush1.bf16.xpose.msra.mxu0 0
        %1760 = vmatprep.subr.bf16.mxu0 0
        %1761 = vmatpush1.bf16.xpose.msra.mxu0 0
        %1762 = vmatprep.subr.bf16.mxu0 0
        %1763 = vmatpush1.bf16.xpose.msra.mxu0 0
        %1764 = vmatprep.subr.bf16.mxu0 0
        %1765 = vmatpush1.bf16.xpose.msra.mxu0 0
        %1766 = vmatprep.mubr.bf16.mxu0 0
        %1767 = vmatmul.mubr.bf16.gmra.mrb[0].mxu0 %v1729
        %v1768 = vpop.f32.mrb[0].mxu0
        %v1769 = vadd.f32 0.0, %v1768
        %v1770 = vpop.f32.mrb[0].mxu0
        %v1771 = vpop.f32.mrb[0].mxu0
        %v1772 = vpop.f32.mrb[0].mxu0
        %1773 = vdwg.mxu0
        %1774 = vrot.lane.b32.xlu0 %v1675, 96
        %v1775 = vpop.permute.xlu0 %1774
        %v1777 = vsel %vm858, %v1675, 0
        %v1780 = vsel %vm858, %v1775, 0
        %1782 = vmatprep.subr.bf16.mxu0 0
        %1783 = vmatpush1.bf16.xpose.msra.mxu0 %v1780
        %1784 = vmatprep.subr.bf16.mxu0 0
        %1785 = vmatpush1.bf16.xpose.msra.mxu0 0
        %1786 = vmatprep.subr.bf16.mxu0 0
        %1787 = vmatpush1.bf16.xpose.msra.mxu0 0
        %1788 = vmatprep.subr.bf16.mxu0 0
        %1789 = vmatpush1.bf16.xpose.msra.mxu0 0
        %1790 = vmatprep.subr.bf16.mxu0 0
        %1791 = vmatpush1.bf16.xpose.msra.mxu0 0
        %1792 = vmatprep.subr.bf16.mxu0 0
        %1793 = vmatpush1.bf16.xpose.msra.mxu0 0
        %1794 = vmatprep.subr.bf16.mxu0 0
        %1795 = vmatpush1.bf16.xpose.msra.mxu0 0
        %1796 = vmatprep.subr.bf16.mxu0 0
        %1797 = vmatpush1.bf16.xpose.msra.mxu0 0
        %1798 = vmatprep.subr.bf16.mxu0 0
        %1799 = vmatpush1.bf16.xpose.msra.mxu0 0
        %1800 = vmatprep.subr.bf16.mxu0 0
        %1801 = vmatpush1.bf16.xpose.msra.mxu0 0
        %1802 = vmatprep.subr.bf16.mxu0 0
        %1803 = vmatpush1.bf16.xpose.msra.mxu0 0
        %1804 = vmatprep.subr.bf16.mxu0 0
        %1805 = vmatpush1.bf16.xpose.msra.mxu0 0
        %1806 = vmatprep.subr.bf16.mxu0 0
        %1807 = vmatpush1.bf16.xpose.msra.mxu0 0
        %1808 = vmatprep.subr.bf16.mxu0 0
        %1809 = vmatpush1.bf16.xpose.msra.mxu0 0
        %1810 = vmatprep.subr.bf16.mxu0 0
        %1811 = vmatpush1.bf16.xpose.msra.mxu0 0
        %1812 = vmatprep.subr.bf16.mxu0 0
        %1813 = vmatpush1.bf16.xpose.msra.mxu0 0
        %1814 = vmatprep.mubr.bf16.mxu0 0
        %1815 = vmatmul.mubr.bf16.gmra.mrb[0].mxu0 %v1777
        %v1816 = vpop.f32.mrb[0].mxu0
        %v1817 = vadd.f32 0.0, %v1816
        %v1818 = vpop.f32.mrb[0].mxu0
        %v1819 = vpop.f32.mrb[0].mxu0
        %v1820 = vpop.f32.mrb[0].mxu0
        %1821 = vdwg.mxu0
        %1822 = vrot.lane.b32.xlu0 %v1677, 96
        %v1823 = vpop.permute.xlu0 %1822
        %v1825 = vsel %vm858, %v1677, 0
        %v1828 = vsel %vm858, %v1823, 0
        %1830 = vmatprep.subr.bf16.mxu0 0
        %1831 = vmatpush1.bf16.xpose.msra.mxu0 %v1828
        %1832 = vmatprep.subr.bf16.mxu0 0
        %1833 = vmatpush1.bf16.xpose.msra.mxu0 0
        %1834 = vmatprep.subr.bf16.mxu0 0
        %1835 = vmatpush1.bf16.xpose.msra.mxu0 0
        %1836 = vmatprep.subr.bf16.mxu0 0
        %1837 = vmatpush1.bf16.xpose.msra.mxu0 0
        %1838 = vmatprep.subr.bf16.mxu0 0
        %1839 = vmatpush1.bf16.xpose.msra.mxu0 0
        %1840 = vmatprep.subr.bf16.mxu0 0
        %1841 = vmatpush1.bf16.xpose.msra.mxu0 0
        %1842 = vmatprep.subr.bf16.mxu0 0
        %1843 = vmatpush1.bf16.xpose.msra.mxu0 0
        %1844 = vmatprep.subr.bf16.mxu0 0
        %1845 = vmatpush1.bf16.xpose.msra.mxu0 0
        %1846 = vmatprep.subr.bf16.mxu0 0
        %1847 = vmatpush1.bf16.xpose.msra.mxu0 0
        %1848 = vmatprep.subr.bf16.mxu0 0
        %1849 = vmatpush1.bf16.xpose.msra.mxu0 0
        %1850 = vmatprep.subr.bf16.mxu0 0
        %1851 = vmatpush1.bf16.xpose.msra.mxu0 0
        %1852 = vmatprep.subr.bf16.mxu0 0
        %1853 = vmatpush1.bf16.xpose.msra.mxu0 0
        %1854 = vmatprep.subr.bf16.mxu0 0
        %1855 = vmatpush1.bf16.xpose.msra.mxu0 0
        %1856 = vmatprep.subr.bf16.mxu0 0
        %1857 = vmatpush1.bf16.xpose.msra.mxu0 0
        %1858 = vmatprep.subr.bf16.mxu0 0
        %1859 = vmatpush1.bf16.xpose.msra.mxu0 0
        %1860 = vmatprep.subr.bf16.mxu0 0
        %1861 = vmatpush1.bf16.xpose.msra.mxu0 0
        %1862 = vmatprep.mubr.bf16.mxu0 0
        %1863 = vmatmul.mubr.bf16.gmra.mrb[0].mxu0 %v1825
        %v1864 = vpop.f32.mrb[0].mxu0
        %v1865 = vadd.f32 0.0, %v1864
        %v1866 = vpop.f32.mrb[0].mxu0
        %v1867 = vpop.f32.mrb[0].mxu0
        %v1868 = vpop.f32.mrb[0].mxu0
        %1869 = vdwg.mxu0
        %v1870 = vsel %vm1049, %v1721, -inf
        %1871 = vmax.xlane.f32.xlu0 %v1870
        %v1872 = vpop.xlane.xlu0 %1871
        %v1873 = vsel %vm1049, %v1769, -inf
        %1874 = vmax.xlane.f32.xlu0 %v1873
        %v1875 = vpop.xlane.xlu0 %1874
        %v1876 = vsel %vm1049, %v1817, -inf
        %1877 = vmax.xlane.f32.xlu0 %v1876
        %v1878 = vpop.xlane.xlu0 %1877
        %v1879 = vsel %vm1049, %v1865, -inf
        %1880 = vmax.xlane.f32.xlu0 %v1879
        %v1881 = vpop.xlane.xlu0 %1880
        %v1882 = vsub.f32 %v1721, %v1872
        %v1883 = vsub.f32 %v1769, %v1875
        %v1884 = vsub.f32 %v1817, %v1878
        %v1885 = vsub.f32 %v1865, %v1881
        %v1886 = vmul.f32 %v1882, 1.442695
        %v1887 = vpow.pop %v1886
        %v1888 = vmul.f32 %v1883, 1.442695
        %v1889 = vpow.pop %v1888
        %v1890 = vmul.f32 %v1884, 1.442695
        %v1891 = vpow.pop %v1890
        %v1892 = vmul.f32 %v1885, 1.442695
        %v1893 = vpow.pop %v1892
        %v1894 = vsel %vm1049, %v1887, 0.0
        %1895 = vadd.xlane.f32.xlu0 %v1894
        %v1896 = vpop.xlane.xlu0 %1895
        %v1897 = vsel %vm1049, %v1889, 0.0
        %1898 = vadd.xlane.f32.xlu0 %v1897
        %v1899 = vpop.xlane.xlu0 %1898
        %v1900 = vsel %vm1049, %v1891, 0.0
        %1901 = vadd.xlane.f32.xlu0 %v1900
        %v1902 = vpop.xlane.xlu0 %1901
        %v1903 = vsel %vm1049, %v1893, 0.0
        %1904 = vadd.xlane.f32.xlu0 %v1903
        %v1905 = vpop.xlane.xlu0 %1904
        %v1906 = vrcp.pop %v1896
        %v1907 = vrcp.pop %v1899
        %v1908 = vrcp.pop %v1902
        %v1909 = vrcp.pop %v1905
        %v1910 = vmul.f32 %v1887, %v1906
        %v1911 = vmul.f32 %v1889, %v1907
        %v1912 = vmul.f32 %v1891, %v1908
        %v1913 = vmul.f32 %v1893, %v1909
        %v1914 = vpack.c.bf16 %v1910, %v1910
        %v1915 = vpack.c.bf16 %v1911, %v1911
        %v1916 = vpack.c.bf16 %v1912, %v1912
        %v1917 = vpack.c.bf16 %v1913, %v1913
        %1918 = vrot.lane.b32.xlu0 %v1670, 64
        %v1919 = vpop.permute.xlu0 %1918
        %v1921 = vsel %vm1100, %v1914, 0
        %v1924 = vand.u32 %v1919, %v1107
        %1926 = vmatprep.subr.bf16.mxu0 0
        %1927 = vmatpush1.bf16.msra.mxu0 %v1924
        %1928 = vmatprep.subr.bf16.mxu0 0
        %1929 = vmatpush1.bf16.msra.mxu0 0
        %1930 = vmatprep.subr.bf16.mxu0 0
        %1931 = vmatpush1.bf16.msra.mxu0 0
        %1932 = vmatprep.subr.bf16.mxu0 0
        %1933 = vmatpush1.bf16.msra.mxu0 0
        %1934 = vmatprep.subr.bf16.mxu0 0
        %1935 = vmatpush1.bf16.msra.mxu0 0
        %1936 = vmatprep.subr.bf16.mxu0 0
        %1937 = vmatpush1.bf16.msra.mxu0 0
        %1938 = vmatprep.subr.bf16.mxu0 0
        %1939 = vmatpush1.bf16.msra.mxu0 0
        %1940 = vmatprep.subr.bf16.mxu0 0
        %1941 = vmatpush1.bf16.msra.mxu0 0
        %1942 = vmatprep.subr.bf16.mxu0 0
        %1943 = vmatpush1.bf16.msra.mxu0 0
        %1944 = vmatprep.subr.bf16.mxu0 0
        %1945 = vmatpush1.bf16.msra.mxu0 0
        %1946 = vmatprep.subr.bf16.mxu0 0
        %1947 = vmatpush1.bf16.msra.mxu0 0
        %1948 = vmatprep.subr.bf16.mxu0 0
        %1949 = vmatpush1.bf16.msra.mxu0 0
        %1950 = vmatprep.subr.bf16.mxu0 0
        %1951 = vmatpush1.bf16.msra.mxu0 0
        %1952 = vmatprep.subr.bf16.mxu0 0
        %1953 = vmatpush1.bf16.msra.mxu0 0
        %1954 = vmatprep.subr.bf16.mxu0 0
        %1955 = vmatpush1.bf16.msra.mxu0 0
        %1956 = vmatprep.subr.bf16.mxu0 0
        %1957 = vmatpush1.bf16.msra.mxu0 0
        %1958 = vmatprep.mubr.bf16.mxu0 0
        %1959 = vmatmul.mubr.bf16.gmra.mrb[0].mxu0 %v1921
        %v1960 = vpop.f32.mrb[0].mxu0
        %v1961 = vadd.f32 0.0, %v1960
        %v1962 = vpop.f32.mrb[0].mxu0
        %v1963 = vpop.f32.mrb[0].mxu0
        %v1964 = vpop.f32.mrb[0].mxu0
        %1965 = vdwg.mxu0
        %1966 = vrot.lane.b32.xlu0 %v1673, 64
        %v1967 = vpop.permute.xlu0 %1966
        %v1969 = vsel %vm1100, %v1915, 0
        %v1972 = vand.u32 %v1967, %v1107
        %1974 = vmatprep.subr.bf16.mxu0 0
        %1975 = vmatpush1.bf16.msra.mxu0 %v1972
        %1976 = vmatprep.subr.bf16.mxu0 0
        %1977 = vmatpush1.bf16.msra.mxu0 0
        %1978 = vmatprep.subr.bf16.mxu0 0
        %1979 = vmatpush1.bf16.msra.mxu0 0
        %1980 = vmatprep.subr.bf16.mxu0 0
        %1981 = vmatpush1.bf16.msra.mxu0 0
        %1982 = vmatprep.subr.bf16.mxu0 0
        %1983 = vmatpush1.bf16.msra.mxu0 0
        %1984 = vmatprep.subr.bf16.mxu0 0
        %1985 = vmatpush1.bf16.msra.mxu0 0
        %1986 = vmatprep.subr.bf16.mxu0 0
        %1987 = vmatpush1.bf16.msra.mxu0 0
        %1988 = vmatprep.subr.bf16.mxu0 0
        %1989 = vmatpush1.bf16.msra.mxu0 0
        %1990 = vmatprep.subr.bf16.mxu0 0
        %1991 = vmatpush1.bf16.msra.mxu0 0
        %1992 = vmatprep.subr.bf16.mxu0 0
        %1993 = vmatpush1.bf16.msra.mxu0 0
        %1994 = vmatprep.subr.bf16.mxu0 0
        %1995 = vmatpush1.bf16.msra.mxu0 0
        %1996 = vmatprep.subr.bf16.mxu0 0
        %1997 = vmatpush1.bf16.msra.mxu0 0
        %1998 = vmatprep.subr.bf16.mxu0 0
        %1999 = vmatpush1.bf16.msra.mxu0 0
        %2000 = vmatprep.subr.bf16.mxu0 0
        %2001 = vmatpush1.bf16.msra.mxu0 0
        %2002 = vmatprep.subr.bf16.mxu0 0
        %2003 = vmatpush1.bf16.msra.mxu0 0
        %2004 = vmatprep.subr.bf16.mxu0 0
        %2005 = vmatpush1.bf16.msra.mxu0 0
        %2006 = vmatprep.mubr.bf16.mxu0 0
        %2007 = vmatmul.mubr.bf16.gmra.mrb[0].mxu0 %v1969
        %v2008 = vpop.f32.mrb[0].mxu0
        %v2009 = vadd.f32 0.0, %v2008
        %v2010 = vpop.f32.mrb[0].mxu0
        %v2011 = vpop.f32.mrb[0].mxu0
        %v2012 = vpop.f32.mrb[0].mxu0
        %2013 = vdwg.mxu0
        %2014 = vrot.lane.b32.xlu0 %v1675, 64
        %v2015 = vpop.permute.xlu0 %2014
        %v2017 = vsel %vm1100, %v1916, 0
        %v2020 = vand.u32 %v2015, %v1107
        %2022 = vmatprep.subr.bf16.mxu0 0
        %2023 = vmatpush1.bf16.msra.mxu0 %v2020
        %2024 = vmatprep.subr.bf16.mxu0 0
        %2025 = vmatpush1.bf16.msra.mxu0 0
        %2026 = vmatprep.subr.bf16.mxu0 0
        %2027 = vmatpush1.bf16.msra.mxu0 0
        %2028 = vmatprep.subr.bf16.mxu0 0
        %2029 = vmatpush1.bf16.msra.mxu0 0
        %2030 = vmatprep.subr.bf16.mxu0 0
        %2031 = vmatpush1.bf16.msra.mxu0 0
        %2032 = vmatprep.subr.bf16.mxu0 0
        %2033 = vmatpush1.bf16.msra.mxu0 0
        %2034 = vmatprep.subr.bf16.mxu0 0
        %2035 = vmatpush1.bf16.msra.mxu0 0
        %2036 = vmatprep.subr.bf16.mxu0 0
        %2037 = vmatpush1.bf16.msra.mxu0 0
        %2038 = vmatprep.subr.bf16.mxu0 0
        %2039 = vmatpush1.bf16.msra.mxu0 0
        %2040 = vmatprep.subr.bf16.mxu0 0
        %2041 = vmatpush1.bf16.msra.mxu0 0
        %2042 = vmatprep.subr.bf16.mxu0 0
        %2043 = vmatpush1.bf16.msra.mxu0 0
        %2044 = vmatprep.subr.bf16.mxu0 0
        %2045 = vmatpush1.bf16.msra.mxu0 0
        %2046 = vmatprep.subr.bf16.mxu0 0
        %2047 = vmatpush1.bf16.msra.mxu0 0
        %2048 = vmatprep.subr.bf16.mxu0 0
        %2049 = vmatpush1.bf16.msra.mxu0 0
        %2050 = vmatprep.subr.bf16.mxu0 0
        %2051 = vmatpush1.bf16.msra.mxu0 0
        %2052 = vmatprep.subr.bf16.mxu0 0
        %2053 = vmatpush1.bf16.msra.mxu0 0
        %2054 = vmatprep.mubr.bf16.mxu0 0
        %2055 = vmatmul.mubr.bf16.gmra.mrb[0].mxu0 %v2017
        %v2056 = vpop.f32.mrb[0].mxu0
        %v2057 = vadd.f32 0.0, %v2056
        %v2058 = vpop.f32.mrb[0].mxu0
        %v2059 = vpop.f32.mrb[0].mxu0
        %v2060 = vpop.f32.mrb[0].mxu0
        %2061 = vdwg.mxu0
        %2062 = vrot.lane.b32.xlu0 %v1677, 64
        %v2063 = vpop.permute.xlu0 %2062
        %v2065 = vsel %vm1100, %v1917, 0
        %v2068 = vand.u32 %v2063, %v1107
        %2070 = vmatprep.subr.bf16.mxu0 0
        %2071 = vmatpush1.bf16.msra.mxu0 %v2068
        %2072 = vmatprep.subr.bf16.mxu0 0
        %2073 = vmatpush1.bf16.msra.mxu0 0
        %2074 = vmatprep.subr.bf16.mxu0 0
        %2075 = vmatpush1.bf16.msra.mxu0 0
        %2076 = vmatprep.subr.bf16.mxu0 0
        %2077 = vmatpush1.bf16.msra.mxu0 0
        %2078 = vmatprep.subr.bf16.mxu0 0
        %2079 = vmatpush1.bf16.msra.mxu0 0
        %2080 = vmatprep.subr.bf16.mxu0 0
        %2081 = vmatpush1.bf16.msra.mxu0 0
        %2082 = vmatprep.subr.bf16.mxu0 0
        %2083 = vmatpush1.bf16.msra.mxu0 0
        %2084 = vmatprep.subr.bf16.mxu0 0
        %2085 = vmatpush1.bf16.msra.mxu0 0
        %2086 = vmatprep.subr.bf16.mxu0 0
        %2087 = vmatpush1.bf16.msra.mxu0 0
        %2088 = vmatprep.subr.bf16.mxu0 0
        %2089 = vmatpush1.bf16.msra.mxu0 0
        %2090 = vmatprep.subr.bf16.mxu0 0
        %2091 = vmatpush1.bf16.msra.mxu0 0
        %2092 = vmatprep.subr.bf16.mxu0 0
        %2093 = vmatpush1.bf16.msra.mxu0 0
        %2094 = vmatprep.subr.bf16.mxu0 0
        %2095 = vmatpush1.bf16.msra.mxu0 0
        %2096 = vmatprep.subr.bf16.mxu0 0
        %2097 = vmatpush1.bf16.msra.mxu0 0
        %2098 = vmatprep.subr.bf16.mxu0 0
        %2099 = vmatpush1.bf16.msra.mxu0 0
        %2100 = vmatprep.subr.bf16.mxu0 0
        %2101 = vmatpush1.bf16.msra.mxu0 0
        %2102 = vmatprep.mubr.bf16.mxu0 0
        %2103 = vmatmul.mubr.bf16.gmra.mrb[0].mxu0 %v2065
        %v2104 = vpop.f32.mrb[0].mxu0
        %v2105 = vadd.f32 0.0, %v2104
        %v2106 = vpop.f32.mrb[0].mxu0
        %v2107 = vpop.f32.mrb[0].mxu0
        %v2108 = vpop.f32.mrb[0].mxu0
        %2109 = vdwg.mxu0
        %2111 = vrot.lane.b32.xlu0 %v2009, 8
        %v2112 = vpop.permute.xlu0 %2111
        %2115 = vrot.lane.b32.xlu0 %v2057, 16
        %v2116 = vpop.permute.xlu0 %2115
        %2119 = vrot.lane.b32.xlu0 %v2105, 24
        %v2120 = vpop.permute.xlu0 %2119
        %v2122 = vsel %vm858, %v1961, %v2112
        %v2123 = vsel %vm1308, %v2122, %v2116
        %v2124 = vsel %vm1310, %v2123, %v2120
        %v2125 = vpack.c.bf16 %v2124, %v2124
        %s2126 = scalar_lea.vmem %s7, 16
        %v2127 = vld [vmem:[%s2126] sm:$0xf]
        %v2128 = vld [vmem:[%s2126 + $0x4] sm:$0xf]
        %v2129 = vld [vmem:[%s2126 + $0x8] sm:$0xf]
        %v2130 = vld [vmem:[%s2126 + $0xc] sm:$0xf]
        %v2135 = vunpack.c.l.b16 %v2127
        %v2136 = vunpack.c.l.b16 %v2128
        %v2137 = vunpack.c.l.b16 %v2129
        %v2138 = vunpack.c.l.b16 %v2130
        %v2139 = vpack.c.b16 %v2136, %v2135
        %v2140 = vpack.c.b16 %v2138, %v2137
        %v2144 = vsel %vm804, %v2125, 0
        %2146 = vmatprep.subr.bf16.mxu0 0
        %2147 = vmatpush1.bf16.msra.mxu0 %v2139
        %2148 = vmatprep.subr.bf16.mxu0 0
        %2149 = vmatpush1.bf16.msra.mxu0 %v2140
        %2150 = vmatprep.subr.bf16.mxu0 0
        %2151 = vmatpush1.bf16.msra.mxu0 0
        %2152 = vmatprep.subr.bf16.mxu0 0
        %2153 = vmatpush1.bf16.msra.mxu0 0
        %2154 = vmatprep.subr.bf16.mxu0 0
        %2155 = vmatpush1.bf16.msra.mxu0 0
        %2156 = vmatprep.subr.bf16.mxu0 0
        %2157 = vmatpush1.bf16.msra.mxu0 0
        %2158 = vmatprep.subr.bf16.mxu0 0
        %2159 = vmatpush1.bf16.msra.mxu0 0
        %2160 = vmatprep.subr.bf16.mxu0 0
        %2161 = vmatpush1.bf16.msra.mxu0 0
        %2162 = vmatprep.subr.bf16.mxu0 0
        %2163 = vmatpush1.bf16.msra.mxu0 0
        %2164 = vmatprep.subr.bf16.mxu0 0
        %2165 = vmatpush1.bf16.msra.mxu0 0
        %2166 = vmatprep.subr.bf16.mxu0 0
        %2167 = vmatpush1.bf16.msra.mxu0 0
        %2168 = vmatprep.subr.bf16.mxu0 0
        %2169 = vmatpush1.bf16.msra.mxu0 0
        %2170 = vmatprep.subr.bf16.mxu0 0
        %2171 = vmatpush1.bf16.msra.mxu0 0
        %2172 = vmatprep.subr.bf16.mxu0 0
        %2173 = vmatpush1.bf16.msra.mxu0 0
        %2174 = vmatprep.subr.bf16.mxu0 0
        %2175 = vmatpush1.bf16.msra.mxu0 0
        %2176 = vmatprep.subr.bf16.mxu0 0
        %2177 = vmatpush1.bf16.msra.mxu0 0
        %2178 = vmatprep.mubr.bf16.mxu0 0
        %2179 = vmatmul.mubr.bf16.gmra.mrb[0].mxu0 %v2144
        %v2180 = vpop.f32.mrb[0].mxu0
        %v2181 = vadd.f32 0.0, %v2180
        %v2182 = vpop.f32.mrb[0].mxu0
        %v2183 = vpop.f32.mrb[0].mxu0
        %v2184 = vpop.f32.mrb[0].mxu0
        %2185 = vdwg.mxu0
        %v2186 = vadd.f32 %v1569, %v2181
        %s2187 = scalar_lea.vmem %s8, 1
        %v2188 = vld [vmem:[%s2187] sm:$0x1]
        %v2190 = vlaneseq
        %v2191 = vshrl.u32 %v2190, 7
        %v2192 = vsub.s32 0, %v2191
        %v2193 = vrot.slane %v2188, %v2192
        %v2195 = vadd.f32 %v2186, %v2193
        %s2196 = scalar_lea.vmem %s9, 1
        %v2197 = vld [vmem:[%s2196] sm:$0x1]
        %s2198 = scalar_lea.vmem %s10, 1
        %v2199 = vld [vmem:[%s2198] sm:$0x1]
        %v2200 = vsel %vm751, %v2195, 0.0
        %2201 = vadd.xlane.f32.xlu0 %v2200
        %v2202 = vpop.xlane.xlu0 %2201
        %v2203 = vmul.f32 %v2202, %v755
        %v2204 = vsub.f32 %v2195, %v2203
        %v2205 = vmul.f32 %v2204, %v2204
        %v2206 = vsel %vm751, %v2205, 0.0
        %2207 = vadd.xlane.f32.xlu0 %v2206
        %v2208 = vpop.xlane.xlu0 %2207
        %v2209 = vmul.f32 %v2208, %v755
        %v2210 = vadd.f32 %v2209, 1e-06
        %v2211 = vrsqrt.pop %v2210
        %v2212 = vmul.f32 %v2204, %v2211
        %v2214 = vlaneseq
        %v2215 = vshrl.u32 %v2214, 7
        %v2216 = vsub.s32 0, %v2215
        %v2217 = vrot.slane %v2197, %v2216
        %v2219 = vmul.f32 %v2212, %v2217
        %v2221 = vlaneseq
        %v2222 = vshrl.u32 %v2221, 7
        %v2223 = vsub.s32 0, %v2222
        %v2224 = vrot.slane %v2199, %v2223
        %v2226 = vadd.f32 %v2219, %v2224
        %v2227 = vpack.c.bf16 %v2226, %v2226
        %s2228 = scalar_lea.vmem %s11, 16
        %v2229 = vld [vmem:[%s2228] sm:$0xf]
        %v2230 = vld [vmem:[%s2228 + $0x4] sm:$0xf]
        %v2231 = vld [vmem:[%s2228 + $0x8] sm:$0xf]
        %v2232 = vld [vmem:[%s2228 + $0xc] sm:$0xf]
        %s2233 = scalar_lea.vmem %s12, 1
        %v2234 = vld [vmem:[%s2233] sm:$0x1]
        %v2236 = vlaneseq
        %v2237 = vshrl.u32 %v2236, 7
        %v2238 = vsub.s32 0, %v2237
        %v2239 = vrot.slane %v2234, %v2238
        %v2245 = vunpack.c.l.b16 %v2229
        %v2246 = vunpack.c.l.b16 %v2230
        %v2247 = vunpack.c.l.b16 %v2231
        %v2248 = vunpack.c.l.b16 %v2232
        %v2249 = vpack.c.b16 %v2246, %v2245
        %v2250 = vpack.c.b16 %v2248, %v2247
        %v2254 = vsel %vm804, %v2227, 0
        %2256 = vmatprep.subr.bf16.mxu0 0
        %2257 = vmatpush1.bf16.msra.mxu0 %v2249
        %2258 = vmatprep.subr.bf16.mxu0 0
        %2259 = vmatpush1.bf16.msra.mxu0 %v2250
        %2260 = vmatprep.subr.bf16.mxu0 0
        %2261 = vmatpush1.bf16.msra.mxu0 0
        %2262 = vmatprep.subr.bf16.mxu0 0
        %2263 = vmatpush1.bf16.msra.mxu0 0
        %2264 = vmatprep.subr.bf16.mxu0 0
        %2265 = vmatpush1.bf16.msra.mxu0 0
        %2266 = vmatprep.subr.bf16.mxu0 0
        %2267 = vmatpush1.bf16.msra.mxu0 0
        %2268 = vmatprep.subr.bf16.mxu0 0
        %2269 = vmatpush1.bf16.msra.mxu0 0
        %2270 = vmatprep.subr.bf16.mxu0 0
        %2271 = vmatpush1.bf16.msra.mxu0 0
        %2272 = vmatprep.subr.bf16.mxu0 0
        %2273 = vmatpush1.bf16.msra.mxu0 0
        %2274 = vmatprep.subr.bf16.mxu0 0
        %2275 = vmatpush1.bf16.msra.mxu0 0
        %2276 = vmatprep.subr.bf16.mxu0 0
        %2277 = vmatpush1.bf16.msra.mxu0 0
        %2278 = vmatprep.subr.bf16.mxu0 0
        %2279 = vmatpush1.bf16.msra.mxu0 0
        %2280 = vmatprep.subr.bf16.mxu0 0
        %2281 = vmatpush1.bf16.msra.mxu0 0
        %2282 = vmatprep.subr.bf16.mxu0 0
        %2283 = vmatpush1.bf16.msra.mxu0 0
        %2284 = vmatprep.subr.bf16.mxu0 0
        %2285 = vmatpush1.bf16.msra.mxu0 0
        %2286 = vmatprep.subr.bf16.mxu0 0
        %2287 = vmatpush1.bf16.msra.mxu0 0
        %2288 = vmatprep.mubr.bf16.mxu0 0
        %2289 = vmatmul.mubr.bf16.gmra.mrb[0].mxu0 %v2254
        %v2290 = vpop.f32.mrb[0].mxu0
        %v2291 = vadd.f32 %v2239, %v2290
        %v2292 = vpop.f32.mrb[0].mxu0
        %v2293 = vpop.f32.mrb[0].mxu0
        %v2294 = vpop.f32.mrb[0].mxu0
        %2295 = vdwg.mxu0
        %v2296 = vmul.f32 %v2291, %v2291
        %v2297 = vmul.f32 %v2291, %v2296
        %v2298 = vmul.f32 %v2297, 0.044715
        %v2299 = vadd.f32 %v2291, %v2298
        %v2300 = vmul.f32 %v2299, 0.7978846
        %v2301 = vtanh.pop %v2300
        %v2302 = vadd.f32 %v2301, 1.0
        %v2303 = vmul.f32 %v2302, 0.5
        %v2304 = vmul.f32 %v2291, %v2303
        %v2305 = vpack.c.bf16 %v2304, %v2304
        %s2306 = scalar_lea.vmem %s13, 32
        %v2307 = vld [vmem:[%s2306] sm:$0xf]
        %v2308 = vld [vmem:[%s2306 + $0x4] sm:$0xf]
        %v2309 = vld [vmem:[%s2306 + $0x8] sm:$0xf]
        %v2310 = vld [vmem:[%s2306 + $0xc] sm:$0xf]
        %v2311 = vld [vmem:[%s2306 + $0x10] sm:$0xf]
        %v2312 = vld [vmem:[%s2306 + $0x14] sm:$0xf]
        %v2313 = vld [vmem:[%s2306 + $0x18] sm:$0xf]
        %v2314 = vld [vmem:[%s2306 + $0x1c] sm:$0xf]
        %s2315 = scalar_lea.vmem %s14, 1
        %v2316 = vld [vmem:[%s2315] sm:$0x1]
        %v2318 = vlaneseq
        %v2319 = vshrl.u32 %v2318, 7
        %v2320 = vsub.s32 0, %v2319
        %v2321 = vrot.slane %v2316, %v2320
        %v2331 = vunpack.c.l.b16 %v2307
        %v2332 = vunpack.c.l.b16 %v2308
        %v2333 = vunpack.c.l.b16 %v2309
        %v2334 = vunpack.c.l.b16 %v2310
        %v2335 = vunpack.c.l.b16 %v2311
        %v2336 = vunpack.c.l.b16 %v2312
        %v2337 = vunpack.c.l.b16 %v2313
        %v2338 = vunpack.c.l.b16 %v2314
        %v2339 = vpack.c.b16 %v2332, %v2331
        %v2340 = vpack.c.b16 %v2334, %v2333
        %v2341 = vpack.c.b16 %v2336, %v2335
        %v2342 = vpack.c.b16 %v2338, %v2337
        %v2348 = vsel %vm705, %v2305, 0
        %2350 = vmatprep.subr.bf16.mxu0 0
        %2351 = vmatpush1.bf16.msra.mxu0 %v2339
        %2352 = vmatprep.subr.bf16.mxu0 0
        %2353 = vmatpush1.bf16.msra.mxu0 %v2340
        %2354 = vmatprep.subr.bf16.mxu0 0
        %2355 = vmatpush1.bf16.msra.mxu0 %v2341
        %2356 = vmatprep.subr.bf16.mxu0 0
        %2357 = vmatpush1.bf16.msra.mxu0 %v2342
        %2358 = vmatprep.subr.bf16.mxu0 0
        %2359 = vmatpush1.bf16.msra.mxu0 0
        %2360 = vmatprep.subr.bf16.mxu0 0
        %2361 = vmatpush1.bf16.msra.mxu0 0
        %2362 = vmatprep.subr.bf16.mxu0 0
        %2363 = vmatpush1.bf16.msra.mxu0 0
        %2364 = vmatprep.subr.bf16.mxu0 0
        %2365 = vmatpush1.bf16.msra.mxu0 0
        %2366 = vmatprep.subr.bf16.mxu0 0
        %2367 = vmatpush1.bf16.msra.mxu0 0
        %2368 = vmatprep.subr.bf16.mxu0 0
        %2369 = vmatpush1.bf16.msra.mxu0 0
        %2370 = vmatprep.subr.bf16.mxu0 0
        %2371 = vmatpush1.bf16.msra.mxu0 0
        %2372 = vmatprep.subr.bf16.mxu0 0
        %2373 = vmatpush1.bf16.msra.mxu0 0
        %2374 = vmatprep.subr.bf16.mxu0 0
        %2375 = vmatpush1.bf16.msra.mxu0 0
        %2376 = vmatprep.subr.bf16.mxu0 0
        %2377 = vmatpush1.bf16.msra.mxu0 0
        %2378 = vmatprep.subr.bf16.mxu0 0
        %2379 = vmatpush1.bf16.msra.mxu0 0
        %2380 = vmatprep.subr.bf16.mxu0 0
        %2381 = vmatpush1.bf16.msra.mxu0 0
        %2382 = vmatprep.mubr.bf16.mxu0 0
        %2383 = vmatmul.mubr.bf16.gmra.mrb[0].mxu0 %v2348
        %v2384 = vpop.f32.mrb[0].mxu0
        %v2385 = vadd.f32 %v2321, %v2384
        %v2386 = vpop.f32.mrb[0].mxu0
        %v2387 = vpop.f32.mrb[0].mxu0
        %v2388 = vpop.f32.mrb[0].mxu0
        %2389 = vdwg.mxu0
        %v2390 = vadd.f32 %v2195, %v2385
        %v2391 = vld [vmem:[%s15] sm:$0x1]
        %v2392 = vld [vmem:[%s16] sm:$0x1]
        %vm2393 = vcmask 253952
        %v2394 = vsel %vm2393, %v2390, 0.0
        %2395 = vadd.xlane.f32.xlu0 %v2394
        %v2396 = vpop.xlane.xlu0 %2395
        %v2397 = vmul.f32 %v2396, %v755
        %v2398 = vsub.f32 %v2390, %v2397
        %v2399 = vmul.f32 %v2398, %v2398
        %v2400 = vsel %vm2393, %v2399, 0.0
        %2401 = vadd.xlane.f32.xlu0 %v2400
        %v2402 = vpop.xlane.xlu0 %2401
        %v2403 = vmul.f32 %v2402, %v755
        %v2404 = vadd.f32 %v2403, 1e-06
        %v2405 = vrsqrt.pop %v2404
        %v2406 = vmul.f32 %v2398, %v2405
        %v2407 = vmul.f32 %v2406, %v2391
        %v2408 = vadd.f32 %v2407, %v2392
        %v2409 = vpack.c.bf16 %v2408, %v2408
        %v2410 = vld [vmem:[%s17] sm:$0xf]
        %v2411 = vld [vmem:[%s17 + $0x4] sm:$0xf]
        %v2412 = vld [vmem:[%s17 + $0x8] sm:$0xf]
        %v2413 = vld [vmem:[%s17 + $0xc] sm:$0xf]
        %v2414 = vld [vmem:[%s18] sm:$0x1]
        %v2419 = vunpack.c.l.b16 %v2410
        %v2420 = vunpack.c.l.b16 %v2411
        %v2421 = vunpack.c.l.b16 %v2412
        %v2422 = vunpack.c.l.b16 %v2413
        %v2423 = vpack.c.b16 %v2420, %v2419
        %v2424 = vpack.c.b16 %v2422, %v2421
        %v2428 = vsel %vm804, %v2409, 0
        %2430 = vmatprep.subr.bf16.mxu0 0
        %2431 = vmatpush1.bf16.msra.mxu0 %v2423
        %2432 = vmatprep.subr.bf16.mxu0 0
        %2433 = vmatpush1.bf16.msra.mxu0 %v2424
        %2434 = vmatprep.subr.bf16.mxu0 0
        %2435 = vmatpush1.bf16.msra.mxu0 0
        %2436 = vmatprep.subr.bf16.mxu0 0
        %2437 = vmatpush1.bf16.msra.mxu0 0
        %2438 = vmatprep.subr.bf16.mxu0 0
        %2439 = vmatpush1.bf16.msra.mxu0 0
        %2440 = vmatprep.subr.bf16.mxu0 0
        %2441 = vmatpush1.bf16.msra.mxu0 0
        %2442 = vmatprep.subr.bf16.mxu0 0
        %2443 = vmatpush1.bf16.msra.mxu0 0
        %2444 = vmatprep.subr.bf16.mxu0 0
        %2445 = vmatpush1.bf16.msra.mxu0 0
        %2446 = vmatprep.subr.bf16.mxu0 0
        %2447 = vmatpush1.bf16.msra.mxu0 0
        %2448 = vmatprep.subr.bf16.mxu0 0
        %2449 = vmatpush1.bf16.msra.mxu0 0
        %2450 = vmatprep.subr.bf16.mxu0 0
        %2451 = vmatpush1.bf16.msra.mxu0 0
        %2452 = vmatprep.subr.bf16.mxu0 0
        %2453 = vmatpush1.bf16.msra.mxu0 0
        %2454 = vmatprep.subr.bf16.mxu0 0
        %2455 = vmatpush1.bf16.msra.mxu0 0
        %2456 = vmatprep.subr.bf16.mxu0 0
        %2457 = vmatpush1.bf16.msra.mxu0 0
        %2458 = vmatprep.subr.bf16.mxu0 0
        %2459 = vmatpush1.bf16.msra.mxu0 0
        %2460 = vmatprep.subr.bf16.mxu0 0
        %2461 = vmatpush1.bf16.msra.mxu0 0
        %2462 = vmatprep.mubr.bf16.mxu0 0
        %2463 = vmatmul.mubr.bf16.gmra.mrb[0].mxu0 %v2428
        %v2464 = vpop.f32.mrb[0].mxu0
        %v2465 = vadd.f32 %v2414, %v2464
        %v2466 = vpop.f32.mrb[0].mxu0
        %v2467 = vpop.f32.mrb[0].mxu0
        %v2468 = vpop.f32.mrb[0].mxu0
        %2469 = vdwg.mxu0
        %2470 = vst [vmem:[%s594] sm:$0x1] %v2465
        %s2471 = sand.u32 %s445, 1
        %s2472 = scalar_lea.sflag [#allocation3], %s2471
        %s2473 = sand.u32 %s445, 1
        %s2474 = scalar_lea.vmem [#allocation2], %s2473
        // Predicated region
        $region97: #{vit_forward.1} parent=95 // pred_check
          %p2475 = pneg %p455
        $region98: #{vit_forward.1} parent=95 // pred_check_branch
          %2477 = sbr.rel (%p2475) target = $region100
        $region99: #{vit_forward.1} parent=95 // pred_region
          %s2479 = ssub.s32 16, 16
          %2480 = vsyncadd %s2472, %s2479
          %s2481 = smul.addr %s33, 16
          %s2482 = scalar_lea.hbm %s19, %s2481
          %s2484 = sshll.u32 %s2474, 4
          %s2485 = int_to_ptr.vmem [resolvable:$true] %s2484
          %2487 = dma.vmem_to_hbm [thread:$0]  %s2485, 16, %s2482, %s2472
        $region100: #{vit_forward.1} parent=95 // pred_fallthru
          _
      $region96: #{vit_forward.1} parent=5 // pred_fallthru
        _
      %p2488 = scmp.le.s32.totalorder 2, %s28
      // Predicated region
      $region101: #{vit_forward.1} parent=5 // pred_check
        %p2489 = pneg %p2488
      $region102: #{vit_forward.1} parent=5 // pred_check_branch
        %2491 = sbr.rel (%p2489) target = $region104
      $region103: #{vit_forward.1} parent=5 // pred_region
        %s2492 = ssub.s32 %s28, 2
        // Predicated region
        $region105: #{vit_forward.1} parent=103 // pred_check
          %p2493 = pneg %p461
        $region106: #{vit_forward.1} parent=103 // pred_check_branch
          %2495 = sbr.rel (%p2493) target = $region108
        $region107: #{vit_forward.1} parent=103 // pred_region
          %s2496 = sand.u32 %s446, 1
          %s2497 = scalar_lea.sflag [#allocation3], %s2496
          %s2498 = sand.u32 %s446, 1
          %s2499 = scalar_lea.vmem [#allocation2], %s2498
          %2500 = dma.done %s2497, 16
        $region108: #{vit_forward.1} parent=103 // pred_fallthru
          _
      $region104: #{vit_forward.1} parent=5 // pred_fallthru
        _
    $region6: #{vit_forward.1} parent=1 // loop_footer
      %s32 = sadd.s32 1, %s28
    $region7: #{vit_forward.1} parent=1 // loop_footer_branch
      %27 = sbr.rel target = $region3
    $region8: #{vit_forward.1} parent=1 // loop_exit
      _
    %2501 = vsyncpa [#allocation3], 1
    %s2502 = scalar_lea.sflag [#allocation3], 1
    %2503 = vsyncpa %s2502, 1

</llo_original>
